<compile_context>
chip_gen: v7x
topology: tpu7x:2x2x1
jax: 0.10.0
libtpu: 0.0.40
codegen_flags: <defaults>
</compile_context>

<pallas_src>
import math

import jax
import jax.numpy as jnp
from jax.experimental import pallas as pl
from jax.experimental.pallas import tpu as pltpu

# ----------------------------- model hyper-params -----------------------------
T_FRAMES = 2            # video frames
C_IN = 4                # input channels
IMG = 16                # H = W
PATCH = 4               # patch size
NP = (IMG // PATCH) * (IMG // PATCH)     # 16 patches / frame
PATCH_DIM = C_IN * PATCH * PATCH         # 64
D = 32                  # hidden dim
NUM_HEADS = 2
DH = D // NUM_HEADS     # 16
MLP_DIM = 64
NLAT = 8                # perceiver latents per frame (vision tokens / frame)
VOCAB = 128
L_TEXT = 8              # prompt length
MAX_SEQ = 64
S_TOTAL = L_TEXT + T_FRAMES * NLAT       # 24
SCORE_TOKEN_ID = 7      # vocab id whose probability is the "importance score"
ATT_SCALE = 1.0 / math.sqrt(DH)
VEC_LANES = VOCAB       # 128-lane rows in the packed vector slab

# ------------------------- packed weight slab layouts -------------------------
# vector slab: one (1, W) bias / LN vector per row, padded to 128 lanes
_VEC_ORDER = [
    "patch_b",
    "ve_ln1_g", "ve_ln1_b", "ve_attn_bqkv", "ve_attn_bo",
    "ve_ln2_g", "ve_ln2_b", "ve_mlp_b1", "ve_mlp_b2",
    "pq_ln_g", "pq_ln_b", "pkv_ln_g", "pkv_ln_b",
    "p_bq", "p_bkv", "p_bo",
    "lm_ln1_g", "lm_ln1_b", "lm_attn_bqkv", "lm_attn_bo",
    "lm_ln2_g", "lm_ln2_b", "lm_mlp_b1", "lm_mlp_b2",
    "lm_lnf_g", "lm_lnf_b", "lm_head_b",
]
(V_PATCH_B, V_VE_LN1_G, V_VE_LN1_B, V_VE_BQKV, V_VE_BO, V_VE_LN2_G, V_VE_LN2_B,
 V_VE_B1, V_VE_B2, V_PQ_G, V_PQ_B, V_PKV_G, V_PKV_B, V_P_BQ, V_P_BKV, V_P_BO,
 V_LM_LN1_G, V_LM_LN1_B, V_LM_BQKV, V_LM_BO, V_LM_LN2_G, V_LM_LN2_B, V_LM_B1,
 V_LM_B2, V_LNF_G, V_LNF_B, V_HEAD_B, V_POOL) = range(28)   # V_POOL uses 2 rows
V_ROWS = 32

# width-D (=32 lane) matrix slab row offsets (all multiples of 8)
M32_PATCH_W = 0                                   # [PATCH_DIM, D]
M32_POS = M32_PATCH_W + PATCH_DIM                 # [T*NP, D]      (pos tiled / frame)
M32_VE_WO = M32_POS + T_FRAMES * NP               # [D, D]
M32_VE_W2 = M32_VE_WO + D                         # [MLP_DIM, D]
M32_LATENTS = M32_VE_W2 + MLP_DIM                 # [T*NLAT, D]    (latents tiled)
M32_P_WQ = M32_LATENTS + T_FRAMES * NLAT          # [D, D]
M32_P_WO = M32_P_WQ + D                           # [D, D]
M32_TOK_EMB = M32_P_WO + D                        # [VOCAB, D]
M32_LM_POS = M32_TOK_EMB + VOCAB                  # [S_TOTAL, D]
M32_LM_WO = M32_LM_POS + S_TOTAL                  # [D, D]
M32_LM_W2 = M32_LM_WO + D                         # [MLP_DIM, D]
M32_VIT_MASK = M32_LM_W2 + MLP_DIM                # [T*NP, T*NP]   additive mask
M32_CROSS_MASK = M32_VIT_MASK + T_FRAMES * NP     # [T*NLAT, T*NP] additive mask
M32_ROWS = M32_CROSS_MASK + T_FRAMES * NLAT       # 568

# wide (>=64 lane, padded to 128) matrix slab row offsets
MW_VE_WQKV = 0                                    # [D, 3D]
MW_LM_WQKV = MW_VE_WQKV + D                       # [D, 3D]
MW_VE_W1 = MW_LM_WQKV + D                         # [D, MLP_DIM]
MW_LM_W1 = MW_VE_W1 + D                           # [D, MLP_DIM]
MW_P_WKV = MW_LM_W1 + D                           # [D, 2D]
MW_HEAD_W = MW_P_WKV + D                          # [D, VOCAB]
MW_ROWS = MW_HEAD_W + D                           # 192


# --------------------------- in-kernel building blocks -------------------------
def _layer_norm(x, g, b):
    mu = jnp.mean(x, axis=-1, keepdims=True)
    xc = x - mu
    var = jnp.mean(xc * xc, axis=-1, keepdims=True)
    return xc * jax.lax.rsqrt(var + 1e-5) * g + b


def _softmax_rows(s):
    m = jnp.max(s, axis=-1, keepdims=True)
    e = jnp.exp(s - m)
    inv = pl.reciprocal(jnp.sum(e, axis=-1, keepdims=True), approx=True)
    return e * inv


def _mh_attention(q, k, v, wo, bo, mask):
    """q [Sq, D], k/v [Sk, D], wo [D, D], bo [1, D], mask additive [Sq, Sk] or None."""
    out = jnp.zeros((q.shape[0], D), jnp.float32) + bo
    for h in range(NUM_HEADS):                      # unrolled: NUM_HEADS == 2
        sl = slice(h * DH, (h + 1) * DH)
        qh, kh, vh = q[:, sl], k[:, sl], v[:, sl]
        # contract last dims directly — no k.T relayout
        s = jax.lax.dot_general(qh, kh, (((1,), (1,)), ((), ())),
                                preferred_element_type=jnp.float32) * ATT_SCALE
        if mask is not None:
            s = s + mask
        p = _softmax_rows(s)
        oh = jnp.dot(p, vh, preferred_element_type=jnp.float32)        # [Sq, DH]
        # sum_h oh @ Wo[h]  ==  concat_h(oh) @ Wo   (avoids lane-dim concat)
        out = out + jnp.dot(oh, wo[sl, :], preferred_element_type=jnp.float32)
    return out


def _self_attention(x, ln_g, ln_b, wqkv, bqkv, wo, bo, mask):
    xn = _layer_norm(x, ln_g, ln_b)
    qkv = jnp.dot(xn, wqkv, preferred_element_type=jnp.float32) + bqkv   # [S, 3D]
    q, k, v = qkv[:, 0:D], qkv[:, D:2 * D], qkv[:, 2 * D:3 * D]
    return _mh_attention(q, k, v, wo, bo, mask)


def _mlp(x, ln_g, ln_b, w1, b1, w2, b2):
    xn = _layer_norm(x, ln_g, ln_b)
    h = jnp.dot(xn, w1, preferred_element_type=jnp.float32) + b1
    h = jax.nn.gelu(h, approximate=True)
    return jnp.dot(h, w2, preferred_element_type=jnp.float32) + b2


# ------------------------------- fused Pallas kernel ---------------------------
def _tfvsn_kernel(patches_ref, ids_ref, vec_ref, m32_ref, mw_ref,
                  logits_ref, probs_ref, seq_scr):
    def vec(row, w, nrows=1):
        return vec_ref[row:row + nrows, 0:w]

    # ---------------- vision encoder: both frames batched on sublanes ----------
    x = patches_ref[...]                                           # [T*NP, PATCH_DIM]
    h = (jnp.dot(x, m32_ref[M32_PATCH_W:M32_PATCH_W + PATCH_DIM, :],
                 preferred_element_type=jnp.float32)
         + vec(V_PATCH_B, D)
         + m32_ref[M32_POS:M32_POS + T_FRAMES * NP, :])            # [T*NP, D]

    vit_mask = m32_ref[M32_VIT_MASK:M32_VIT_MASK + T_FRAMES * NP, :]       # [32, 32]

    h = h + _self_attention(
        h, vec(V_VE_LN1_G, D), vec(V_VE_LN1_B, D),
        mw_ref[MW_VE_WQKV:MW_VE_WQKV + D, 0:3 * D], vec(V_VE_BQKV, 3 * D),
        m32_ref[M32_VE_WO:M32_VE_WO + D, :], vec(V_VE_BO, D), vit_mask)
    h = h + _mlp(
        h, vec(V_VE_LN2_G, D), vec(V_VE_LN2_B, D),
        mw_ref[MW_VE_W1:MW_VE_W1 + D, 0:MLP_DIM], vec(V_VE_B1, MLP_DIM),
        m32_ref[M32_VE_W2:M32_VE_W2 + MLP_DIM, :], vec(V_VE_B2, D))

    # ------------- perceiver resampler: stacked latents, per-frame mask --------
    lat = m32_ref[M32_LATENTS:M32_LATENTS + T_FRAMES * NLAT, :]    # [T*NLAT, D]
    qn = _layer_norm(lat, vec(V_PQ_G, D), vec(V_PQ_B, D))
    kvn = _layer_norm(h, vec(V_PKV_G, D), vec(V_PKV_B, D))
    q = jnp.dot(qn, m32_ref[M32_P_WQ:M32_P_WQ + D, :],
                preferred_element_type=jnp.float32) + vec(V_P_BQ, D)
    kv = jnp.dot(kvn, mw_ref[MW_P_WKV:MW_P_WKV + D, 0:2 * D],
                 preferred_element_type=jnp.float32) + vec(V_P_BKV, 2 * D)
    k, v = kv[:, 0:D], kv[:, D:2 * D]
    cross_mask = m32_ref[M32_CROSS_MASK:M32_CROSS_MASK + T_FRAMES * NLAT, :]
    vis = lat + _mh_attention(q, k, v, m32_ref[M32_P_WO:M32_P_WO + D, :],
                              vec(V_P_BO, D), cross_mask)          # [T*NLAT, D]

    # --------------------------- language model --------------------------------
    # in-kernel token-embedding gather: one-hot [L_TEXT, VOCAB] x tok_emb (MXU)
    ids = ids_ref[...]                                             # [L_TEXT, 1] int32
    onehot = (jax.lax.broadcasted_iota(jnp.int32, (L_TEXT, VOCAB), 1)
              == ids).astype(jnp.float32)
    text_emb = jnp.dot(onehot, m32_ref[M32_TOK_EMB:M32_TOK_EMB + VOCAB, :],
                       preferred_element_type=jnp.float32)         # [L_TEXT, D]

    # assemble [text ; vision] in VMEM (sublane-aligned stores: offsets 0 and 8)
    seq_scr[0:L_TEXT, :] = text_emb
    seq_scr[L_TEXT:S_TOTAL, :] = vis
    hs = seq_scr[...] + m32_ref[M32_LM_POS:M32_LM_POS + S_TOTAL, :]   # [S, D]

    hs = hs + _self_attention(
        hs, vec(V_LM_LN1_G, D), vec(V_LM_LN1_B, D),
        mw_ref[MW_LM_WQKV:MW_LM_WQKV + D, 0:3 * D], vec(V_LM_BQKV, 3 * D),
        m32_ref[M32_LM_WO:M32_LM_WO + D, :], vec(V_LM_BO, D), None)
    hs = hs + _mlp(
        hs, vec(V_LM_LN2_G, D), vec(V_LM_LN2_B, D),
        mw_ref[MW_LM_W1:MW_LM_W1 + D, 0:MLP_DIM], vec(V_LM_B1, MLP_DIM),
        m32_ref[M32_LM_W2:M32_LM_W2 + MLP_DIM, :], vec(V_LM_B2, D))

    hf = _layer_norm(hs, vec(V_LNF_G, D), vec(V_LNF_B, D))
    logits = (jnp.dot(hf, mw_ref[MW_HEAD_W:MW_HEAD_W + D, 0:VOCAB],
                      preferred_element_type=jnp.float32)
              + vec(V_HEAD_B, VOCAB))                              # [S, VOCAB]
    logits_ref[...] = logits.astype(logits_ref.dtype)

    # per-frame importance: precomputed pooling matrix (MXU) then EXACT softmax
    pool = vec(V_POOL, S_TOTAL, nrows=T_FRAMES)                    # [T, S]
    pooled = jnp.dot(pool, logits, preferred_element_type=jnp.float32)  # [T, VOCAB]
    m = jnp.max(pooled, axis=-1, keepdims=True)
    e = jnp.exp(pooled - m)
    probs_ref[...] = (e / jnp.sum(e, axis=-1, keepdims=True)).astype(probs_ref.dtype)


# ------------------------------ Pallas wrapper ---------------------------------
def _full_spec(shape):
    zeros = (0,) * len(shape)
    return pl.BlockSpec(shape, lambda *_: zeros)


def tfvsn_forward(video_data, prompt_ids, packed):
    """video_data: NCHW [T, C, H, W] f32; prompt_ids: [L_TEXT] int32;
    packed: dict of 3 pre-packed weight slabs.
    Returns (generated token ids [L_TEXT], per-frame scores [T])."""
    t, c, hgt, wdt = video_data.shape

    # patchify (pure layout glue; fuses into the input copy feeding the kernel)
    x = video_data.reshape(t, c, hgt // PATCH, PATCH, wdt // PATCH, PATCH)
    patches = x.transpose(0, 2, 4, 1, 3, 5).reshape(t * NP, PATCH_DIM)

    ids2d = prompt_ids.astype(jnp.int32).reshape(L_TEXT, 1)

    logits, frame_probs = pl.pallas_call(
        _tfvsn_kernel,
        out_shape=(jax.ShapeDtypeStruct((S_TOTAL, VOCAB), jnp.float32),
                   jax.ShapeDtypeStruct((T_FRAMES, VOCAB), jnp.float32)),
        grid=(1,),
        in_specs=[_full_spec((T_FRAMES * NP, PATCH_DIM)),
                  _full_spec((L_TEXT, 1)),
                  _full_spec((V_ROWS, VEC_LANES)),
                  _full_spec((M32_ROWS, D)),
                  _full_spec((MW_ROWS, VEC_LANES))],
        out_specs=(_full_spec((S_TOTAL, VOCAB)),
                   _full_spec((T_FRAMES, VOCAB))),
        scratch_shapes=[pltpu.VMEM((S_TOTAL, D), jnp.float32)],
        compiler_params=pltpu.CompilerParams(dimension_semantics=("arbitrary",)),
    )(patches, ids2d, packed["vec"], packed["m32"], packed["mw"])

    # greedy one-shot "generation" + per-frame importance scores (lane-dense slices)
    gen_tokens = jnp.argmax(logits[:L_TEXT], axis=-1).astype(jnp.int32)
    scores = frame_probs[:, SCORE_TOKEN_ID]                        # [T]
    return gen_tokens, scores


# ------------------------------- parameter init --------------------------------
def init_params(key):
    keys = iter(jax.random.split(key, 64))

    def nrm(shape, scale=0.05):
        return jax.random.normal(next(keys), shape, dtype=jnp.float32) * scale

    def zeros(shape):
        return jnp.zeros(shape, jnp.float32)

    def ones(shape):
        return jnp.ones(shape, jnp.float32)

    p = {}
    p["patch_w"] = nrm((PATCH_DIM, D))
    p["patch_b"] = zeros((1, D))
    p["pos_emb"] = nrm((NP, D))

    def add_block(prefix):
        p[prefix + "_ln1_g"] = ones((1, D))
        p[prefix + "_ln1_b"] = zeros((1, D))
        p[prefix + "_attn_wqkv"] = nrm((D, 3 * D))     # fused Wq|Wk|Wv
        p[prefix + "_attn_bqkv"] = zeros((1, 3 * D))
        p[prefix + "_attn_wo"] = nrm((D, D))
        p[prefix + "_attn_bo"] = zeros((1, D))
        p[prefix + "_ln2_g"] = ones((1, D))
        p[prefix + "_ln2_b"] = zeros((1, D))
        p[prefix + "_mlp_w1"] = nrm((D, MLP_DIM))
        p[prefix + "_mlp_b1"] = zeros((1, MLP_DIM))
        p[prefix + "_mlp_w2"] = nrm((MLP_DIM, D))
        p[prefix + "_mlp_b2"] = zeros((1, D))

    add_block("ve")

    p["latents"] = nrm((NLAT, D), 0.2)
    p["pq_ln_g"] = ones((1, D))
    p["pq_ln_b"] = zeros((1, D))
    p["pkv_ln_g"] = ones((1, D))
    p["pkv_ln_b"] = zeros((1, D))
    p["p_wq"] = nrm((D, D))
    p["p_bq"] = zeros((1, D))
    p["p_wkv"] = nrm((D, 2 * D))                       # fused Wk|Wv
    p["p_bkv"] = zeros((1, 2 * D))
    p["p_wo"] = nrm((D, D))
    p["p_bo"] = zeros((1, D))

    p["tok_emb"] = nrm((VOCAB, D), 0.1)
    p["lm_pos"] = nrm((MAX_SEQ, D))
    add_block("lm")
    p["lm_lnf_g"] = ones((1, D))
    p["lm_lnf_b"] = zeros((1, D))
    p["lm_head_w"] = nrm((D, VOCAB))
    p["lm_head_b"] = zeros((1, VOCAB))
    return p


def pack_params(p):
    """Concatenate the ~45 tiny tensors into 3 VMEM slabs (done ONCE, outside jit)."""
    f32 = jnp.float32

    def padw(v):
        v = v.astype(f32)
        return jnp.pad(v, ((0, 0), (0, VEC_LANES - v.shape[1])))

    # vector slab: biases / LN vectors, one per 128-lane row
    rows = [padw(p[name]) for name in _VEC_ORDER]
    col = jnp.arange(S_TOTAL)[None, :]
    start = L_TEXT + jnp.arange(T_FRAMES)[:, None] * NLAT
    pool = jnp.where((col >= start) & (col < start + NLAT),
                     1.0 / NLAT, 0.0).astype(f32)                  # [T, S_TOTAL]
    rows.append(padw(pool))
    vec = jnp.concatenate(rows, axis=0)
    vec = jnp.pad(vec, ((0, V_ROWS - vec.shape[0]), (0, 0)))

    # width-D matrix slab (plus precomputed additive block-diagonal attention masks)
    def block_mask(nq, nk, gq, gk):
        qf = jnp.arange(nq)[:, None] // gq
        kf = jnp.arange(nk)[None, :] // gk
        return jnp.where(qf == kf, 0.0, -1e30).astype(f32)

    m32 = jnp.concatenate([
        p["patch_w"],                                   # M32_PATCH_W
        jnp.tile(p["pos_emb"], (T_FRAMES, 1)),          # M32_POS
        p["ve_attn_wo"],                                # M32_VE_WO
        p["ve_mlp_w2"],                                 # M32_VE_W2
        jnp.tile(p["latents"], (T_FRAMES, 1)),          # M32_LATENTS
        p["p_wq"],                                      # M32_P_WQ
        p["p_wo"],                                      # M32_P_WO
        p["tok_emb"],                                   # M32_TOK_EMB
        p["lm_pos"][:S_TOTAL],                          # M32_LM_POS
        p["lm_attn_wo"],                                # M32_LM_WO
        p["lm_mlp_w2"],                                 # M32_LM_W2
        block_mask(T_FRAMES * NP, T_FRAMES * NP, NP, NP),      # M32_VIT_MASK
        block_mask(T_FRAMES * NLAT, T_FRAMES * NP, NLAT, NP),  # M32_CROSS_MASK
    ], axis=0).astype(f32)
    assert m32.shape == (M32_ROWS, D)

    # wide matrix slab (padded to 128 lanes)
    mw = jnp.concatenate([
        padw(p["ve_attn_wqkv"]), padw(p["lm_attn_wqkv"]),
        padw(p["ve_mlp_w1"]), padw(p["lm_mlp_w1"]),
        padw(p["p_wkv"]), padw(p["lm_head_w"]),
    ], axis=0)
    assert mw.shape == (MW_ROWS, VEC_LANES)

    return {"vec": vec, "m32": m32, "mw": mw}


# ------------------------------------ main -------------------------------------
if __name__ == "__main__":
    key = jax.random.PRNGKey(0)
    k_vid, k_txt, k_par = jax.random.split(key, 3)

    video = jax.random.normal(k_vid, (T_FRAMES, C_IN, IMG, IMG), dtype=jnp.float32)
    prompt = jax.random.randint(k_txt, (L_TEXT,), 0, VOCAB, dtype=jnp.int32)
    params = init_params(k_par)
    packed = pack_params(params)          # pack once, outside the jitted forward

    gen_tokens, scores = jax.jit(tfvsn_forward)(video, prompt, packed)
    jax.block_until_ready((gen_tokens, scores))

    assert gen_tokens.shape == (L_TEXT,)
    assert scores.shape == (T_FRAMES,)
    assert bool(jnp.all(jnp.isfinite(scores)))
    print("KERNEL_OK")
</pallas_src>

<mosaic_0001>
module attributes {stable_mosaic.version = 11 : i64} {
  func.func @_tfvsn_kernel(%arg0: i32, %arg1: memref<32x64xf32, #tpu.memory_space<vmem>>, %arg2: memref<8x1xi32, #tpu.memory_space<vmem>>, %arg3: memref<32x128xf32, #tpu.memory_space<vmem>>, %arg4: memref<568x32xf32, #tpu.memory_space<vmem>>, %arg5: memref<192x128xf32, #tpu.memory_space<vmem>>, %arg6: memref<24x128xf32, #tpu.memory_space<vmem>>, %arg7: memref<2x128xf32, #tpu.memory_space<vmem>>, %arg8: memref<24x32xf32, #tpu.memory_space<vmem>>) attributes {dimension_semantics = [#tpu.dimension_semantics<arbitrary>], iteration_bounds = array<i64: 1>, scalar_prefetch = 0 : i64, scratch_operands = 1 : i64, tpu.core_type = #tpu.core_type<tc>, window_params = [{pipeline_mode = #tpu.pipeline_mode<synchronous>, transform_indices = @transform_0, window_bounds = array<i64: 32, 64>}, {pipeline_mode = #tpu.pipeline_mode<synchronous>, transform_indices = @transform_1, window_bounds = array<i64: 8, 1>}, {pipeline_mode = #tpu.pipeline_mode<synchronous>, transform_indices = @transform_2, window_bounds = array<i64: 32, 128>}, {pipeline_mode = #tpu.pipeline_mode<synchronous>, transform_indices = @transform_3, window_bounds = array<i64: 568, 32>}, {pipeline_mode = #tpu.pipeline_mode<synchronous>, transform_indices = @transform_4, window_bounds = array<i64: 192, 128>}, {pipeline_mode = #tpu.pipeline_mode<synchronous>, transform_indices = @transform_5, window_bounds = array<i64: 24, 128>}, {pipeline_mode = #tpu.pipeline_mode<synchronous>, transform_indices = @transform_6, window_bounds = array<i64: 2, 128>}]} {
    %c0 = arith.constant 0 : index
    %c0_0 = arith.constant 0 : index
    %0 = vector.load %arg1[%c0, %c0_0] : memref<32x64xf32, #tpu.memory_space<vmem>>, vector<32x64xf32>
    %c0_1 = arith.constant 0 : index
    %c0_2 = arith.constant 0 : index
    %1 = vector.load %arg4[%c0_1, %c0_2] : memref<568x32xf32, #tpu.memory_space<vmem>>, vector<64x32xf32>
    %cst = arith.constant dense<0.000000e+00> : vector<32x32xf32>
    %2 = tpu.matmul %0, %1, %cst {dimension_numbers = #tpu.dot_dimension_numbers<[1], [0], [0], [1], [0, 0, 1, 1], [], []>} : vector<32x64xf32>, vector<64x32xf32>, vector<32x32xf32> -> vector<32x32xf32>
    %c0_3 = arith.constant 0 : index
    %c0_4 = arith.constant 0 : index
    %3 = vector.load %arg3[%c0_3, %c0_4] : memref<32x128xf32, #tpu.memory_space<vmem>>, vector<1x32xf32>
    %4 = vector.broadcast %3 : vector<1x32xf32> to vector<32x32xf32>
    %5 = arith.addf %2, %4 : vector<32x32xf32>
    %c64 = arith.constant 64 : index
    %c0_5 = arith.constant 0 : index
    %6 = vector.load %arg4[%c64, %c0_5] : memref<568x32xf32, #tpu.memory_space<vmem>>, vector<32x32xf32>
    %7 = arith.addf %5, %6 : vector<32x32xf32>
    %c520 = arith.constant 520 : index
    %c0_6 = arith.constant 0 : index
    %8 = vector.load %arg4[%c520, %c0_6] : memref<568x32xf32, #tpu.memory_space<vmem>>, vector<32x32xf32>
    %c1 = arith.constant 1 : index
    %c0_7 = arith.constant 0 : index
    %9 = vector.load %arg3[%c1, %c0_7] : memref<32x128xf32, #tpu.memory_space<vmem>>, vector<1x32xf32>
    %c2 = arith.constant 2 : index
    %c0_8 = arith.constant 0 : index
    %10 = vector.load %arg3[%c2, %c0_8] : memref<32x128xf32, #tpu.memory_space<vmem>>, vector<1x32xf32>
    %c0_9 = arith.constant 0 : index
    %c0_10 = arith.constant 0 : index
    %11 = vector.load %arg5[%c0_9, %c0_10] : memref<192x128xf32, #tpu.memory_space<vmem>>, vector<32x96xf32>
    %c3 = arith.constant 3 : index
    %c0_11 = arith.constant 0 : index
    %12 = vector.load %arg3[%c3, %c0_11] : memref<32x128xf32, #tpu.memory_space<vmem>>, vector<1x96xf32>
    %c96 = arith.constant 96 : index
    %c0_12 = arith.constant 0 : index
    %13 = vector.load %arg4[%c96, %c0_12] : memref<568x32xf32, #tpu.memory_space<vmem>>, vector<32x32xf32>
    %c4 = arith.constant 4 : index
    %c0_13 = arith.constant 0 : index
    %14 = vector.load %arg3[%c4, %c0_13] : memref<32x128xf32, #tpu.memory_space<vmem>>, vector<1x32xf32>
    %cst_14 = arith.constant dense<0.000000e+00> : vector<32xf32>
    %15 = vector.multi_reduction <add>, %7, %cst_14 [1] : vector<32x32xf32> to vector<32xf32>
    %16 = vector.shape_cast %15 : vector<32xf32> to vector<32x1xf32>
    %cst_15 = arith.constant 3.200000e+01 : f32
    %17 = vector.broadcast %cst_15 : f32 to vector<32x1xf32>
    %18 = arith.divf %16, %17 : vector<32x1xf32>
    %19 = vector.broadcast %18 : vector<32x1xf32> to vector<32x32xf32>
    %20 = arith.subf %7, %19 : vector<32x32xf32>
    %21 = arith.mulf %20, %20 : vector<32x32xf32>
    %cst_16 = arith.constant dense<0.000000e+00> : vector<32xf32>
    %22 = vector.multi_reduction <add>, %21, %cst_16 [1] : vector<32x32xf32> to vector<32xf32>
    %23 = vector.shape_cast %22 : vector<32xf32> to vector<32x1xf32>
    %cst_17 = arith.constant 3.200000e+01 : f32
    %24 = vector.broadcast %cst_17 : f32 to vector<32x1xf32>
    %25 = arith.divf %23, %24 : vector<32x1xf32>
    %cst_18 = arith.constant 9.99999974E-6 : f32
    %26 = vector.broadcast %cst_18 : f32 to vector<32x1xf32>
    %27 = arith.addf %25, %26 : vector<32x1xf32>
    %28 = math.rsqrt %27 : vector<32x1xf32>
    %29 = vector.broadcast %28 : vector<32x1xf32> to vector<32x32xf32>
    %30 = arith.mulf %20, %29 : vector<32x32xf32>
    %31 = vector.broadcast %9 : vector<1x32xf32> to vector<32x32xf32>
    %32 = arith.mulf %30, %31 : vector<32x32xf32>
    %33 = vector.broadcast %10 : vector<1x32xf32> to vector<32x32xf32>
    %34 = arith.addf %32, %33 : vector<32x32xf32>
    %cst_19 = arith.constant dense<0.000000e+00> : vector<32x96xf32>
    %35 = tpu.matmul %34, %11, %cst_19 {dimension_numbers = #tpu.dot_dimension_numbers<[1], [0], [0], [1], [0, 0, 1, 1], [], []>} : vector<32x32xf32>, vector<32x96xf32>, vector<32x96xf32> -> vector<32x96xf32>
    %36 = vector.broadcast %12 : vector<1x96xf32> to vector<32x96xf32>
    %37 = arith.addf %35, %36 : vector<32x96xf32>
    %38 = vector.extract_strided_slice %37 {offsets = [0, 0], sizes = [32, 32], strides = [1, 1]} : vector<32x96xf32> to vector<32x32xf32>
    %39 = vector.extract_strided_slice %37 {offsets = [0, 32], sizes = [32, 32], strides = [1, 1]} : vector<32x96xf32> to vector<32x32xf32>
    %40 = vector.extract_strided_slice %37 {offsets = [0, 64], sizes = [32, 32], strides = [1, 1]} : vector<32x96xf32> to vector<32x32xf32>
    %cst_20 = arith.constant 0.000000e+00 : f32
    %41 = vector.broadcast %cst_20 : f32 to vector<32x32xf32>
    %42 = vector.broadcast %14 : vector<1x32xf32> to vector<32x32xf32>
    %43 = arith.addf %41, %42 : vector<32x32xf32>
    %44 = vector.extract_strided_slice %38 {offsets = [0, 0], sizes = [32, 16], strides = [1, 1]} : vector<32x32xf32> to vector<32x16xf32>
    %45 = vector.extract_strided_slice %39 {offsets = [0, 0], sizes = [32, 16], strides = [1, 1]} : vector<32x32xf32> to vector<32x16xf32>
    %46 = vector.extract_strided_slice %40 {offsets = [0, 0], sizes = [32, 16], strides = [1, 1]} : vector<32x32xf32> to vector<32x16xf32>
    %cst_21 = arith.constant dense<0.000000e+00> : vector<32x32xf32>
    %47 = tpu.matmul %44, %45, %cst_21 {dimension_numbers = #tpu.dot_dimension_numbers<[1], [1], [0], [0], [0, 0, 1, 0], [], []>} : vector<32x16xf32>, vector<32x16xf32>, vector<32x32xf32> -> vector<32x32xf32>
    %cst_22 = arith.constant 2.500000e-01 : f32
    %48 = vector.broadcast %cst_22 : f32 to vector<32x32xf32>
    %49 = arith.mulf %47, %48 : vector<32x32xf32>
    %50 = arith.addf %49, %8 : vector<32x32xf32>
    %cst_23 = arith.constant dense<0xFF800000> : vector<32xf32>
    %51 = vector.multi_reduction <maximumf>, %50, %cst_23 [1] : vector<32x32xf32> to vector<32xf32>
    %52 = vector.shape_cast %51 : vector<32xf32> to vector<32x1xf32>
    %53 = vector.broadcast %52 : vector<32x1xf32> to vector<32x32xf32>
    %54 = arith.subf %50, %53 : vector<32x32xf32>
    %55 = math.exp %54 : vector<32x32xf32>
    %cst_24 = arith.constant dense<0.000000e+00> : vector<32xf32>
    %56 = vector.multi_reduction <add>, %55, %cst_24 [1] : vector<32x32xf32> to vector<32xf32>
    %57 = vector.shape_cast %56 : vector<32xf32> to vector<32x1xf32>
    %58 = tpu.reciprocal %57 {approx = true} : vector<32x1xf32> -> vector<32x1xf32>
    %59 = vector.broadcast %58 : vector<32x1xf32> to vector<32x32xf32>
    %60 = arith.mulf %55, %59 : vector<32x32xf32>
    %cst_25 = arith.constant dense<0.000000e+00> : vector<32x16xf32>
    %61 = tpu.matmul %60, %46, %cst_25 {dimension_numbers = #tpu.dot_dimension_numbers<[1], [0], [0], [1], [0, 0, 1, 1], [], []>} : vector<32x32xf32>, vector<32x16xf32>, vector<32x16xf32> -> vector<32x16xf32>
    %62 = vector.extract_strided_slice %13 {offsets = [0, 0], sizes = [16, 32], strides = [1, 1]} : vector<32x32xf32> to vector<16x32xf32>
    %cst_26 = arith.constant dense<0.000000e+00> : vector<32x32xf32>
    %63 = tpu.matmul %61, %62, %cst_26 {dimension_numbers = #tpu.dot_dimension_numbers<[1], [0], [0], [1], [0, 0, 1, 1], [], []>} : vector<32x16xf32>, vector<16x32xf32>, vector<32x32xf32> -> vector<32x32xf32>
    %64 = arith.addf %43, %63 : vector<32x32xf32>
    %65 = vector.extract_strided_slice %38 {offsets = [0, 16], sizes = [32, 16], strides = [1, 1]} : vector<32x32xf32> to vector<32x16xf32>
    %66 = vector.extract_strided_slice %39 {offsets = [0, 16], sizes = [32, 16], strides = [1, 1]} : vector<32x32xf32> to vector<32x16xf32>
    %67 = vector.extract_strided_slice %40 {offsets = [0, 16], sizes = [32, 16], strides = [1, 1]} : vector<32x32xf32> to vector<32x16xf32>
    %cst_27 = arith.constant dense<0.000000e+00> : vector<32x32xf32>
    %68 = tpu.matmul %65, %66, %cst_27 {dimension_numbers = #tpu.dot_dimension_numbers<[1], [1], [0], [0], [0, 0, 1, 0], [], []>} : vector<32x16xf32>, vector<32x16xf32>, vector<32x32xf32> -> vector<32x32xf32>
    %cst_28 = arith.constant 2.500000e-01 : f32
    %69 = vector.broadcast %cst_28 : f32 to vector<32x32xf32>
    %70 = arith.mulf %68, %69 : vector<32x32xf32>
    %71 = arith.addf %70, %8 : vector<32x32xf32>
    %cst_29 = arith.constant dense<0xFF800000> : vector<32xf32>
    %72 = vector.multi_reduction <maximumf>, %71, %cst_29 [1] : vector<32x32xf32> to vector<32xf32>
    %73 = vector.shape_cast %72 : vector<32xf32> to vector<32x1xf32>
    %74 = vector.broadcast %73 : vector<32x1xf32> to vector<32x32xf32>
    %75 = arith.subf %71, %74 : vector<32x32xf32>
    %76 = math.exp %75 : vector<32x32xf32>
    %cst_30 = arith.constant dense<0.000000e+00> : vector<32xf32>
    %77 = vector.multi_reduction <add>, %76, %cst_30 [1] : vector<32x32xf32> to vector<32xf32>
    %78 = vector.shape_cast %77 : vector<32xf32> to vector<32x1xf32>
    %79 = tpu.reciprocal %78 {approx = true} : vector<32x1xf32> -> vector<32x1xf32>
    %80 = vector.broadcast %79 : vector<32x1xf32> to vector<32x32xf32>
    %81 = arith.mulf %76, %80 : vector<32x32xf32>
    %cst_31 = arith.constant dense<0.000000e+00> : vector<32x16xf32>
    %82 = tpu.matmul %81, %67, %cst_31 {dimension_numbers = #tpu.dot_dimension_numbers<[1], [0], [0], [1], [0, 0, 1, 1], [], []>} : vector<32x32xf32>, vector<32x16xf32>, vector<32x16xf32> -> vector<32x16xf32>
    %83 = vector.extract_strided_slice %13 {offsets = [16, 0], sizes = [16, 32], strides = [1, 1]} : vector<32x32xf32> to vector<16x32xf32>
    %cst_32 = arith.constant dense<0.000000e+00> : vector<32x32xf32>
    %84 = tpu.matmul %82, %83, %cst_32 {dimension_numbers = #tpu.dot_dimension_numbers<[1], [0], [0], [1], [0, 0, 1, 1], [], []>} : vector<32x16xf32>, vector<16x32xf32>, vector<32x32xf32> -> vector<32x32xf32>
    %85 = arith.addf %64, %84 : vector<32x32xf32>
    %86 = arith.addf %7, %85 : vector<32x32xf32>
    %c5 = arith.constant 5 : index
    %c0_33 = arith.constant 0 : index
    %87 = vector.load %arg3[%c5, %c0_33] : memref<32x128xf32, #tpu.memory_space<vmem>>, vector<1x32xf32>
    %c6 = arith.constant 6 : index
    %c0_34 = arith.constant 0 : index
    %88 = vector.load %arg3[%c6, %c0_34] : memref<32x128xf32, #tpu.memory_space<vmem>>, vector<1x32xf32>
    %c64_35 = arith.constant 64 : index
    %c0_36 = arith.constant 0 : index
    %89 = vector.load %arg5[%c64_35, %c0_36] : memref<192x128xf32, #tpu.memory_space<vmem>>, vector<32x64xf32>
    %c7 = arith.constant 7 : index
    %c0_37 = arith.constant 0 : index
    %90 = vector.load %arg3[%c7, %c0_37] : memref<32x128xf32, #tpu.memory_space<vmem>>, vector<1x64xf32>
    %c128 = arith.constant 128 : index
    %c0_38 = arith.constant 0 : index
    %91 = vector.load %arg4[%c128, %c0_38] : memref<568x32xf32, #tpu.memory_space<vmem>>, vector<64x32xf32>
    %c8 = arith.constant 8 : index
    %c0_39 = arith.constant 0 : index
    %92 = vector.load %arg3[%c8, %c0_39] : memref<32x128xf32, #tpu.memory_space<vmem>>, vector<1x32xf32>
    %cst_40 = arith.constant dense<0.000000e+00> : vector<32xf32>
    %93 = vector.multi_reduction <add>, %86, %cst_40 [1] : vector<32x32xf32> to vector<32xf32>
    %94 = vector.shape_cast %93 : vector<32xf32> to vector<32x1xf32>
    %cst_41 = arith.constant 3.200000e+01 : f32
    %95 = vector.broadcast %cst_41 : f32 to vector<32x1xf32>
    %96 = arith.divf %94, %95 : vector<32x1xf32>
    %97 = vector.broadcast %96 : vector<32x1xf32> to vector<32x32xf32>
    %98 = arith.subf %86, %97 : vector<32x32xf32>
    %99 = arith.mulf %98, %98 : vector<32x32xf32>
    %cst_42 = arith.constant dense<0.000000e+00> : vector<32xf32>
    %100 = vector.multi_reduction <add>, %99, %cst_42 [1] : vector<32x32xf32> to vector<32xf32>
    %101 = vector.shape_cast %100 : vector<32xf32> to vector<32x1xf32>
    %cst_43 = arith.constant 3.200000e+01 : f32
    %102 = vector.broadcast %cst_43 : f32 to vector<32x1xf32>
    %103 = arith.divf %101, %102 : vector<32x1xf32>
    %cst_44 = arith.constant 9.99999974E-6 : f32
    %104 = vector.broadcast %cst_44 : f32 to vector<32x1xf32>
    %105 = arith.addf %103, %104 : vector<32x1xf32>
    %106 = math.rsqrt %105 : vector<32x1xf32>
    %107 = vector.broadcast %106 : vector<32x1xf32> to vector<32x32xf32>
    %108 = arith.mulf %98, %107 : vector<32x32xf32>
    %109 = vector.broadcast %87 : vector<1x32xf32> to vector<32x32xf32>
    %110 = arith.mulf %108, %109 : vector<32x32xf32>
    %111 = vector.broadcast %88 : vector<1x32xf32> to vector<32x32xf32>
    %112 = arith.addf %110, %111 : vector<32x32xf32>
    %cst_45 = arith.constant dense<0.000000e+00> : vector<32x64xf32>
    %113 = tpu.matmul %112, %89, %cst_45 {dimension_numbers = #tpu.dot_dimension_numbers<[1], [0], [0], [1], [0, 0, 1, 1], [], []>} : vector<32x32xf32>, vector<32x64xf32>, vector<32x64xf32> -> vector<32x64xf32>
    %114 = vector.broadcast %90 : vector<1x64xf32> to vector<32x64xf32>
    %115 = arith.addf %113, %114 : vector<32x64xf32>
    %116 = arith.mulf %115, %115 : vector<32x64xf32>
    %117 = arith.mulf %115, %116 : vector<32x64xf32>
    %cst_46 = arith.constant 4.471500e-02 : f32
    %118 = vector.broadcast %cst_46 : f32 to vector<32x64xf32>
    %119 = arith.mulf %118, %117 : vector<32x64xf32>
    %120 = arith.addf %115, %119 : vector<32x64xf32>
    %cst_47 = arith.constant 0.797884583 : f32
    %121 = vector.broadcast %cst_47 : f32 to vector<32x64xf32>
    %122 = arith.mulf %121, %120 : vector<32x64xf32>
    %123 = math.tanh %122 : vector<32x64xf32>
    %cst_48 = arith.constant 1.000000e+00 : f32
    %124 = vector.broadcast %cst_48 : f32 to vector<32x64xf32>
    %125 = arith.addf %124, %123 : vector<32x64xf32>
    %cst_49 = arith.constant 5.000000e-01 : f32
    %126 = vector.broadcast %cst_49 : f32 to vector<32x64xf32>
    %127 = arith.mulf %126, %125 : vector<32x64xf32>
    %128 = arith.mulf %115, %127 : vector<32x64xf32>
    %cst_50 = arith.constant dense<0.000000e+00> : vector<32x32xf32>
    %129 = tpu.matmul %128, %91, %cst_50 {dimension_numbers = #tpu.dot_dimension_numbers<[1], [0], [0], [1], [0, 0, 1, 1], [], []>} : vector<32x64xf32>, vector<64x32xf32>, vector<32x32xf32> -> vector<32x32xf32>
    %130 = vector.broadcast %92 : vector<1x32xf32> to vector<32x32xf32>
    %131 = arith.addf %129, %130 : vector<32x32xf32>
    %132 = arith.addf %86, %131 : vector<32x32xf32>
    %c192 = arith.constant 192 : index
    %c0_51 = arith.constant 0 : index
    %133 = vector.load %arg4[%c192, %c0_51] : memref<568x32xf32, #tpu.memory_space<vmem>>, vector<16x32xf32>
    %c9 = arith.constant 9 : index
    %c0_52 = arith.constant 0 : index
    %134 = vector.load %arg3[%c9, %c0_52] : memref<32x128xf32, #tpu.memory_space<vmem>>, vector<1x32xf32>
    %c10 = arith.constant 10 : index
    %c0_53 = arith.constant 0 : index
    %135 = vector.load %arg3[%c10, %c0_53] : memref<32x128xf32, #tpu.memory_space<vmem>>, vector<1x32xf32>
    %cst_54 = arith.constant dense<0.000000e+00> : vector<16xf32>
    %136 = vector.multi_reduction <add>, %133, %cst_54 [1] : vector<16x32xf32> to vector<16xf32>
    %137 = vector.shape_cast %136 : vector<16xf32> to vector<16x1xf32>
    %cst_55 = arith.constant 3.200000e+01 : f32
    %138 = vector.broadcast %cst_55 : f32 to vector<16x1xf32>
    %139 = arith.divf %137, %138 : vector<16x1xf32>
    %140 = vector.broadcast %139 : vector<16x1xf32> to vector<16x32xf32>
    %141 = arith.subf %133, %140 : vector<16x32xf32>
    %142 = arith.mulf %141, %141 : vector<16x32xf32>
    %cst_56 = arith.constant dense<0.000000e+00> : vector<16xf32>
    %143 = vector.multi_reduction <add>, %142, %cst_56 [1] : vector<16x32xf32> to vector<16xf32>
    %144 = vector.shape_cast %143 : vector<16xf32> to vector<16x1xf32>
    %cst_57 = arith.constant 3.200000e+01 : f32
    %145 = vector.broadcast %cst_57 : f32 to vector<16x1xf32>
    %146 = arith.divf %144, %145 : vector<16x1xf32>
    %cst_58 = arith.constant 9.99999974E-6 : f32
    %147 = vector.broadcast %cst_58 : f32 to vector<16x1xf32>
    %148 = arith.addf %146, %147 : vector<16x1xf32>
    %149 = math.rsqrt %148 : vector<16x1xf32>
    %150 = vector.broadcast %149 : vector<16x1xf32> to vector<16x32xf32>
    %151 = arith.mulf %141, %150 : vector<16x32xf32>
    %152 = vector.broadcast %134 : vector<1x32xf32> to vector<16x32xf32>
    %153 = arith.mulf %151, %152 : vector<16x32xf32>
    %154 = vector.broadcast %135 : vector<1x32xf32> to vector<16x32xf32>
    %155 = arith.addf %153, %154 : vector<16x32xf32>
    %c11 = arith.constant 11 : index
    %c0_59 = arith.constant 0 : index
    %156 = vector.load %arg3[%c11, %c0_59] : memref<32x128xf32, #tpu.memory_space<vmem>>, vector<1x32xf32>
    %c12 = arith.constant 12 : index
    %c0_60 = arith.constant 0 : index
    %157 = vector.load %arg3[%c12, %c0_60] : memref<32x128xf32, #tpu.memory_space<vmem>>, vector<1x32xf32>
    %cst_61 = arith.constant dense<0.000000e+00> : vector<32xf32>
    %158 = vector.multi_reduction <add>, %132, %cst_61 [1] : vector<32x32xf32> to vector<32xf32>
    %159 = vector.shape_cast %158 : vector<32xf32> to vector<32x1xf32>
    %cst_62 = arith.constant 3.200000e+01 : f32
    %160 = vector.broadcast %cst_62 : f32 to vector<32x1xf32>
    %161 = arith.divf %159, %160 : vector<32x1xf32>
    %162 = vector.broadcast %161 : vector<32x1xf32> to vector<32x32xf32>
    %163 = arith.subf %132, %162 : vector<32x32xf32>
    %164 = arith.mulf %163, %163 : vector<32x32xf32>
    %cst_63 = arith.constant dense<0.000000e+00> : vector<32xf32>
    %165 = vector.multi_reduction <add>, %164, %cst_63 [1] : vector<32x32xf32> to vector<32xf32>
    %166 = vector.shape_cast %165 : vector<32xf32> to vector<32x1xf32>
    %cst_64 = arith.constant 3.200000e+01 : f32
    %167 = vector.broadcast %cst_64 : f32 to vector<32x1xf32>
    %168 = arith.divf %166, %167 : vector<32x1xf32>
    %cst_65 = arith.constant 9.99999974E-6 : f32
    %169 = vector.broadcast %cst_65 : f32 to vector<32x1xf32>
    %170 = arith.addf %168, %169 : vector<32x1xf32>
    %171 = math.rsqrt %170 : vector<32x1xf32>
    %172 = vector.broadcast %171 : vector<32x1xf32> to vector<32x32xf32>
    %173 = arith.mulf %163, %172 : vector<32x32xf32>
    %174 = vector.broadcast %156 : vector<1x32xf32> to vector<32x32xf32>
    %175 = arith.mulf %173, %174 : vector<32x32xf32>
    %176 = vector.broadcast %157 : vector<1x32xf32> to vector<32x32xf32>
    %177 = arith.addf %175, %176 : vector<32x32xf32>
    %c208 = arith.constant 208 : index
    %c0_66 = arith.constant 0 : index
    %178 = vector.load %arg4[%c208, %c0_66] : memref<568x32xf32, #tpu.memory_space<vmem>>, vector<32x32xf32>
    %cst_67 = arith.constant dense<0.000000e+00> : vector<16x32xf32>
    %179 = tpu.matmul %155, %178, %cst_67 {dimension_numbers = #tpu.dot_dimension_numbers<[1], [0], [0], [1], [0, 0, 1, 1], [], []>} : vector<16x32xf32>, vector<32x32xf32>, vector<16x32xf32> -> vector<16x32xf32>
    %c13 = arith.constant 13 : index
    %c0_68 = arith.constant 0 : index
    %180 = vector.load %arg3[%c13, %c0_68] : memref<32x128xf32, #tpu.memory_space<vmem>>, vector<1x32xf32>
    %181 = vector.broadcast %180 : vector<1x32xf32> to vector<16x32xf32>
    %182 = arith.addf %179, %181 : vector<16x32xf32>
    %c128_69 = arith.constant 128 : index
    %c0_70 = arith.constant 0 : index
    %183 = vector.load %arg5[%c128_69, %c0_70] : memref<192x128xf32, #tpu.memory_space<vmem>>, vector<32x64xf32>
    %cst_71 = arith.constant dense<0.000000e+00> : vector<32x64xf32>
    %184 = tpu.matmul %177, %183, %cst_71 {dimension_numbers = #tpu.dot_dimension_numbers<[1], [0], [0], [1], [0, 0, 1, 1], [], []>} : vector<32x32xf32>, vector<32x64xf32>, vector<32x64xf32> -> vector<32x64xf32>
    %c14 = arith.constant 14 : index
    %c0_72 = arith.constant 0 : index
    %185 = vector.load %arg3[%c14, %c0_72] : memref<32x128xf32, #tpu.memory_space<vmem>>, vector<1x64xf32>
    %186 = vector.broadcast %185 : vector<1x64xf32> to vector<32x64xf32>
    %187 = arith.addf %184, %186 : vector<32x64xf32>
    %188 = vector.extract_strided_slice %187 {offsets = [0, 0], sizes = [32, 32], strides = [1, 1]} : vector<32x64xf32> to vector<32x32xf32>
    %189 = vector.extract_strided_slice %187 {offsets = [0, 32], sizes = [32, 32], strides = [1, 1]} : vector<32x64xf32> to vector<32x32xf32>
    %c552 = arith.constant 552 : index
    %c0_73 = arith.constant 0 : index
    %190 = vector.load %arg4[%c552, %c0_73] : memref<568x32xf32, #tpu.memory_space<vmem>>, vector<16x32xf32>
    %c240 = arith.constant 240 : index
    %c0_74 = arith.constant 0 : index
    %191 = vector.load %arg4[%c240, %c0_74] : memref<568x32xf32, #tpu.memory_space<vmem>>, vector<32x32xf32>
    %c15 = arith.constant 15 : index
    %c0_75 = arith.constant 0 : index
    %192 = vector.load %arg3[%c15, %c0_75] : memref<32x128xf32, #tpu.memory_space<vmem>>, vector<1x32xf32>
    %cst_76 = arith.constant 0.000000e+00 : f32
    %193 = vector.broadcast %cst_76 : f32 to vector<16x32xf32>
    %194 = vector.broadcast %192 : vector<1x32xf32> to vector<16x32xf32>
    %195 = arith.addf %193, %194 : vector<16x32xf32>
    %196 = vector.extract_strided_slice %182 {offsets = [0, 0], sizes = [16, 16], strides = [1, 1]} : vector<16x32xf32> to vector<16x16xf32>
    %197 = vector.extract_strided_slice %188 {offsets = [0, 0], sizes = [32, 16], strides = [1, 1]} : vector<32x32xf32> to vector<32x16xf32>
    %198 = vector.extract_strided_slice %189 {offsets = [0, 0], sizes = [32, 16], strides = [1, 1]} : vector<32x32xf32> to vector<32x16xf32>
    %cst_77 = arith.constant dense<0.000000e+00> : vector<16x32xf32>
    %199 = tpu.matmul %196, %197, %cst_77 {dimension_numbers = #tpu.dot_dimension_numbers<[1], [1], [0], [0], [0, 0, 1, 0], [], []>} : vector<16x16xf32>, vector<32x16xf32>, vector<16x32xf32> -> vector<16x32xf32>
    %cst_78 = arith.constant 2.500000e-01 : f32
    %200 = vector.broadcast %cst_78 : f32 to vector<16x32xf32>
    %201 = arith.mulf %199, %200 : vector<16x32xf32>
    %202 = arith.addf %201, %190 : vector<16x32xf32>
    %cst_79 = arith.constant dense<0xFF800000> : vector<16xf32>
    %203 = vector.multi_reduction <maximumf>, %202, %cst_79 [1] : vector<16x32xf32> to vector<16xf32>
    %204 = vector.shape_cast %203 : vector<16xf32> to vector<16x1xf32>
    %205 = vector.broadcast %204 : vector<16x1xf32> to vector<16x32xf32>
    %206 = arith.subf %202, %205 : vector<16x32xf32>
    %207 = math.exp %206 : vector<16x32xf32>
    %cst_80 = arith.constant dense<0.000000e+00> : vector<16xf32>
    %208 = vector.multi_reduction <add>, %207, %cst_80 [1] : vector<16x32xf32> to vector<16xf32>
    %209 = vector.shape_cast %208 : vector<16xf32> to vector<16x1xf32>
    %210 = tpu.reciprocal %209 {approx = true} : vector<16x1xf32> -> vector<16x1xf32>
    %211 = vector.broadcast %210 : vector<16x1xf32> to vector<16x32xf32>
    %212 = arith.mulf %207, %211 : vector<16x32xf32>
    %cst_81 = arith.constant dense<0.000000e+00> : vector<16x16xf32>
    %213 = tpu.matmul %212, %198, %cst_81 {dimension_numbers = #tpu.dot_dimension_numbers<[1], [0], [0], [1], [0, 0, 1, 1], [], []>} : vector<16x32xf32>, vector<32x16xf32>, vector<16x16xf32> -> vector<16x16xf32>
    %214 = vector.extract_strided_slice %191 {offsets = [0, 0], sizes = [16, 32], strides = [1, 1]} : vector<32x32xf32> to vector<16x32xf32>
    %cst_82 = arith.constant dense<0.000000e+00> : vector<16x32xf32>
    %215 = tpu.matmul %213, %214, %cst_82 {dimension_numbers = #tpu.dot_dimension_numbers<[1], [0], [0], [1], [0, 0, 1, 1], [], []>} : vector<16x16xf32>, vector<16x32xf32>, vector<16x32xf32> -> vector<16x32xf32>
    %216 = arith.addf %195, %215 : vector<16x32xf32>
    %217 = vector.extract_strided_slice %182 {offsets = [0, 16], sizes = [16, 16], strides = [1, 1]} : vector<16x32xf32> to vector<16x16xf32>
    %218 = vector.extract_strided_slice %188 {offsets = [0, 16], sizes = [32, 16], strides = [1, 1]} : vector<32x32xf32> to vector<32x16xf32>
    %219 = vector.extract_strided_slice %189 {offsets = [0, 16], sizes = [32, 16], strides = [1, 1]} : vector<32x32xf32> to vector<32x16xf32>
    %cst_83 = arith.constant dense<0.000000e+00> : vector<16x32xf32>
    %220 = tpu.matmul %217, %218, %cst_83 {dimension_numbers = #tpu.dot_dimension_numbers<[1], [1], [0], [0], [0, 0, 1, 0], [], []>} : vector<16x16xf32>, vector<32x16xf32>, vector<16x32xf32> -> vector<16x32xf32>
    %cst_84 = arith.constant 2.500000e-01 : f32
    %221 = vector.broadcast %cst_84 : f32 to vector<16x32xf32>
    %222 = arith.mulf %220, %221 : vector<16x32xf32>
    %223 = arith.addf %222, %190 : vector<16x32xf32>
    %cst_85 = arith.constant dense<0xFF800000> : vector<16xf32>
    %224 = vector.multi_reduction <maximumf>, %223, %cst_85 [1] : vector<16x32xf32> to vector<16xf32>
    %225 = vector.shape_cast %224 : vector<16xf32> to vector<16x1xf32>
    %226 = vector.broadcast %225 : vector<16x1xf32> to vector<16x32xf32>
    %227 = arith.subf %223, %226 : vector<16x32xf32>
    %228 = math.exp %227 : vector<16x32xf32>
    %cst_86 = arith.constant dense<0.000000e+00> : vector<16xf32>
    %229 = vector.multi_reduction <add>, %228, %cst_86 [1] : vector<16x32xf32> to vector<16xf32>
    %230 = vector.shape_cast %229 : vector<16xf32> to vector<16x1xf32>
    %231 = tpu.reciprocal %230 {approx = true} : vector<16x1xf32> -> vector<16x1xf32>
    %232 = vector.broadcast %231 : vector<16x1xf32> to vector<16x32xf32>
    %233 = arith.mulf %228, %232 : vector<16x32xf32>
    %cst_87 = arith.constant dense<0.000000e+00> : vector<16x16xf32>
    %234 = tpu.matmul %233, %219, %cst_87 {dimension_numbers = #tpu.dot_dimension_numbers<[1], [0], [0], [1], [0, 0, 1, 1], [], []>} : vector<16x32xf32>, vector<32x16xf32>, vector<16x16xf32> -> vector<16x16xf32>
    %235 = vector.extract_strided_slice %191 {offsets = [16, 0], sizes = [16, 32], strides = [1, 1]} : vector<32x32xf32> to vector<16x32xf32>
    %cst_88 = arith.constant dense<0.000000e+00> : vector<16x32xf32>
    %236 = tpu.matmul %234, %235, %cst_88 {dimension_numbers = #tpu.dot_dimension_numbers<[1], [0], [0], [1], [0, 0, 1, 1], [], []>} : vector<16x16xf32>, vector<16x32xf32>, vector<16x32xf32> -> vector<16x32xf32>
    %237 = arith.addf %216, %236 : vector<16x32xf32>
    %238 = arith.addf %133, %237 : vector<16x32xf32>
    %c0_89 = arith.constant 0 : index
    %c0_90 = arith.constant 0 : index
    %239 = vector.load %arg2[%c0_89, %c0_90] : memref<8x1xi32, #tpu.memory_space<vmem>>, vector<8x1xi32>
    %240 = tpu.iota {dimensions = array<i32: 1>} : vector<8x128xi32>
    %241 = vector.broadcast %239 : vector<8x1xi32> to vector<8x128xi32>
    %242 = arith.cmpi eq, %240, %241 : vector<8x128xi32>
    %243 = arith.extui %242 : vector<8x128xi1> to vector<8x128xi32>
    %244 = arith.sitofp %243 : vector<8x128xi32> to vector<8x128xf32>
    %c272 = arith.constant 272 : index
    %c0_91 = arith.constant 0 : index
    %245 = vector.load %arg4[%c272, %c0_91] : memref<568x32xf32, #tpu.memory_space<vmem>>, vector<128x32xf32>
    %cst_92 = arith.constant dense<0.000000e+00> : vector<8x32xf32>
    %246 = tpu.matmul %244, %245, %cst_92 {dimension_numbers = #tpu.dot_dimension_numbers<[1], [0], [0], [1], [0, 0, 1, 1], [], []>} : vector<8x128xf32>, vector<128x32xf32>, vector<8x32xf32> -> vector<8x32xf32>
    %c0_93 = arith.constant 0 : index
    %c0_94 = arith.constant 0 : index
    %247 = vector.load %arg8[%c0_93, %c0_94] : memref<24x32xf32, #tpu.memory_space<vmem>>, vector<8x32xf32>
    tpu.vector_store %arg8[%c0_93, %c0_94], %246 {strides = array<i32>} : memref<24x32xf32, #tpu.memory_space<vmem>>, vector<8x32xf32>,
    %c8_95 = arith.constant 8 : index
    %c0_96 = arith.constant 0 : index
    %248 = vector.load %arg8[%c8_95, %c0_96] : memref<24x32xf32, #tpu.memory_space<vmem>>, vector<16x32xf32>
    tpu.vector_store %arg8[%c8_95, %c0_96], %238 {strides = array<i32>} : memref<24x32xf32, #tpu.memory_space<vmem>>, vector<16x32xf32>,
    %c0_97 = arith.constant 0 : index
    %c0_98 = arith.constant 0 : index
    %249 = vector.load %arg8[%c0_97, %c0_98] : memref<24x32xf32, #tpu.memory_space<vmem>>, vector<24x32xf32>
    %c400 = arith.constant 400 : index
    %c0_99 = arith.constant 0 : index
    %250 = vector.load %arg4[%c400, %c0_99] : memref<568x32xf32, #tpu.memory_space<vmem>>, vector<24x32xf32>
    %251 = arith.addf %249, %250 : vector<24x32xf32>
    %c16 = arith.constant 16 : index
    %c0_100 = arith.constant 0 : index
    %252 = vector.load %arg3[%c16, %c0_100] : memref<32x128xf32, #tpu.memory_space<vmem>>, vector<1x32xf32>
    %c17 = arith.constant 17 : index
    %c0_101 = arith.constant 0 : index
    %253 = vector.load %arg3[%c17, %c0_101] : memref<32x128xf32, #tpu.memory_space<vmem>>, vector<1x32xf32>
    %c32 = arith.constant 32 : index
    %c0_102 = arith.constant 0 : index
    %254 = vector.load %arg5[%c32, %c0_102] : memref<192x128xf32, #tpu.memory_space<vmem>>, vector<32x96xf32>
    %c18 = arith.constant 18 : index
    %c0_103 = arith.constant 0 : index
    %255 = vector.load %arg3[%c18, %c0_103] : memref<32x128xf32, #tpu.memory_space<vmem>>, vector<1x96xf32>
    %c424 = arith.constant 424 : index
    %c0_104 = arith.constant 0 : index
    %256 = vector.load %arg4[%c424, %c0_104] : memref<568x32xf32, #tpu.memory_space<vmem>>, vector<32x32xf32>
    %c19 = arith.constant 19 : index
    %c0_105 = arith.constant 0 : index
    %257 = vector.load %arg3[%c19, %c0_105] : memref<32x128xf32, #tpu.memory_space<vmem>>, vector<1x32xf32>
    %cst_106 = arith.constant dense<0.000000e+00> : vector<24xf32>
    %258 = vector.multi_reduction <add>, %251, %cst_106 [1] : vector<24x32xf32> to vector<24xf32>
    %259 = vector.shape_cast %258 : vector<24xf32> to vector<24x1xf32>
    %cst_107 = arith.constant 3.200000e+01 : f32
    %260 = vector.broadcast %cst_107 : f32 to vector<24x1xf32>
    %261 = arith.divf %259, %260 : vector<24x1xf32>
    %262 = vector.broadcast %261 : vector<24x1xf32> to vector<24x32xf32>
    %263 = arith.subf %251, %262 : vector<24x32xf32>
    %264 = arith.mulf %263, %263 : vector<24x32xf32>
    %cst_108 = arith.constant dense<0.000000e+00> : vector<24xf32>
    %265 = vector.multi_reduction <add>, %264, %cst_108 [1] : vector<24x32xf32> to vector<24xf32>
    %266 = vector.shape_cast %265 : vector<24xf32> to vector<24x1xf32>
    %cst_109 = arith.constant 3.200000e+01 : f32
    %267 = vector.broadcast %cst_109 : f32 to vector<24x1xf32>
    %268 = arith.divf %266, %267 : vector<24x1xf32>
    %cst_110 = arith.constant 9.99999974E-6 : f32
    %269 = vector.broadcast %cst_110 : f32 to vector<24x1xf32>
    %270 = arith.addf %268, %269 : vector<24x1xf32>
    %271 = math.rsqrt %270 : vector<24x1xf32>
    %272 = vector.broadcast %271 : vector<24x1xf32> to vector<24x32xf32>
    %273 = arith.mulf %263, %272 : vector<24x32xf32>
    %274 = vector.broadcast %252 : vector<1x32xf32> to vector<24x32xf32>
    %275 = arith.mulf %273, %274 : vector<24x32xf32>
    %276 = vector.broadcast %253 : vector<1x32xf32> to vector<24x32xf32>
    %277 = arith.addf %275, %276 : vector<24x32xf32>
    %cst_111 = arith.constant dense<0.000000e+00> : vector<24x96xf32>
    %278 = tpu.matmul %277, %254, %cst_111 {dimension_numbers = #tpu.dot_dimension_numbers<[1], [0], [0], [1], [0, 0, 1, 1], [], []>} : vector<24x32xf32>, vector<32x96xf32>, vector<24x96xf32> -> vector<24x96xf32>
    %279 = vector.broadcast %255 : vector<1x96xf32> to vector<24x96xf32>
    %280 = arith.addf %278, %279 : vector<24x96xf32>
    %281 = vector.extract_strided_slice %280 {offsets = [0, 0], sizes = [24, 32], strides = [1, 1]} : vector<24x96xf32> to vector<24x32xf32>
    %282 = vector.extract_strided_slice %280 {offsets = [0, 32], sizes = [24, 32], strides = [1, 1]} : vector<24x96xf32> to vector<24x32xf32>
    %283 = vector.extract_strided_slice %280 {offsets = [0, 64], sizes = [24, 32], strides = [1, 1]} : vector<24x96xf32> to vector<24x32xf32>
    %cst_112 = arith.constant 0.000000e+00 : f32
    %284 = vector.broadcast %cst_112 : f32 to vector<24x32xf32>
    %285 = vector.broadcast %257 : vector<1x32xf32> to vector<24x32xf32>
    %286 = arith.addf %284, %285 : vector<24x32xf32>
    %287 = vector.extract_strided_slice %281 {offsets = [0, 0], sizes = [24, 16], strides = [1, 1]} : vector<24x32xf32> to vector<24x16xf32>
    %288 = vector.extract_strided_slice %282 {offsets = [0, 0], sizes = [24, 16], strides = [1, 1]} : vector<24x32xf32> to vector<24x16xf32>
    %289 = vector.extract_strided_slice %283 {offsets = [0, 0], sizes = [24, 16], strides = [1, 1]} : vector<24x32xf32> to vector<24x16xf32>
    %cst_113 = arith.constant dense<0.000000e+00> : vector<24x24xf32>
    %290 = tpu.matmul %287, %288, %cst_113 {dimension_numbers = #tpu.dot_dimension_numbers<[1], [1], [0], [0], [0, 0, 1, 0], [], []>} : vector<24x16xf32>, vector<24x16xf32>, vector<24x24xf32> -> vector<24x24xf32>
    %cst_114 = arith.constant 2.500000e-01 : f32
    %291 = vector.broadcast %cst_114 : f32 to vector<24x24xf32>
    %292 = arith.mulf %290, %291 : vector<24x24xf32>
    %cst_115 = arith.constant dense<0xFF800000> : vector<24xf32>
    %293 = vector.multi_reduction <maximumf>, %292, %cst_115 [1] : vector<24x24xf32> to vector<24xf32>
    %294 = vector.shape_cast %293 : vector<24xf32> to vector<24x1xf32>
    %295 = vector.broadcast %294 : vector<24x1xf32> to vector<24x24xf32>
    %296 = arith.subf %292, %295 : vector<24x24xf32>
    %297 = math.exp %296 : vector<24x24xf32>
    %cst_116 = arith.constant dense<0.000000e+00> : vector<24xf32>
    %298 = vector.multi_reduction <add>, %297, %cst_116 [1] : vector<24x24xf32> to vector<24xf32>
    %299 = vector.shape_cast %298 : vector<24xf32> to vector<24x1xf32>
    %300 = tpu.reciprocal %299 {approx = true} : vector<24x1xf32> -> vector<24x1xf32>
    %301 = vector.broadcast %300 : vector<24x1xf32> to vector<24x24xf32>
    %302 = arith.mulf %297, %301 : vector<24x24xf32>
    %cst_117 = arith.constant dense<0.000000e+00> : vector<24x16xf32>
    %303 = tpu.matmul %302, %289, %cst_117 {dimension_numbers = #tpu.dot_dimension_numbers<[1], [0], [0], [1], [0, 0, 1, 1], [], []>} : vector<24x24xf32>, vector<24x16xf32>, vector<24x16xf32> -> vector<24x16xf32>
    %304 = vector.extract_strided_slice %256 {offsets = [0, 0], sizes = [16, 32], strides = [1, 1]} : vector<32x32xf32> to vector<16x32xf32>
    %cst_118 = arith.constant dense<0.000000e+00> : vector<24x32xf32>
    %305 = tpu.matmul %303, %304, %cst_118 {dimension_numbers = #tpu.dot_dimension_numbers<[1], [0], [0], [1], [0, 0, 1, 1], [], []>} : vector<24x16xf32>, vector<16x32xf32>, vector<24x32xf32> -> vector<24x32xf32>
    %306 = arith.addf %286, %305 : vector<24x32xf32>
    %307 = vector.extract_strided_slice %281 {offsets = [0, 16], sizes = [24, 16], strides = [1, 1]} : vector<24x32xf32> to vector<24x16xf32>
    %308 = vector.extract_strided_slice %282 {offsets = [0, 16], sizes = [24, 16], strides = [1, 1]} : vector<24x32xf32> to vector<24x16xf32>
    %309 = vector.extract_strided_slice %283 {offsets = [0, 16], sizes = [24, 16], strides = [1, 1]} : vector<24x32xf32> to vector<24x16xf32>
    %cst_119 = arith.constant dense<0.000000e+00> : vector<24x24xf32>
    %310 = tpu.matmul %307, %308, %cst_119 {dimension_numbers = #tpu.dot_dimension_numbers<[1], [1], [0], [0], [0, 0, 1, 0], [], []>} : vector<24x16xf32>, vector<24x16xf32>, vector<24x24xf32> -> vector<24x24xf32>
    %cst_120 = arith.constant 2.500000e-01 : f32
    %311 = vector.broadcast %cst_120 : f32 to vector<24x24xf32>
    %312 = arith.mulf %310, %311 : vector<24x24xf32>
    %cst_121 = arith.constant dense<0xFF800000> : vector<24xf32>
    %313 = vector.multi_reduction <maximumf>, %312, %cst_121 [1] : vector<24x24xf32> to vector<24xf32>
    %314 = vector.shape_cast %313 : vector<24xf32> to vector<24x1xf32>
    %315 = vector.broadcast %314 : vector<24x1xf32> to vector<24x24xf32>
    %316 = arith.subf %312, %315 : vector<24x24xf32>
    %317 = math.exp %316 : vector<24x24xf32>
    %cst_122 = arith.constant dense<0.000000e+00> : vector<24xf32>
    %318 = vector.multi_reduction <add>, %317, %cst_122 [1] : vector<24x24xf32> to vector<24xf32>
    %319 = vector.shape_cast %318 : vector<24xf32> to vector<24x1xf32>
    %320 = tpu.reciprocal %319 {approx = true} : vector<24x1xf32> -> vector<24x1xf32>
    %321 = vector.broadcast %320 : vector<24x1xf32> to vector<24x24xf32>
    %322 = arith.mulf %317, %321 : vector<24x24xf32>
    %cst_123 = arith.constant dense<0.000000e+00> : vector<24x16xf32>
    %323 = tpu.matmul %322, %309, %cst_123 {dimension_numbers = #tpu.dot_dimension_numbers<[1], [0], [0], [1], [0, 0, 1, 1], [], []>} : vector<24x24xf32>, vector<24x16xf32>, vector<24x16xf32> -> vector<24x16xf32>
    %324 = vector.extract_strided_slice %256 {offsets = [16, 0], sizes = [16, 32], strides = [1, 1]} : vector<32x32xf32> to vector<16x32xf32>
    %cst_124 = arith.constant dense<0.000000e+00> : vector<24x32xf32>
    %325 = tpu.matmul %323, %324, %cst_124 {dimension_numbers = #tpu.dot_dimension_numbers<[1], [0], [0], [1], [0, 0, 1, 1], [], []>} : vector<24x16xf32>, vector<16x32xf32>, vector<24x32xf32> -> vector<24x32xf32>
    %326 = arith.addf %306, %325 : vector<24x32xf32>
    %327 = arith.addf %251, %326 : vector<24x32xf32>
    %c20 = arith.constant 20 : index
    %c0_125 = arith.constant 0 : index
    %328 = vector.load %arg3[%c20, %c0_125] : memref<32x128xf32, #tpu.memory_space<vmem>>, vector<1x32xf32>
    %c21 = arith.constant 21 : index
    %c0_126 = arith.constant 0 : index
    %329 = vector.load %arg3[%c21, %c0_126] : memref<32x128xf32, #tpu.memory_space<vmem>>, vector<1x32xf32>
    %c96_127 = arith.constant 96 : index
    %c0_128 = arith.constant 0 : index
    %330 = vector.load %arg5[%c96_127, %c0_128] : memref<192x128xf32, #tpu.memory_space<vmem>>, vector<32x64xf32>
    %c22 = arith.constant 22 : index
    %c0_129 = arith.constant 0 : index
    %331 = vector.load %arg3[%c22, %c0_129] : memref<32x128xf32, #tpu.memory_space<vmem>>, vector<1x64xf32>
    %c456 = arith.constant 456 : index
    %c0_130 = arith.constant 0 : index
    %332 = vector.load %arg4[%c456, %c0_130] : memref<568x32xf32, #tpu.memory_space<vmem>>, vector<64x32xf32>
    %c23 = arith.constant 23 : index
    %c0_131 = arith.constant 0 : index
    %333 = vector.load %arg3[%c23, %c0_131] : memref<32x128xf32, #tpu.memory_space<vmem>>, vector<1x32xf32>
    %cst_132 = arith.constant dense<0.000000e+00> : vector<24xf32>
    %334 = vector.multi_reduction <add>, %327, %cst_132 [1] : vector<24x32xf32> to vector<24xf32>
    %335 = vector.shape_cast %334 : vector<24xf32> to vector<24x1xf32>
    %cst_133 = arith.constant 3.200000e+01 : f32
    %336 = vector.broadcast %cst_133 : f32 to vector<24x1xf32>
    %337 = arith.divf %335, %336 : vector<24x1xf32>
    %338 = vector.broadcast %337 : vector<24x1xf32> to vector<24x32xf32>
    %339 = arith.subf %327, %338 : vector<24x32xf32>
    %340 = arith.mulf %339, %339 : vector<24x32xf32>
    %cst_134 = arith.constant dense<0.000000e+00> : vector<24xf32>
    %341 = vector.multi_reduction <add>, %340, %cst_134 [1] : vector<24x32xf32> to vector<24xf32>
    %342 = vector.shape_cast %341 : vector<24xf32> to vector<24x1xf32>
    %cst_135 = arith.constant 3.200000e+01 : f32
    %343 = vector.broadcast %cst_135 : f32 to vector<24x1xf32>
    %344 = arith.divf %342, %343 : vector<24x1xf32>
    %cst_136 = arith.constant 9.99999974E-6 : f32
    %345 = vector.broadcast %cst_136 : f32 to vector<24x1xf32>
    %346 = arith.addf %344, %345 : vector<24x1xf32>
    %347 = math.rsqrt %346 : vector<24x1xf32>
    %348 = vector.broadcast %347 : vector<24x1xf32> to vector<24x32xf32>
    %349 = arith.mulf %339, %348 : vector<24x32xf32>
    %350 = vector.broadcast %328 : vector<1x32xf32> to vector<24x32xf32>
    %351 = arith.mulf %349, %350 : vector<24x32xf32>
    %352 = vector.broadcast %329 : vector<1x32xf32> to vector<24x32xf32>
    %353 = arith.addf %351, %352 : vector<24x32xf32>
    %cst_137 = arith.constant dense<0.000000e+00> : vector<24x64xf32>
    %354 = tpu.matmul %353, %330, %cst_137 {dimension_numbers = #tpu.dot_dimension_numbers<[1], [0], [0], [1], [0, 0, 1, 1], [], []>} : vector<24x32xf32>, vector<32x64xf32>, vector<24x64xf32> -> vector<24x64xf32>
    %355 = vector.broadcast %331 : vector<1x64xf32> to vector<24x64xf32>
    %356 = arith.addf %354, %355 : vector<24x64xf32>
    %357 = arith.mulf %356, %356 : vector<24x64xf32>
    %358 = arith.mulf %356, %357 : vector<24x64xf32>
    %cst_138 = arith.constant 4.471500e-02 : f32
    %359 = vector.broadcast %cst_138 : f32 to vector<24x64xf32>
    %360 = arith.mulf %359, %358 : vector<24x64xf32>
    %361 = arith.addf %356, %360 : vector<24x64xf32>
    %cst_139 = arith.constant 0.797884583 : f32
    %362 = vector.broadcast %cst_139 : f32 to vector<24x64xf32>
    %363 = arith.mulf %362, %361 : vector<24x64xf32>
    %364 = math.tanh %363 : vector<24x64xf32>
    %cst_140 = arith.constant 1.000000e+00 : f32
    %365 = vector.broadcast %cst_140 : f32 to vector<24x64xf32>
    %366 = arith.addf %365, %364 : vector<24x64xf32>
    %cst_141 = arith.constant 5.000000e-01 : f32
    %367 = vector.broadcast %cst_141 : f32 to vector<24x64xf32>
    %368 = arith.mulf %367, %366 : vector<24x64xf32>
    %369 = arith.mulf %356, %368 : vector<24x64xf32>
    %cst_142 = arith.constant dense<0.000000e+00> : vector<24x32xf32>
    %370 = tpu.matmul %369, %332, %cst_142 {dimension_numbers = #tpu.dot_dimension_numbers<[1], [0], [0], [1], [0, 0, 1, 1], [], []>} : vector<24x64xf32>, vector<64x32xf32>, vector<24x32xf32> -> vector<24x32xf32>
    %371 = vector.broadcast %333 : vector<1x32xf32> to vector<24x32xf32>
    %372 = arith.addf %370, %371 : vector<24x32xf32>
    %373 = arith.addf %327, %372 : vector<24x32xf32>
    %c24 = arith.constant 24 : index
    %c0_143 = arith.constant 0 : index
    %374 = vector.load %arg3[%c24, %c0_143] : memref<32x128xf32, #tpu.memory_space<vmem>>, vector<1x32xf32>
    %c25 = arith.constant 25 : index
    %c0_144 = arith.constant 0 : index
    %375 = vector.load %arg3[%c25, %c0_144] : memref<32x128xf32, #tpu.memory_space<vmem>>, vector<1x32xf32>
    %cst_145 = arith.constant dense<0.000000e+00> : vector<24xf32>
    %376 = vector.multi_reduction <add>, %373, %cst_145 [1] : vector<24x32xf32> to vector<24xf32>
    %377 = vector.shape_cast %376 : vector<24xf32> to vector<24x1xf32>
    %cst_146 = arith.constant 3.200000e+01 : f32
    %378 = vector.broadcast %cst_146 : f32 to vector<24x1xf32>
    %379 = arith.divf %377, %378 : vector<24x1xf32>
    %380 = vector.broadcast %379 : vector<24x1xf32> to vector<24x32xf32>
    %381 = arith.subf %373, %380 : vector<24x32xf32>
    %382 = arith.mulf %381, %381 : vector<24x32xf32>
    %cst_147 = arith.constant dense<0.000000e+00> : vector<24xf32>
    %383 = vector.multi_reduction <add>, %382, %cst_147 [1] : vector<24x32xf32> to vector<24xf32>
    %384 = vector.shape_cast %383 : vector<24xf32> to vector<24x1xf32>
    %cst_148 = arith.constant 3.200000e+01 : f32
    %385 = vector.broadcast %cst_148 : f32 to vector<24x1xf32>
    %386 = arith.divf %384, %385 : vector<24x1xf32>
    %cst_149 = arith.constant 9.99999974E-6 : f32
    %387 = vector.broadcast %cst_149 : f32 to vector<24x1xf32>
    %388 = arith.addf %386, %387 : vector<24x1xf32>
    %389 = math.rsqrt %388 : vector<24x1xf32>
    %390 = vector.broadcast %389 : vector<24x1xf32> to vector<24x32xf32>
    %391 = arith.mulf %381, %390 : vector<24x32xf32>
    %392 = vector.broadcast %374 : vector<1x32xf32> to vector<24x32xf32>
    %393 = arith.mulf %391, %392 : vector<24x32xf32>
    %394 = vector.broadcast %375 : vector<1x32xf32> to vector<24x32xf32>
    %395 = arith.addf %393, %394 : vector<24x32xf32>
    %c160 = arith.constant 160 : index
    %c0_150 = arith.constant 0 : index
    %396 = vector.load %arg5[%c160, %c0_150] : memref<192x128xf32, #tpu.memory_space<vmem>>, vector<32x128xf32>
    %cst_151 = arith.constant dense<0.000000e+00> : vector<24x128xf32>
    %397 = tpu.matmul %395, %396, %cst_151 {dimension_numbers = #tpu.dot_dimension_numbers<[1], [0], [0], [1], [0, 0, 1, 1], [], []>} : vector<24x32xf32>, vector<32x128xf32>, vector<24x128xf32> -> vector<24x128xf32>
    %c26 = arith.constant 26 : index
    %c0_152 = arith.constant 0 : index
    %398 = vector.load %arg3[%c26, %c0_152] : memref<32x128xf32, #tpu.memory_space<vmem>>, vector<1x128xf32>
    %399 = vector.broadcast %398 : vector<1x128xf32> to vector<24x128xf32>
    %400 = arith.addf %397, %399 : vector<24x128xf32>
    %c0_153 = arith.constant 0 : index
    %c0_154 = arith.constant 0 : index
    %401 = vector.load %arg6[%c0_153, %c0_154] : memref<24x128xf32, #tpu.memory_space<vmem>>, vector<24x128xf32>
    tpu.vector_store %arg6[%c0_153, %c0_154], %400 {strides = array<i32>} : memref<24x128xf32, #tpu.memory_space<vmem>>, vector<24x128xf32>,
    %c27 = arith.constant 27 : index
    %c0_155 = arith.constant 0 : index
    %402 = vector.load %arg3[%c27, %c0_155] : memref<32x128xf32, #tpu.memory_space<vmem>>, vector<2x24xf32>
    %cst_156 = arith.constant dense<0.000000e+00> : vector<2x128xf32>
    %403 = tpu.matmul %402, %400, %cst_156 {dimension_numbers = #tpu.dot_dimension_numbers<[1], [0], [0], [1], [0, 0, 1, 1], [], []>} : vector<2x24xf32>, vector<24x128xf32>, vector<2x128xf32> -> vector<2x128xf32>
    %cst_157 = arith.constant dense<0xFF800000> : vector<2xf32>
    %404 = vector.multi_reduction <maximumf>, %403, %cst_157 [1] : vector<2x128xf32> to vector<2xf32>
    %405 = vector.shape_cast %404 : vector<2xf32> to vector<2x1xf32>
    %406 = vector.broadcast %405 : vector<2x1xf32> to vector<2x128xf32>
    %407 = arith.subf %403, %406 : vector<2x128xf32>
    %408 = math.exp %407 : vector<2x128xf32>
    %cst_158 = arith.constant dense<0.000000e+00> : vector<2xf32>
    %409 = vector.multi_reduction <add>, %408, %cst_158 [1] : vector<2x128xf32> to vector<2xf32>
    %410 = vector.shape_cast %409 : vector<2xf32> to vector<2x1xf32>
    %411 = vector.broadcast %410 : vector<2x1xf32> to vector<2x128xf32>
    %412 = arith.divf %408, %411 : vector<2x128xf32>
    %c0_159 = arith.constant 0 : index
    %c0_160 = arith.constant 0 : index
    %413 = vector.load %arg7[%c0_159, %c0_160] : memref<2x128xf32, #tpu.memory_space<vmem>>, vector<2x128xf32>
    tpu.vector_store %arg7[%c0_159, %c0_160], %412 {strides = array<i32>} : memref<2x128xf32, #tpu.memory_space<vmem>>, vector<2x128xf32>,
    return
  }
  func.func @transform_0(%arg0: i32) -> (i32, i32) {
    %c0_i32 = arith.constant 0 : i32
    %c0_i32_0 = arith.constant 0 : i32
    %c0_i32_1 = arith.constant 0 : i32
    return %c0_i32, %c0_i32_0 : i32, i32
  }
  func.func @transform_1(%arg0: i32) -> (i32, i32) {
    %c0_i32 = arith.constant 0 : i32
    %c0_i32_0 = arith.constant 0 : i32
    %c0_i32_1 = arith.constant 0 : i32
    return %c0_i32, %c0_i32_0 : i32, i32
  }
  func.func @transform_2(%arg0: i32) -> (i32, i32) {
    %c0_i32 = arith.constant 0 : i32
    %c0_i32_0 = arith.constant 0 : i32
    %c0_i32_1 = arith.constant 0 : i32
    return %c0_i32, %c0_i32_0 : i32, i32
  }
  func.func @transform_3(%arg0: i32) -> (i32, i32) {
    %c0_i32 = arith.constant 0 : i32
    %c0_i32_0 = arith.constant 0 : i32
    %c0_i32_1 = arith.constant 0 : i32
    return %c0_i32, %c0_i32_0 : i32, i32
  }
  func.func @transform_4(%arg0: i32) -> (i32, i32) {
    %c0_i32 = arith.constant 0 : i32
    %c0_i32_0 = arith.constant 0 : i32
    %c0_i32_1 = arith.constant 0 : i32
    return %c0_i32, %c0_i32_0 : i32, i32
  }
  func.func @transform_5(%arg0: i32) -> (i32, i32) {
    %c0_i32 = arith.constant 0 : i32
    %c0_i32_0 = arith.constant 0 : i32
    %c0_i32_1 = arith.constant 0 : i32
    return %c0_i32, %c0_i32_0 : i32, i32
  }
  func.func @transform_6(%arg0: i32) -> (i32, i32) {
    %c0_i32 = arith.constant 0 : i32
    %c0_i32_0 = arith.constant 0 : i32
    %c0_i32_1 = arith.constant 0 : i32
    return %c0_i32, %c0_i32_0 : i32, i32
  }
}

</mosaic_0001>

<llo_original>
// kernel: tfvsn_forward.1
$region0: #{tfvsn_forward.1}
  #allocation0 [shape = 'u32[]', space=smem, size = 0x4, offset = 0x4, fixed_abs, tag = 'smem constant byte address 0x4 - core index']
  #allocation1 [shape = 'u32[144,128]{1,0:T(1,128)}', space=vmem, size = 0x12000, scoped, tag = 'internal scratch']
  #allocation2 [shape = 'f32[24,32]{1,0:T(8,128)}', space=vmem, size = 0x3000, scoped, tag = 'scratch operand']
  %s0 = inlined_call_operand.vmem [shape: f32[32,64], index: 0, kind: input, shape index: {}]
  %s1 = inlined_call_operand.vmem [shape: s32[8,1], index: 1, kind: input, shape index: {}]
  %s2 = inlined_call_operand.vmem [shape: f32[32,128], index: 2, kind: input, shape index: {}]
  %s3 = inlined_call_operand.vmem [shape: f32[568,32], index: 3, kind: input, shape index: {}]
  %s4 = inlined_call_operand.vmem [shape: f32[192,128], index: 4, kind: input, shape index: {}]
  %s5 = inlined_call_operand.vmem [shape: f32[24,128], index: 5, kind: output, shape index: {0}]
  %s6 = inlined_call_operand.vmem [shape: f32[2,128], index: 6, kind: output, shape index: {1}]
  %7 = xla_tuple %s5, %s6
  %s8 = sld [smem:[#allocation0]]
  $region38: #{tfvsn_forward.1} parent=0
    _
  %s10 = ssub.s32 1, %s8
  %s11 = scalar_select 0, %s10, %s8
  // Predicated region
  $region2: #{tfvsn_forward.1} parent=0 // pred_check
    _
  $region3: #{tfvsn_forward.1} parent=0 // pred_check_branch
    %13 = sbr.rel (0) target = $region5
  $region4: #{tfvsn_forward.1} parent=0 // pred_region
    _
  $region5: #{tfvsn_forward.1} parent=0 // pred_fallthru
    _
  // Predicated region
  $region6: #{tfvsn_forward.1} parent=0 // pred_check
    _
  $region7: #{tfvsn_forward.1} parent=0 // pred_check_branch
    %15 = sbr.rel (0) target = $region9
  $region8: #{tfvsn_forward.1} parent=0 // pred_region
    _
  $region9: #{tfvsn_forward.1} parent=0 // pred_fallthru
    _
  // Predicated region
  $region10: #{tfvsn_forward.1} parent=0 // pred_check
    _
  $region11: #{tfvsn_forward.1} parent=0 // pred_check_branch
    %17 = sbr.rel (0) target = $region13
  $region12: #{tfvsn_forward.1} parent=0 // pred_region
    _
  $region13: #{tfvsn_forward.1} parent=0 // pred_fallthru
    _
  // Predicated region
  $region14: #{tfvsn_forward.1} parent=0 // pred_check
    _
  $region15: #{tfvsn_forward.1} parent=0 // pred_check_branch
    %19 = sbr.rel (0) target = $region17
  $region16: #{tfvsn_forward.1} parent=0 // pred_region
    _
  $region17: #{tfvsn_forward.1} parent=0 // pred_fallthru
    _
  // Predicated region
  $region18: #{tfvsn_forward.1} parent=0 // pred_check
    _
  $region19: #{tfvsn_forward.1} parent=0 // pred_check_branch
    %21 = sbr.rel (0) target = $region21
  $region20: #{tfvsn_forward.1} parent=0 // pred_region
    _
  $region21: #{tfvsn_forward.1} parent=0 // pred_fallthru
    _
  %v22 = vld [vmem:[%s0] sm:$0xff]
  %v23 = vld [vmem:[%s0 + $0x8] sm:$0xff]
  %v24 = vld [vmem:[%s0 + $0x10] sm:$0xff]
  %v25 = vld [vmem:[%s0 + $0x18] sm:$0xff]
  %v26 = vld [vmem:[%s3] sm:$0xff]
  %v27 = vld [vmem:[%s3 + $0x8] sm:$0xff]
  %v28 = vld [vmem:[%s3 + $0x10] sm:$0xff]
  %v29 = vld [vmem:[%s3 + $0x18] sm:$0xff]
  %v30 = vld [vmem:[%s3 + $0x20] sm:$0xff]
  %v31 = vld [vmem:[%s3 + $0x28] sm:$0xff]
  %v32 = vld [vmem:[%s3 + $0x30] sm:$0xff]
  %v33 = vld [vmem:[%s3 + $0x38] sm:$0xff]
  %v34 = vld [vmem:[%s2] sm:$0x1]
  %v35 = vlaneseq
  %v36 = vshrl.u32 %v35, 7
  %v37 = vsub.s32 0, %v36
  %v38 = vrot.slane %v34, %v37
  %vm39 = vcmask 523264
  %v41 = vsel %vm39, %v22, 0
  %v44 = vsel %vm39, %v23, 0
  %v47 = vsel %vm39, %v24, 0
  %v50 = vsel %vm39, %v25, 0
  %52 = vmatprep.subr.mxu0 0.0
  %53 = vmatpush1.msra.mxu0 %v26
  %54 = vmatprep.subr.mxu0 0.0
  %55 = vmatpush1.msra.mxu0 %v27
  %56 = vmatprep.subr.mxu0 0.0
  %57 = vmatpush1.msra.mxu0 %v28
  %58 = vmatprep.subr.mxu0 0.0
  %59 = vmatpush1.msra.mxu0 %v29
  %60 = vmatprep.subr.mxu0 0.0
  %61 = vmatpush1.msra.mxu0 %v30
  %62 = vmatprep.subr.mxu0 0.0
  %63 = vmatpush1.msra.mxu0 %v31
  %64 = vmatprep.subr.mxu0 0.0
  %65 = vmatpush1.msra.mxu0 %v32
  %66 = vmatprep.subr.mxu0 0.0
  %67 = vmatpush1.msra.mxu0 %v33
  %68 = vmatprep.subr.mxu0 0.0
  %69 = vmatpush1.msra.mxu0 0.0
  %70 = vmatprep.subr.mxu0 0.0
  %71 = vmatpush1.msra.mxu0 0.0
  %72 = vmatprep.subr.mxu0 0.0
  %73 = vmatpush1.msra.mxu0 0.0
  %74 = vmatprep.subr.mxu0 0.0
  %75 = vmatpush1.msra.mxu0 0.0
  %76 = vmatprep.subr.mxu0 0.0
  %77 = vmatpush1.msra.mxu0 0.0
  %78 = vmatprep.subr.mxu0 0.0
  %79 = vmatpush1.msra.mxu0 0.0
  %80 = vmatprep.subr.mxu0 0.0
  %81 = vmatpush1.msra.mxu0 0.0
  %82 = vmatprep.subr.mxu0 0.0
  %83 = vmatpush1.msra.mxu0 0.0
  %84 = vmatprep.subr.mxu0 0.0
  %85 = vmatpush1.msra.mxu0 0.0
  %86 = vmatprep.subr.mxu0 0.0
  %87 = vmatpush1.msra.mxu0 0.0
  %88 = vmatprep.subr.mxu0 0.0
  %89 = vmatpush1.msra.mxu0 0.0
  %90 = vmatprep.subr.mxu0 0.0
  %91 = vmatpush1.msra.mxu0 0.0
  %92 = vmatprep.subr.mxu0 0.0
  %93 = vmatpush1.msra.mxu0 0.0
  %94 = vmatprep.subr.mxu0 0.0
  %95 = vmatpush1.msra.mxu0 0.0
  %96 = vmatprep.subr.mxu0 0.0
  %97 = vmatpush1.msra.mxu0 0.0
  %98 = vmatprep.subr.mxu0 0.0
  %99 = vmatpush1.msra.mxu0 0.0
  %100 = vmatprep.subr.mxu0 0.0
  %101 = vmatpush1.msra.mxu0 0.0
  %102 = vmatprep.subr.mxu0 0.0
  %103 = vmatpush1.msra.mxu0 0.0
  %104 = vmatprep.subr.mxu0 0.0
  %105 = vmatpush1.msra.mxu0 0.0
  %106 = vmatprep.subr.mxu0 0.0
  %107 = vmatpush1.msra.mxu0 0.0
  %108 = vmatprep.subr.mxu0 0.0
  %109 = vmatpush1.msra.mxu0 0.0
  %110 = vmatprep.subr.mxu0 0.0
  %111 = vmatpush1.msra.mxu0 0.0
  %112 = vmatprep.subr.mxu0 0.0
  %113 = vmatpush1.msra.mxu0 0.0
  %114 = vmatprep.subr.mxu0 0.0
  %115 = vmatpush1.msra.mxu0 0.0
  %116 = vmatprep.mubr.f32.mxu0 0.0
  %117 = vmatmul.mubr.f32.gmra.mrb[0].mxu0 %v41
  %v118 = vpop.f32.mrb[0].mxu0
  %v119 = vadd.f32 %v38, %v118
  %v120 = vpop.f32.mrb[0].mxu0
  %121 = vmatprep.mubr.f32.mxu0 0.0
  %122 = vmatmul.mubr.f32.gmra.mrb[0].mxu0 %v44
  %v123 = vpop.f32.mrb[0].mxu0
  %v124 = vadd.f32 %v38, %v123
  %v125 = vpop.f32.mrb[0].mxu0
  %126 = vmatprep.mubr.f32.mxu0 0.0
  %127 = vmatmul.mubr.f32.gmra.mrb[0].mxu0 %v47
  %v128 = vpop.f32.mrb[0].mxu0
  %v129 = vadd.f32 %v38, %v128
  %v130 = vpop.f32.mrb[0].mxu0
  %131 = vmatprep.mubr.f32.mxu0 0.0
  %132 = vmatmul.mubr.f32.gmra.mrb[0].mxu0 %v50
  %v133 = vpop.f32.mrb[0].mxu0
  %v134 = vadd.f32 %v38, %v133
  %v135 = vpop.f32.mrb[0].mxu0
  %136 = vdwg.mxu0
  %v137 = vld [vmem:[%s3 + $0x40] sm:$0xff]
  %v138 = vld [vmem:[%s3 + $0x48] sm:$0xff]
  %v139 = vld [vmem:[%s3 + $0x50] sm:$0xff]
  %v140 = vld [vmem:[%s3 + $0x58] sm:$0xff]
  %v141 = vadd.f32 %v119, %v137
  %v142 = vadd.f32 %v124, %v138
  %v143 = vadd.f32 %v129, %v139
  %v144 = vadd.f32 %v134, %v140
  %v145 = vld [vmem:[%s3 + $0x208] sm:$0xff]
  %v146 = vld [vmem:[%s3 + $0x210] sm:$0xff]
  %v147 = vld [vmem:[%s3 + $0x218] sm:$0xff]
  %v148 = vld [vmem:[%s3 + $0x220] sm:$0xff]
  %v149 = vld [vmem:[%s2 + $0x1] sm:$0x1]
  %v150 = vld [vmem:[%s2 + $0x2] sm:$0x1]
  %v151 = vld [vmem:[%s4] sm:$0xff]
  %v152 = vld [vmem:[%s4 + $0x8] sm:$0xff]
  %v153 = vld [vmem:[%s4 + $0x10] sm:$0xff]
  %v154 = vld [vmem:[%s4 + $0x18] sm:$0xff]
  %v155 = vld [vmem:[%s2 + $0x3] sm:$0x1]
  %v156 = vld [vmem:[%s3 + $0x60] sm:$0xff]
  %v157 = vld [vmem:[%s3 + $0x68] sm:$0xff]
  %v158 = vld [vmem:[%s3 + $0x70] sm:$0xff]
  %v159 = vld [vmem:[%s3 + $0x78] sm:$0xff]
  %v160 = vld [vmem:[%s2 + $0x4] sm:$0x1]
  %vm161 = vcmask 261120
  %v162 = vsel %vm161, %v141, 0.0
  %163 = vadd.xlane.f32.xlu0 %v162
  %v164 = vpop.xlane.xlu0 %163
  %v165 = vsel %vm161, %v142, 0.0
  %166 = vadd.xlane.f32.xlu0 %v165
  %v167 = vpop.xlane.xlu0 %166
  %v168 = vsel %vm161, %v143, 0.0
  %169 = vadd.xlane.f32.xlu0 %v168
  %v170 = vpop.xlane.xlu0 %169
  %v171 = vsel %vm161, %v144, 0.0
  %172 = vadd.xlane.f32.xlu0 %v171
  %v173 = vpop.xlane.xlu0 %172
  %v174 = vrcp.pop 32.0
  %v175 = vmul.f32 %v164, %v174
  %v176 = vmul.f32 %v167, %v174
  %v177 = vmul.f32 %v170, %v174
  %v178 = vmul.f32 %v173, %v174
  %v179 = vsub.f32 %v141, %v175
  %v180 = vsub.f32 %v142, %v176
  %v181 = vsub.f32 %v143, %v177
  %v182 = vsub.f32 %v144, %v178
  %v183 = vmul.f32 %v179, %v179
  %v184 = vmul.f32 %v180, %v180
  %v185 = vmul.f32 %v181, %v181
  %v186 = vmul.f32 %v182, %v182
  %v187 = vsel %vm161, %v183, 0.0
  %188 = vadd.xlane.f32.xlu0 %v187
  %v189 = vpop.xlane.xlu0 %188
  %v190 = vsel %vm161, %v184, 0.0
  %191 = vadd.xlane.f32.xlu0 %v190
  %v192 = vpop.xlane.xlu0 %191
  %v193 = vsel %vm161, %v185, 0.0
  %194 = vadd.xlane.f32.xlu0 %v193
  %v195 = vpop.xlane.xlu0 %194
  %v196 = vsel %vm161, %v186, 0.0
  %197 = vadd.xlane.f32.xlu0 %v196
  %v198 = vpop.xlane.xlu0 %197
  %v199 = vmul.f32 %v189, %v174
  %v200 = vmul.f32 %v192, %v174
  %v201 = vmul.f32 %v195, %v174
  %v202 = vmul.f32 %v198, %v174
  %v203 = vadd.f32 %v199, 1e-05
  %v204 = vadd.f32 %v200, 1e-05
  %v205 = vadd.f32 %v201, 1e-05
  %v206 = vadd.f32 %v202, 1e-05
  %v207 = vrsqrt.pop %v203
  %v208 = vrsqrt.pop %v204
  %v209 = vrsqrt.pop %v205
  %v210 = vrsqrt.pop %v206
  %v211 = vmul.f32 %v179, %v207
  %v212 = vmul.f32 %v180, %v208
  %v213 = vmul.f32 %v181, %v209
  %v214 = vmul.f32 %v182, %v210
  %v215 = vlaneseq
  %v216 = vshrl.u32 %v215, 7
  %v217 = vsub.s32 0, %v216
  %v218 = vrot.slane %v149, %v217
  %v219 = vmul.f32 %v211, %v218
  %v220 = vmul.f32 %v212, %v218
  %v221 = vmul.f32 %v213, %v218
  %v222 = vmul.f32 %v214, %v218
  %v223 = vlaneseq
  %v224 = vshrl.u32 %v223, 7
  %v225 = vsub.s32 0, %v224
  %v226 = vrot.slane %v150, %v225
  %v227 = vadd.f32 %v219, %v226
  %v228 = vadd.f32 %v220, %v226
  %v229 = vadd.f32 %v221, %v226
  %v230 = vadd.f32 %v222, %v226
  %v231 = vlaneseq
  %v232 = vshrl.u32 %v231, 7
  %v233 = vsub.s32 0, %v232
  %v234 = vrot.slane %v155, %v233
  %v236 = vsel %vm161, %v227, 0
  %v239 = vsel %vm161, %v228, 0
  %v242 = vsel %vm161, %v229, 0
  %v245 = vsel %vm161, %v230, 0
  %247 = vmatprep.subr.mxu0 0.0
  %248 = vmatpush1.msra.mxu0 %v151
  %249 = vmatprep.subr.mxu0 0.0
  %250 = vmatpush1.msra.mxu0 %v152
  %251 = vmatprep.subr.mxu0 0.0
  %252 = vmatpush1.msra.mxu0 %v153
  %253 = vmatprep.subr.mxu0 0.0
  %254 = vmatpush1.msra.mxu0 %v154
  %255 = vmatprep.subr.mxu0 0.0
  %256 = vmatpush1.msra.mxu0 0.0
  %257 = vmatprep.subr.mxu0 0.0
  %258 = vmatpush1.msra.mxu0 0.0
  %259 = vmatprep.subr.mxu0 0.0
  %260 = vmatpush1.msra.mxu0 0.0
  %261 = vmatprep.subr.mxu0 0.0
  %262 = vmatpush1.msra.mxu0 0.0
  %263 = vmatprep.subr.mxu0 0.0
  %264 = vmatpush1.msra.mxu0 0.0
  %265 = vmatprep.subr.mxu0 0.0
  %266 = vmatpush1.msra.mxu0 0.0
  %267 = vmatprep.subr.mxu0 0.0
  %268 = vmatpush1.msra.mxu0 0.0
  %269 = vmatprep.subr.mxu0 0.0
  %270 = vmatpush1.msra.mxu0 0.0
  %271 = vmatprep.subr.mxu0 0.0
  %272 = vmatpush1.msra.mxu0 0.0
  %273 = vmatprep.subr.mxu0 0.0
  %274 = vmatpush1.msra.mxu0 0.0
  %275 = vmatprep.subr.mxu0 0.0
  %276 = vmatpush1.msra.mxu0 0.0
  %277 = vmatprep.subr.mxu0 0.0
  %278 = vmatpush1.msra.mxu0 0.0
  %279 = vmatprep.subr.mxu0 0.0
  %280 = vmatpush1.msra.mxu0 0.0
  %281 = vmatprep.subr.mxu0 0.0
  %282 = vmatpush1.msra.mxu0 0.0
  %283 = vmatprep.subr.mxu0 0.0
  %284 = vmatpush1.msra.mxu0 0.0
  %285 = vmatprep.subr.mxu0 0.0
  %286 = vmatpush1.msra.mxu0 0.0
  %287 = vmatprep.subr.mxu0 0.0
  %288 = vmatpush1.msra.mxu0 0.0
  %289 = vmatprep.subr.mxu0 0.0
  %290 = vmatpush1.msra.mxu0 0.0
  %291 = vmatprep.subr.mxu0 0.0
  %292 = vmatpush1.msra.mxu0 0.0
  %293 = vmatprep.subr.mxu0 0.0
  %294 = vmatpush1.msra.mxu0 0.0
  %295 = vmatprep.subr.mxu0 0.0
  %296 = vmatpush1.msra.mxu0 0.0
  %297 = vmatprep.subr.mxu0 0.0
  %298 = vmatpush1.msra.mxu0 0.0
  %299 = vmatprep.subr.mxu0 0.0
  %300 = vmatpush1.msra.mxu0 0.0
  %301 = vmatprep.subr.mxu0 0.0
  %302 = vmatpush1.msra.mxu0 0.0
  %303 = vmatprep.subr.mxu0 0.0
  %304 = vmatpush1.msra.mxu0 0.0
  %305 = vmatprep.subr.mxu0 0.0
  %306 = vmatpush1.msra.mxu0 0.0
  %307 = vmatprep.subr.mxu0 0.0
  %308 = vmatpush1.msra.mxu0 0.0
  %309 = vmatprep.subr.mxu0 0.0
  %310 = vmatpush1.msra.mxu0 0.0
  %311 = vmatprep.mubr.f32.mxu0 0.0
  %312 = vmatmul.mubr.f32.gmra.mrb[0].mxu0 %v236
  %v313 = vpop.f32.mrb[0].mxu0
  %v314 = vadd.f32 %v234, %v313
  %v315 = vpop.f32.mrb[0].mxu0
  %316 = vmatprep.mubr.f32.mxu0 0.0
  %317 = vmatmul.mubr.f32.gmra.mrb[0].mxu0 %v239
  %v318 = vpop.f32.mrb[0].mxu0
  %v319 = vadd.f32 %v234, %v318
  %v320 = vpop.f32.mrb[0].mxu0
  %321 = vmatprep.mubr.f32.mxu0 0.0
  %322 = vmatmul.mubr.f32.gmra.mrb[0].mxu0 %v242
  %v323 = vpop.f32.mrb[0].mxu0
  %v324 = vadd.f32 %v234, %v323
  %v325 = vpop.f32.mrb[0].mxu0
  %326 = vmatprep.mubr.f32.mxu0 0.0
  %327 = vmatmul.mubr.f32.gmra.mrb[0].mxu0 %v245
  %v328 = vpop.f32.mrb[0].mxu0
  %v329 = vadd.f32 %v234, %v328
  %v330 = vpop.f32.mrb[0].mxu0
  %331 = vdwg.mxu0
  %v332 = vlaneseq
  %v333 = vshrl.u32 %v332, 7
  %v334 = vsub.s32 0, %v333
  %v335 = vrot.slane %v160, %v334
  %v336 = vadd.f32 %v335, 0.0
  %341 = vrot.lane.b32.xlu0 %v314, 96
  %v342 = vpop.permute.xlu0 %341
  %343 = vrot.lane.b32.xlu0 %v319, 96
  %v344 = vpop.permute.xlu0 %343
  %345 = vrot.lane.b32.xlu0 %v324, 96
  %v346 = vpop.permute.xlu0 %345
  %347 = vrot.lane.b32.xlu0 %v329, 96
  %v348 = vpop.permute.xlu0 %347
  %vm349 = vcmask 130048
  %v350 = vsel %vm349, %v314, 0
  %v352 = vsel %vm349, %v319, 0
  %v354 = vsel %vm349, %v324, 0
  %v356 = vsel %vm349, %v329, 0
  %v358 = vsel %vm349, %v342, 0
  %v360 = vsel %vm349, %v344, 0
  %v362 = vsel %vm349, %v346, 0
  %v364 = vsel %vm349, %v348, 0
  %366 = vmatprep.subr.mxu0 0.0
  %367 = vmatpush1.xpose.msra.mxu0 %v358
  %368 = vmatprep.subr.mxu0 0.0
  %369 = vmatpush1.xpose.msra.mxu0 %v360
  %370 = vmatprep.subr.mxu0 0.0
  %371 = vmatpush1.xpose.msra.mxu0 %v362
  %372 = vmatprep.subr.mxu0 0.0
  %373 = vmatpush1.xpose.msra.mxu0 %v364
  %374 = vmatprep.subr.mxu0 0.0
  %375 = vmatpush1.xpose.msra.mxu0 0.0
  %376 = vmatprep.subr.mxu0 0.0
  %377 = vmatpush1.xpose.msra.mxu0 0.0
  %378 = vmatprep.subr.mxu0 0.0
  %379 = vmatpush1.xpose.msra.mxu0 0.0
  %380 = vmatprep.subr.mxu0 0.0
  %381 = vmatpush1.xpose.msra.mxu0 0.0
  %382 = vmatprep.subr.mxu0 0.0
  %383 = vmatpush1.xpose.msra.mxu0 0.0
  %384 = vmatprep.subr.mxu0 0.0
  %385 = vmatpush1.xpose.msra.mxu0 0.0
  %386 = vmatprep.subr.mxu0 0.0
  %387 = vmatpush1.xpose.msra.mxu0 0.0
  %388 = vmatprep.subr.mxu0 0.0
  %389 = vmatpush1.xpose.msra.mxu0 0.0
  %390 = vmatprep.subr.mxu0 0.0
  %391 = vmatpush1.xpose.msra.mxu0 0.0
  %392 = vmatprep.subr.mxu0 0.0
  %393 = vmatpush1.xpose.msra.mxu0 0.0
  %394 = vmatprep.subr.mxu0 0.0
  %395 = vmatpush1.xpose.msra.mxu0 0.0
  %396 = vmatprep.subr.mxu0 0.0
  %397 = vmatpush1.xpose.msra.mxu0 0.0
  %398 = vmatprep.subr.mxu0 0.0
  %399 = vmatpush1.xpose.msra.mxu0 0.0
  %400 = vmatprep.subr.mxu0 0.0
  %401 = vmatpush1.xpose.msra.mxu0 0.0
  %402 = vmatprep.subr.mxu0 0.0
  %403 = vmatpush1.xpose.msra.mxu0 0.0
  %404 = vmatprep.subr.mxu0 0.0
  %405 = vmatpush1.xpose.msra.mxu0 0.0
  %406 = vmatprep.subr.mxu0 0.0
  %407 = vmatpush1.xpose.msra.mxu0 0.0
  %408 = vmatprep.subr.mxu0 0.0
  %409 = vmatpush1.xpose.msra.mxu0 0.0
  %410 = vmatprep.subr.mxu0 0.0
  %411 = vmatpush1.xpose.msra.mxu0 0.0
  %412 = vmatprep.subr.mxu0 0.0
  %413 = vmatpush1.xpose.msra.mxu0 0.0
  %414 = vmatprep.subr.mxu0 0.0
  %415 = vmatpush1.xpose.msra.mxu0 0.0
  %416 = vmatprep.subr.mxu0 0.0
  %417 = vmatpush1.xpose.msra.mxu0 0.0
  %418 = vmatprep.subr.mxu0 0.0
  %419 = vmatpush1.xpose.msra.mxu0 0.0
  %420 = vmatprep.subr.mxu0 0.0
  %421 = vmatpush1.xpose.msra.mxu0 0.0
  %422 = vmatprep.subr.mxu0 0.0
  %423 = vmatpush1.xpose.msra.mxu0 0.0
  %424 = vmatprep.subr.mxu0 0.0
  %425 = vmatpush1.xpose.msra.mxu0 0.0
  %426 = vmatprep.subr.mxu0 0.0
  %427 = vmatpush1.xpose.msra.mxu0 0.0
  %428 = vmatprep.subr.mxu0 0.0
  %429 = vmatpush1.xpose.msra.mxu0 0.0
  %430 = vmatprep.mubr.f32.mxu0 0.0
  %431 = vmatmul.mubr.f32.gmra.mrb[0].mxu0 %v350
  %v432 = vpop.f32.mrb[0].mxu0
  %v433 = vadd.f32 0.0, %v432
  %v434 = vpop.f32.mrb[0].mxu0
  %435 = vmatprep.mubr.f32.mxu0 0.0
  %436 = vmatmul.mubr.f32.gmra.mrb[0].mxu0 %v352
  %v437 = vpop.f32.mrb[0].mxu0
  %v438 = vadd.f32 0.0, %v437
  %v439 = vpop.f32.mrb[0].mxu0
  %440 = vmatprep.mubr.f32.mxu0 0.0
  %441 = vmatmul.mubr.f32.gmra.mrb[0].mxu0 %v354
  %v442 = vpop.f32.mrb[0].mxu0
  %v443 = vadd.f32 0.0, %v442
  %v444 = vpop.f32.mrb[0].mxu0
  %445 = vmatprep.mubr.f32.mxu0 0.0
  %446 = vmatmul.mubr.f32.gmra.mrb[0].mxu0 %v356
  %v447 = vpop.f32.mrb[0].mxu0
  %v448 = vadd.f32 0.0, %v447
  %v449 = vpop.f32.mrb[0].mxu0
  %450 = vdwg.mxu0
  %v451 = vmul.f32 %v433, 0.25
  %v452 = vmul.f32 %v438, 0.25
  %v453 = vmul.f32 %v443, 0.25
  %v454 = vmul.f32 %v448, 0.25
  %v455 = vadd.f32 %v451, %v145
  %v456 = vadd.f32 %v452, %v146
  %v457 = vadd.f32 %v453, %v147
  %v458 = vadd.f32 %v454, %v148
  %v459 = vsel %vm161, %v455, -inf
  %460 = vmax.xlane.f32.xlu0 %v459
  %v461 = vpop.xlane.xlu0 %460
  %v462 = vsel %vm161, %v456, -inf
  %463 = vmax.xlane.f32.xlu0 %v462
  %v464 = vpop.xlane.xlu0 %463
  %v465 = vsel %vm161, %v457, -inf
  %466 = vmax.xlane.f32.xlu0 %v465
  %v467 = vpop.xlane.xlu0 %466
  %v468 = vsel %vm161, %v458, -inf
  %469 = vmax.xlane.f32.xlu0 %v468
  %v470 = vpop.xlane.xlu0 %469
  %v471 = vsub.f32 %v455, %v461
  %v472 = vsub.f32 %v456, %v464
  %v473 = vsub.f32 %v457, %v467
  %v474 = vsub.f32 %v458, %v470
  %v475 = vmul.f32 %v471, 1.442695
  %v476 = vpow.pop %v475
  %v477 = vmul.f32 %v472, 1.442695
  %v478 = vpow.pop %v477
  %v479 = vmul.f32 %v473, 1.442695
  %v480 = vpow.pop %v479
  %v481 = vmul.f32 %v474, 1.442695
  %v482 = vpow.pop %v481
  %v483 = vsel %vm161, %v476, 0.0
  %484 = vadd.xlane.f32.xlu0 %v483
  %v485 = vpop.xlane.xlu0 %484
  %v486 = vsel %vm161, %v478, 0.0
  %487 = vadd.xlane.f32.xlu0 %v486
  %v488 = vpop.xlane.xlu0 %487
  %v489 = vsel %vm161, %v480, 0.0
  %490 = vadd.xlane.f32.xlu0 %v489
  %v491 = vpop.xlane.xlu0 %490
  %v492 = vsel %vm161, %v482, 0.0
  %493 = vadd.xlane.f32.xlu0 %v492
  %v494 = vpop.xlane.xlu0 %493
  %v495 = vrcp.pop %v485
  %v496 = vrcp.pop %v488
  %v497 = vrcp.pop %v491
  %v498 = vrcp.pop %v494
  %v499 = vmul.f32 %v476, %v495
  %v500 = vmul.f32 %v478, %v496
  %v501 = vmul.f32 %v480, %v497
  %v502 = vmul.f32 %v482, %v498
  %503 = vrot.lane.b32.xlu0 %v314, 64
  %v504 = vpop.permute.xlu0 %503
  %505 = vrot.lane.b32.xlu0 %v319, 64
  %v506 = vpop.permute.xlu0 %505
  %507 = vrot.lane.b32.xlu0 %v324, 64
  %v508 = vpop.permute.xlu0 %507
  %509 = vrot.lane.b32.xlu0 %v329, 64
  %v510 = vpop.permute.xlu0 %509
  %v516 = vsel %vm161, %v499, 0
  %v519 = vsel %vm161, %v500, 0
  %v522 = vsel %vm161, %v501, 0
  %v525 = vsel %vm161, %v502, 0
  %527 = vmatprep.subr.mxu0 0.0
  %528 = vmatpush1.msra.mxu0 %v504
  %529 = vmatprep.subr.mxu0 0.0
  %530 = vmatpush1.msra.mxu0 %v506
  %531 = vmatprep.subr.mxu0 0.0
  %532 = vmatpush1.msra.mxu0 %v508
  %533 = vmatprep.subr.mxu0 0.0
  %534 = vmatpush1.msra.mxu0 %v510
  %535 = vmatprep.subr.mxu0 0.0
  %536 = vmatpush1.msra.mxu0 0.0
  %537 = vmatprep.subr.mxu0 0.0
  %538 = vmatpush1.msra.mxu0 0.0
  %539 = vmatprep.subr.mxu0 0.0
  %540 = vmatpush1.msra.mxu0 0.0
  %541 = vmatprep.subr.mxu0 0.0
  %542 = vmatpush1.msra.mxu0 0.0
  %543 = vmatprep.subr.mxu0 0.0
  %544 = vmatpush1.msra.mxu0 0.0
  %545 = vmatprep.subr.mxu0 0.0
  %546 = vmatpush1.msra.mxu0 0.0
  %547 = vmatprep.subr.mxu0 0.0
  %548 = vmatpush1.msra.mxu0 0.0
  %549 = vmatprep.subr.mxu0 0.0
  %550 = vmatpush1.msra.mxu0 0.0
  %551 = vmatprep.subr.mxu0 0.0
  %552 = vmatpush1.msra.mxu0 0.0
  %553 = vmatprep.subr.mxu0 0.0
  %554 = vmatpush1.msra.mxu0 0.0
  %555 = vmatprep.subr.mxu0 0.0
  %556 = vmatpush1.msra.mxu0 0.0
  %557 = vmatprep.subr.mxu0 0.0
  %558 = vmatpush1.msra.mxu0 0.0
  %559 = vmatprep.subr.mxu0 0.0
  %560 = vmatpush1.msra.mxu0 0.0
  %561 = vmatprep.subr.mxu0 0.0
  %562 = vmatpush1.msra.mxu0 0.0
  %563 = vmatprep.subr.mxu0 0.0
  %564 = vmatpush1.msra.mxu0 0.0
  %565 = vmatprep.subr.mxu0 0.0
  %566 = vmatpush1.msra.mxu0 0.0
  %567 = vmatprep.subr.mxu0 0.0
  %568 = vmatpush1.msra.mxu0 0.0
  %569 = vmatprep.subr.mxu0 0.0
  %570 = vmatpush1.msra.mxu0 0.0
  %571 = vmatprep.subr.mxu0 0.0
  %572 = vmatpush1.msra.mxu0 0.0
  %573 = vmatprep.subr.mxu0 0.0
  %574 = vmatpush1.msra.mxu0 0.0
  %575 = vmatprep.subr.mxu0 0.0
  %576 = vmatpush1.msra.mxu0 0.0
  %577 = vmatprep.subr.mxu0 0.0
  %578 = vmatpush1.msra.mxu0 0.0
  %579 = vmatprep.subr.mxu0 0.0
  %580 = vmatpush1.msra.mxu0 0.0
  %581 = vmatprep.subr.mxu0 0.0
  %582 = vmatpush1.msra.mxu0 0.0
  %583 = vmatprep.subr.mxu0 0.0
  %584 = vmatpush1.msra.mxu0 0.0
  %585 = vmatprep.subr.mxu0 0.0
  %586 = vmatpush1.msra.mxu0 0.0
  %587 = vmatprep.subr.mxu0 0.0
  %588 = vmatpush1.msra.mxu0 0.0
  %589 = vmatprep.subr.mxu0 0.0
  %590 = vmatpush1.msra.mxu0 0.0
  %591 = vmatprep.mubr.f32.mxu0 0.0
  %592 = vmatmul.mubr.f32.gmra.mrb[0].mxu0 %v516
  %v593 = vpop.f32.mrb[0].mxu0
  %v594 = vadd.f32 0.0, %v593
  %v595 = vpop.f32.mrb[0].mxu0
  %596 = vmatprep.mubr.f32.mxu0 0.0
  %597 = vmatmul.mubr.f32.gmra.mrb[0].mxu0 %v519
  %v598 = vpop.f32.mrb[0].mxu0
  %v599 = vadd.f32 0.0, %v598
  %v600 = vpop.f32.mrb[0].mxu0
  %601 = vmatprep.mubr.f32.mxu0 0.0
  %602 = vmatmul.mubr.f32.gmra.mrb[0].mxu0 %v522
  %v603 = vpop.f32.mrb[0].mxu0
  %v604 = vadd.f32 0.0, %v603
  %v605 = vpop.f32.mrb[0].mxu0
  %606 = vmatprep.mubr.f32.mxu0 0.0
  %607 = vmatmul.mubr.f32.gmra.mrb[0].mxu0 %v525
  %v608 = vpop.f32.mrb[0].mxu0
  %v609 = vadd.f32 0.0, %v608
  %v610 = vpop.f32.mrb[0].mxu0
  %611 = vdwg.mxu0
  %v613 = vsel %vm349, %v594, 0
  %v616 = vsel %vm349, %v599, 0
  %v619 = vsel %vm349, %v604, 0
  %v622 = vsel %vm349, %v609, 0
  %624 = vmatprep.subr.mxu0 0.0
  %625 = vmatpush1.msra.mxu0 %v156
  %626 = vmatprep.subr.mxu0 0.0
  %627 = vmatpush1.msra.mxu0 %v157
  %628 = vmatprep.subr.mxu0 0.0
  %629 = vmatpush1.msra.mxu0 0.0
  %630 = vmatprep.subr.mxu0 0.0
  %631 = vmatpush1.msra.mxu0 0.0
  %632 = vmatprep.subr.mxu0 0.0
  %633 = vmatpush1.msra.mxu0 0.0
  %634 = vmatprep.subr.mxu0 0.0
  %635 = vmatpush1.msra.mxu0 0.0
  %636 = vmatprep.subr.mxu0 0.0
  %637 = vmatpush1.msra.mxu0 0.0
  %638 = vmatprep.subr.mxu0 0.0
  %639 = vmatpush1.msra.mxu0 0.0
  %640 = vmatprep.subr.mxu0 0.0
  %641 = vmatpush1.msra.mxu0 0.0
  %642 = vmatprep.subr.mxu0 0.0
  %643 = vmatpush1.msra.mxu0 0.0
  %644 = vmatprep.subr.mxu0 0.0
  %645 = vmatpush1.msra.mxu0 0.0
  %646 = vmatprep.subr.mxu0 0.0
  %647 = vmatpush1.msra.mxu0 0.0
  %648 = vmatprep.subr.mxu0 0.0
  %649 = vmatpush1.msra.mxu0 0.0
  %650 = vmatprep.subr.mxu0 0.0
  %651 = vmatpush1.msra.mxu0 0.0
  %652 = vmatprep.subr.mxu0 0.0
  %653 = vmatpush1.msra.mxu0 0.0
  %654 = vmatprep.subr.mxu0 0.0
  %655 = vmatpush1.msra.mxu0 0.0
  %656 = vmatprep.subr.mxu0 0.0
  %657 = vmatpush1.msra.mxu0 0.0
  %658 = vmatprep.subr.mxu0 0.0
  %659 = vmatpush1.msra.mxu0 0.0
  %660 = vmatprep.subr.mxu0 0.0
  %661 = vmatpush1.msra.mxu0 0.0
  %662 = vmatprep.subr.mxu0 0.0
  %663 = vmatpush1.msra.mxu0 0.0
  %664 = vmatprep.subr.mxu0 0.0
  %665 = vmatpush1.msra.mxu0 0.0
  %666 = vmatprep.subr.mxu0 0.0
  %667 = vmatpush1.msra.mxu0 0.0
  %668 = vmatprep.subr.mxu0 0.0
  %669 = vmatpush1.msra.mxu0 0.0
  %670 = vmatprep.subr.mxu0 0.0
  %671 = vmatpush1.msra.mxu0 0.0
  %672 = vmatprep.subr.mxu0 0.0
  %673 = vmatpush1.msra.mxu0 0.0
  %674 = vmatprep.subr.mxu0 0.0
  %675 = vmatpush1.msra.mxu0 0.0
  %676 = vmatprep.subr.mxu0 0.0
  %677 = vmatpush1.msra.mxu0 0.0
  %678 = vmatprep.subr.mxu0 0.0
  %679 = vmatpush1.msra.mxu0 0.0
  %680 = vmatprep.subr.mxu0 0.0
  %681 = vmatpush1.msra.mxu0 0.0
  %682 = vmatprep.subr.mxu0 0.0
  %683 = vmatpush1.msra.mxu0 0.0
  %684 = vmatprep.subr.mxu0 0.0
  %685 = vmatpush1.msra.mxu0 0.0
  %686 = vmatprep.subr.mxu0 0.0
  %687 = vmatpush1.msra.mxu0 0.0
  %688 = vmatprep.mubr.f32.mxu0 0.0
  %689 = vmatmul.mubr.f32.gmra.mrb[0].mxu0 %v613
  %v690 = vpop.f32.mrb[0].mxu0
  %v691 = vadd.f32 0.0, %v690
  %v692 = vpop.f32.mrb[0].mxu0
  %693 = vmatprep.mubr.f32.mxu0 0.0
  %694 = vmatmul.mubr.f32.gmra.mrb[0].mxu0 %v616
  %v695 = vpop.f32.mrb[0].mxu0
  %v696 = vadd.f32 0.0, %v695
  %v697 = vpop.f32.mrb[0].mxu0
  %698 = vmatprep.mubr.f32.mxu0 0.0
  %699 = vmatmul.mubr.f32.gmra.mrb[0].mxu0 %v619
  %v700 = vpop.f32.mrb[0].mxu0
  %v701 = vadd.f32 0.0, %v700
  %v702 = vpop.f32.mrb[0].mxu0
  %703 = vmatprep.mubr.f32.mxu0 0.0
  %704 = vmatmul.mubr.f32.gmra.mrb[0].mxu0 %v622
  %v705 = vpop.f32.mrb[0].mxu0
  %v706 = vadd.f32 0.0, %v705
  %v707 = vpop.f32.mrb[0].mxu0
  %708 = vdwg.mxu0
  %v709 = vadd.f32 %v336, %v691
  %v710 = vadd.f32 %v336, %v696
  %v711 = vadd.f32 %v336, %v701
  %v712 = vadd.f32 %v336, %v706
  %713 = vrot.lane.b32.xlu0 %v314, 112
  %v714 = vpop.permute.xlu0 %713
  %715 = vrot.lane.b32.xlu0 %v319, 112
  %v716 = vpop.permute.xlu0 %715
  %717 = vrot.lane.b32.xlu0 %v324, 112
  %v718 = vpop.permute.xlu0 %717
  %719 = vrot.lane.b32.xlu0 %v329, 112
  %v720 = vpop.permute.xlu0 %719
  %721 = vrot.lane.b32.xlu0 %v314, 80
  %v722 = vpop.permute.xlu0 %721
  %723 = vrot.lane.b32.xlu0 %v319, 80
  %v724 = vpop.permute.xlu0 %723
  %725 = vrot.lane.b32.xlu0 %v324, 80
  %v726 = vpop.permute.xlu0 %725
  %727 = vrot.lane.b32.xlu0 %v329, 80
  %v728 = vpop.permute.xlu0 %727
  %v729 = vsel %vm349, %v714, 0
  %v731 = vsel %vm349, %v716, 0
  %v733 = vsel %vm349, %v718, 0
  %v735 = vsel %vm349, %v720, 0
  %v737 = vsel %vm349, %v722, 0
  %v739 = vsel %vm349, %v724, 0
  %v741 = vsel %vm349, %v726, 0
  %v743 = vsel %vm349, %v728, 0
  %745 = vmatprep.subr.mxu0 0.0
  %746 = vmatpush1.xpose.msra.mxu0 %v737
  %747 = vmatprep.subr.mxu0 0.0
  %748 = vmatpush1.xpose.msra.mxu0 %v739
  %749 = vmatprep.subr.mxu0 0.0
  %750 = vmatpush1.xpose.msra.mxu0 %v741
  %751 = vmatprep.subr.mxu0 0.0
  %752 = vmatpush1.xpose.msra.mxu0 %v743
  %753 = vmatprep.subr.mxu0 0.0
  %754 = vmatpush1.xpose.msra.mxu0 0.0
  %755 = vmatprep.subr.mxu0 0.0
  %756 = vmatpush1.xpose.msra.mxu0 0.0
  %757 = vmatprep.subr.mxu0 0.0
  %758 = vmatpush1.xpose.msra.mxu0 0.0
  %759 = vmatprep.subr.mxu0 0.0
  %760 = vmatpush1.xpose.msra.mxu0 0.0
  %761 = vmatprep.subr.mxu0 0.0
  %762 = vmatpush1.xpose.msra.mxu0 0.0
  %763 = vmatprep.subr.mxu0 0.0
  %764 = vmatpush1.xpose.msra.mxu0 0.0
  %765 = vmatprep.subr.mxu0 0.0
  %766 = vmatpush1.xpose.msra.mxu0 0.0
  %767 = vmatprep.subr.mxu0 0.0
  %768 = vmatpush1.xpose.msra.mxu0 0.0
  %769 = vmatprep.subr.mxu0 0.0
  %770 = vmatpush1.xpose.msra.mxu0 0.0
  %771 = vmatprep.subr.mxu0 0.0
  %772 = vmatpush1.xpose.msra.mxu0 0.0
  %773 = vmatprep.subr.mxu0 0.0
  %774 = vmatpush1.xpose.msra.mxu0 0.0
  %775 = vmatprep.subr.mxu0 0.0
  %776 = vmatpush1.xpose.msra.mxu0 0.0
  %777 = vmatprep.subr.mxu0 0.0
  %778 = vmatpush1.xpose.msra.mxu0 0.0
  %779 = vmatprep.subr.mxu0 0.0
  %780 = vmatpush1.xpose.msra.mxu0 0.0
  %781 = vmatprep.subr.mxu0 0.0
  %782 = vmatpush1.xpose.msra.mxu0 0.0
  %783 = vmatprep.subr.mxu0 0.0
  %784 = vmatpush1.xpose.msra.mxu0 0.0
  %785 = vmatprep.subr.mxu0 0.0
  %786 = vmatpush1.xpose.msra.mxu0 0.0
  %787 = vmatprep.subr.mxu0 0.0
  %788 = vmatpush1.xpose.msra.mxu0 0.0
  %789 = vmatprep.subr.mxu0 0.0
  %790 = vmatpush1.xpose.msra.mxu0 0.0
  %791 = vmatprep.subr.mxu0 0.0
  %792 = vmatpush1.xpose.msra.mxu0 0.0
  %793 = vmatprep.subr.mxu0 0.0
  %794 = vmatpush1.xpose.msra.mxu0 0.0
  %795 = vmatprep.subr.mxu0 0.0
  %796 = vmatpush1.xpose.msra.mxu0 0.0
  %797 = vmatprep.subr.mxu0 0.0
  %798 = vmatpush1.xpose.msra.mxu0 0.0
  %799 = vmatprep.subr.mxu0 0.0
  %800 = vmatpush1.xpose.msra.mxu0 0.0
  %801 = vmatprep.subr.mxu0 0.0
  %802 = vmatpush1.xpose.msra.mxu0 0.0
  %803 = vmatprep.subr.mxu0 0.0
  %804 = vmatpush1.xpose.msra.mxu0 0.0
  %805 = vmatprep.subr.mxu0 0.0
  %806 = vmatpush1.xpose.msra.mxu0 0.0
  %807 = vmatprep.subr.mxu0 0.0
  %808 = vmatpush1.xpose.msra.mxu0 0.0
  %809 = vmatprep.mubr.f32.mxu0 0.0
  %810 = vmatmul.mubr.f32.gmra.mrb[0].mxu0 %v729
  %v811 = vpop.f32.mrb[0].mxu0
  %v812 = vadd.f32 0.0, %v811
  %v813 = vpop.f32.mrb[0].mxu0
  %814 = vmatprep.mubr.f32.mxu0 0.0
  %815 = vmatmul.mubr.f32.gmra.mrb[0].mxu0 %v731
  %v816 = vpop.f32.mrb[0].mxu0
  %v817 = vadd.f32 0.0, %v816
  %v818 = vpop.f32.mrb[0].mxu0
  %819 = vmatprep.mubr.f32.mxu0 0.0
  %820 = vmatmul.mubr.f32.gmra.mrb[0].mxu0 %v733
  %v821 = vpop.f32.mrb[0].mxu0
  %v822 = vadd.f32 0.0, %v821
  %v823 = vpop.f32.mrb[0].mxu0
  %824 = vmatprep.mubr.f32.mxu0 0.0
  %825 = vmatmul.mubr.f32.gmra.mrb[0].mxu0 %v735
  %v826 = vpop.f32.mrb[0].mxu0
  %v827 = vadd.f32 0.0, %v826
  %v828 = vpop.f32.mrb[0].mxu0
  %829 = vdwg.mxu0
  %v830 = vmul.f32 %v812, 0.25
  %v831 = vmul.f32 %v817, 0.25
  %v832 = vmul.f32 %v822, 0.25
  %v833 = vmul.f32 %v827, 0.25
  %v834 = vadd.f32 %v830, %v145
  %v835 = vadd.f32 %v831, %v146
  %v836 = vadd.f32 %v832, %v147
  %v837 = vadd.f32 %v833, %v148
  %v838 = vsel %vm161, %v834, -inf
  %839 = vmax.xlane.f32.xlu0 %v838
  %v840 = vpop.xlane.xlu0 %839
  %v841 = vsel %vm161, %v835, -inf
  %842 = vmax.xlane.f32.xlu0 %v841
  %v843 = vpop.xlane.xlu0 %842
  %v844 = vsel %vm161, %v836, -inf
  %845 = vmax.xlane.f32.xlu0 %v844
  %v846 = vpop.xlane.xlu0 %845
  %v847 = vsel %vm161, %v837, -inf
  %848 = vmax.xlane.f32.xlu0 %v847
  %v849 = vpop.xlane.xlu0 %848
  %v850 = vsub.f32 %v834, %v840
  %v851 = vsub.f32 %v835, %v843
  %v852 = vsub.f32 %v836, %v846
  %v853 = vsub.f32 %v837, %v849
  %v854 = vmul.f32 %v850, 1.442695
  %v855 = vpow.pop %v854
  %v856 = vmul.f32 %v851, 1.442695
  %v857 = vpow.pop %v856
  %v858 = vmul.f32 %v852, 1.442695
  %v859 = vpow.pop %v858
  %v860 = vmul.f32 %v853, 1.442695
  %v861 = vpow.pop %v860
  %v862 = vsel %vm161, %v855, 0.0
  %863 = vadd.xlane.f32.xlu0 %v862
  %v864 = vpop.xlane.xlu0 %863
  %v865 = vsel %vm161, %v857, 0.0
  %866 = vadd.xlane.f32.xlu0 %v865
  %v867 = vpop.xlane.xlu0 %866
  %v868 = vsel %vm161, %v859, 0.0
  %869 = vadd.xlane.f32.xlu0 %v868
  %v870 = vpop.xlane.xlu0 %869
  %v871 = vsel %vm161, %v861, 0.0
  %872 = vadd.xlane.f32.xlu0 %v871
  %v873 = vpop.xlane.xlu0 %872
  %v874 = vrcp.pop %v864
  %v875 = vrcp.pop %v867
  %v876 = vrcp.pop %v870
  %v877 = vrcp.pop %v873
  %v878 = vmul.f32 %v855, %v874
  %v879 = vmul.f32 %v857, %v875
  %v880 = vmul.f32 %v859, %v876
  %v881 = vmul.f32 %v861, %v877
  %882 = vrot.lane.b32.xlu0 %v314, 48
  %v883 = vpop.permute.xlu0 %882
  %884 = vrot.lane.b32.xlu0 %v319, 48
  %v885 = vpop.permute.xlu0 %884
  %886 = vrot.lane.b32.xlu0 %v324, 48
  %v887 = vpop.permute.xlu0 %886
  %888 = vrot.lane.b32.xlu0 %v329, 48
  %v889 = vpop.permute.xlu0 %888
  %v895 = vsel %vm161, %v878, 0
  %v898 = vsel %vm161, %v879, 0
  %v901 = vsel %vm161, %v880, 0
  %v904 = vsel %vm161, %v881, 0
  %906 = vmatprep.subr.mxu0 0.0
  %907 = vmatpush1.msra.mxu0 %v883
  %908 = vmatprep.subr.mxu0 0.0
  %909 = vmatpush1.msra.mxu0 %v885
  %910 = vmatprep.subr.mxu0 0.0
  %911 = vmatpush1.msra.mxu0 %v887
  %912 = vmatprep.subr.mxu0 0.0
  %913 = vmatpush1.msra.mxu0 %v889
  %914 = vmatprep.subr.mxu0 0.0
  %915 = vmatpush1.msra.mxu0 0.0
  %916 = vmatprep.subr.mxu0 0.0
  %917 = vmatpush1.msra.mxu0 0.0
  %918 = vmatprep.subr.mxu0 0.0
  %919 = vmatpush1.msra.mxu0 0.0
  %920 = vmatprep.subr.mxu0 0.0
  %921 = vmatpush1.msra.mxu0 0.0
  %922 = vmatprep.subr.mxu0 0.0
  %923 = vmatpush1.msra.mxu0 0.0
  %924 = vmatprep.subr.mxu0 0.0
  %925 = vmatpush1.msra.mxu0 0.0
  %926 = vmatprep.subr.mxu0 0.0
  %927 = vmatpush1.msra.mxu0 0.0
  %928 = vmatprep.subr.mxu0 0.0
  %929 = vmatpush1.msra.mxu0 0.0
  %930 = vmatprep.subr.mxu0 0.0
  %931 = vmatpush1.msra.mxu0 0.0
  %932 = vmatprep.subr.mxu0 0.0
  %933 = vmatpush1.msra.mxu0 0.0
  %934 = vmatprep.subr.mxu0 0.0
  %935 = vmatpush1.msra.mxu0 0.0
  %936 = vmatprep.subr.mxu0 0.0
  %937 = vmatpush1.msra.mxu0 0.0
  %938 = vmatprep.subr.mxu0 0.0
  %939 = vmatpush1.msra.mxu0 0.0
  %940 = vmatprep.subr.mxu0 0.0
  %941 = vmatpush1.msra.mxu0 0.0
  %942 = vmatprep.subr.mxu0 0.0
  %943 = vmatpush1.msra.mxu0 0.0
  %944 = vmatprep.subr.mxu0 0.0
  %945 = vmatpush1.msra.mxu0 0.0
  %946 = vmatprep.subr.mxu0 0.0
  %947 = vmatpush1.msra.mxu0 0.0
  %948 = vmatprep.subr.mxu0 0.0
  %949 = vmatpush1.msra.mxu0 0.0
  %950 = vmatprep.subr.mxu0 0.0
  %951 = vmatpush1.msra.mxu0 0.0
  %952 = vmatprep.subr.mxu0 0.0
  %953 = vmatpush1.msra.mxu0 0.0
  %954 = vmatprep.subr.mxu0 0.0
  %955 = vmatpush1.msra.mxu0 0.0
  %956 = vmatprep.subr.mxu0 0.0
  %957 = vmatpush1.msra.mxu0 0.0
  %958 = vmatprep.subr.mxu0 0.0
  %959 = vmatpush1.msra.mxu0 0.0
  %960 = vmatprep.subr.mxu0 0.0
  %961 = vmatpush1.msra.mxu0 0.0
  %962 = vmatprep.subr.mxu0 0.0
  %963 = vmatpush1.msra.mxu0 0.0
  %964 = vmatprep.subr.mxu0 0.0
  %965 = vmatpush1.msra.mxu0 0.0
  %966 = vmatprep.subr.mxu0 0.0
  %967 = vmatpush1.msra.mxu0 0.0
  %968 = vmatprep.subr.mxu0 0.0
  %969 = vmatpush1.msra.mxu0 0.0
  %970 = vmatprep.mubr.f32.mxu0 0.0
  %971 = vmatmul.mubr.f32.gmra.mrb[0].mxu0 %v895
  %v972 = vpop.f32.mrb[0].mxu0
  %v973 = vadd.f32 0.0, %v972
  %v974 = vpop.f32.mrb[0].mxu0
  %975 = vmatprep.mubr.f32.mxu0 0.0
  %976 = vmatmul.mubr.f32.gmra.mrb[0].mxu0 %v898
  %v977 = vpop.f32.mrb[0].mxu0
  %v978 = vadd.f32 0.0, %v977
  %v979 = vpop.f32.mrb[0].mxu0
  %980 = vmatprep.mubr.f32.mxu0 0.0
  %981 = vmatmul.mubr.f32.gmra.mrb[0].mxu0 %v901
  %v982 = vpop.f32.mrb[0].mxu0
  %v983 = vadd.f32 0.0, %v982
  %v984 = vpop.f32.mrb[0].mxu0
  %985 = vmatprep.mubr.f32.mxu0 0.0
  %986 = vmatmul.mubr.f32.gmra.mrb[0].mxu0 %v904
  %v987 = vpop.f32.mrb[0].mxu0
  %v988 = vadd.f32 0.0, %v987
  %v989 = vpop.f32.mrb[0].mxu0
  %990 = vdwg.mxu0
  %v992 = vsel %vm349, %v973, 0
  %v995 = vsel %vm349, %v978, 0
  %v998 = vsel %vm349, %v983, 0
  %v1001 = vsel %vm349, %v988, 0
  %1003 = vmatprep.subr.mxu0 0.0
  %1004 = vmatpush1.msra.mxu0 %v158
  %1005 = vmatprep.subr.mxu0 0.0
  %1006 = vmatpush1.msra.mxu0 %v159
  %1007 = vmatprep.subr.mxu0 0.0
  %1008 = vmatpush1.msra.mxu0 0.0
  %1009 = vmatprep.subr.mxu0 0.0
  %1010 = vmatpush1.msra.mxu0 0.0
  %1011 = vmatprep.subr.mxu0 0.0
  %1012 = vmatpush1.msra.mxu0 0.0
  %1013 = vmatprep.subr.mxu0 0.0
  %1014 = vmatpush1.msra.mxu0 0.0
  %1015 = vmatprep.subr.mxu0 0.0
  %1016 = vmatpush1.msra.mxu0 0.0
  %1017 = vmatprep.subr.mxu0 0.0
  %1018 = vmatpush1.msra.mxu0 0.0
  %1019 = vmatprep.subr.mxu0 0.0
  %1020 = vmatpush1.msra.mxu0 0.0
  %1021 = vmatprep.subr.mxu0 0.0
  %1022 = vmatpush1.msra.mxu0 0.0
  %1023 = vmatprep.subr.mxu0 0.0
  %1024 = vmatpush1.msra.mxu0 0.0
  %1025 = vmatprep.subr.mxu0 0.0
  %1026 = vmatpush1.msra.mxu0 0.0
  %1027 = vmatprep.subr.mxu0 0.0
  %1028 = vmatpush1.msra.mxu0 0.0
  %1029 = vmatprep.subr.mxu0 0.0
  %1030 = vmatpush1.msra.mxu0 0.0
  %1031 = vmatprep.subr.mxu0 0.0
  %1032 = vmatpush1.msra.mxu0 0.0
  %1033 = vmatprep.subr.mxu0 0.0
  %1034 = vmatpush1.msra.mxu0 0.0
  %1035 = vmatprep.subr.mxu0 0.0
  %1036 = vmatpush1.msra.mxu0 0.0
  %1037 = vmatprep.subr.mxu0 0.0
  %1038 = vmatpush1.msra.mxu0 0.0
  %1039 = vmatprep.subr.mxu0 0.0
  %1040 = vmatpush1.msra.mxu0 0.0
  %1041 = vmatprep.subr.mxu0 0.0
  %1042 = vmatpush1.msra.mxu0 0.0
  %1043 = vmatprep.subr.mxu0 0.0
  %1044 = vmatpush1.msra.mxu0 0.0
  %1045 = vmatprep.subr.mxu0 0.0
  %1046 = vmatpush1.msra.mxu0 0.0
  %1047 = vmatprep.subr.mxu0 0.0
  %1048 = vmatpush1.msra.mxu0 0.0
  %1049 = vmatprep.subr.mxu0 0.0
  %1050 = vmatpush1.msra.mxu0 0.0
  %1051 = vmatprep.subr.mxu0 0.0
  %1052 = vmatpush1.msra.mxu0 0.0
  %1053 = vmatprep.subr.mxu0 0.0
  %1054 = vmatpush1.msra.mxu0 0.0
  %1055 = vmatprep.subr.mxu0 0.0
  %1056 = vmatpush1.msra.mxu0 0.0
  %1057 = vmatprep.subr.mxu0 0.0
  %1058 = vmatpush1.msra.mxu0 0.0
  %1059 = vmatprep.subr.mxu0 0.0
  %1060 = vmatpush1.msra.mxu0 0.0
  %1061 = vmatprep.subr.mxu0 0.0
  %1062 = vmatpush1.msra.mxu0 0.0
  %1063 = vmatprep.subr.mxu0 0.0
  %1064 = vmatpush1.msra.mxu0 0.0
  %1065 = vmatprep.subr.mxu0 0.0
  %1066 = vmatpush1.msra.mxu0 0.0
  %1067 = vmatprep.mubr.f32.mxu0 0.0
  %1068 = vmatmul.mubr.f32.gmra.mrb[0].mxu0 %v992
  %v1069 = vpop.f32.mrb[0].mxu0
  %v1070 = vadd.f32 0.0, %v1069
  %v1071 = vpop.f32.mrb[0].mxu0
  %1072 = vmatprep.mubr.f32.mxu0 0.0
  %1073 = vmatmul.mubr.f32.gmra.mrb[0].mxu0 %v995
  %v1074 = vpop.f32.mrb[0].mxu0
  %v1075 = vadd.f32 0.0, %v1074
  %v1076 = vpop.f32.mrb[0].mxu0
  %1077 = vmatprep.mubr.f32.mxu0 0.0
  %1078 = vmatmul.mubr.f32.gmra.mrb[0].mxu0 %v998
  %v1079 = vpop.f32.mrb[0].mxu0
  %v1080 = vadd.f32 0.0, %v1079
  %v1081 = vpop.f32.mrb[0].mxu0
  %1082 = vmatprep.mubr.f32.mxu0 0.0
  %1083 = vmatmul.mubr.f32.gmra.mrb[0].mxu0 %v1001
  %v1084 = vpop.f32.mrb[0].mxu0
  %v1085 = vadd.f32 0.0, %v1084
  %v1086 = vpop.f32.mrb[0].mxu0
  %1087 = vdwg.mxu0
  %v1088 = vadd.f32 %v709, %v1070
  %v1089 = vadd.f32 %v710, %v1075
  %v1090 = vadd.f32 %v711, %v1080
  %v1091 = vadd.f32 %v712, %v1085
  %v1092 = vadd.f32 %v141, %v1088
  %v1093 = vadd.f32 %v142, %v1089
  %v1094 = vadd.f32 %v143, %v1090
  %v1095 = vadd.f32 %v144, %v1091
  %v1096 = vld [vmem:[%s2 + $0x5] sm:$0x1]
  %v1097 = vld [vmem:[%s2 + $0x6] sm:$0x1]
  %v1098 = vld [vmem:[%s4 + $0x40] sm:$0xff]
  %v1099 = vld [vmem:[%s4 + $0x48] sm:$0xff]
  %v1100 = vld [vmem:[%s4 + $0x50] sm:$0xff]
  %v1101 = vld [vmem:[%s4 + $0x58] sm:$0xff]
  %v1102 = vld [vmem:[%s2 + $0x7] sm:$0x1]
  %v1103 = vld [vmem:[%s3 + $0x80] sm:$0xff]
  %v1104 = vld [vmem:[%s3 + $0x88] sm:$0xff]
  %v1105 = vld [vmem:[%s3 + $0x90] sm:$0xff]
  %v1106 = vld [vmem:[%s3 + $0x98] sm:$0xff]
  %v1107 = vld [vmem:[%s3 + $0xa0] sm:$0xff]
  %v1108 = vld [vmem:[%s3 + $0xa8] sm:$0xff]
  %v1109 = vld [vmem:[%s3 + $0xb0] sm:$0xff]
  %v1110 = vld [vmem:[%s3 + $0xb8] sm:$0xff]
  %v1111 = vld [vmem:[%s2 + $0x8] sm:$0x1]
  %v1112 = vsel %vm161, %v1092, 0.0
  %1113 = vadd.xlane.f32.xlu0 %v1112
  %v1114 = vpop.xlane.xlu0 %1113
  %v1115 = vsel %vm161, %v1093, 0.0
  %1116 = vadd.xlane.f32.xlu0 %v1115
  %v1117 = vpop.xlane.xlu0 %1116
  %v1118 = vsel %vm161, %v1094, 0.0
  %1119 = vadd.xlane.f32.xlu0 %v1118
  %v1120 = vpop.xlane.xlu0 %1119
  %v1121 = vsel %vm161, %v1095, 0.0
  %1122 = vadd.xlane.f32.xlu0 %v1121
  %v1123 = vpop.xlane.xlu0 %1122
  %v1124 = vmul.f32 %v1114, %v174
  %v1125 = vmul.f32 %v1117, %v174
  %v1126 = vmul.f32 %v1120, %v174
  %v1127 = vmul.f32 %v1123, %v174
  %v1128 = vsub.f32 %v1092, %v1124
  %v1129 = vsub.f32 %v1093, %v1125
  %v1130 = vsub.f32 %v1094, %v1126
  %v1131 = vsub.f32 %v1095, %v1127
  %v1132 = vmul.f32 %v1128, %v1128
  %v1133 = vmul.f32 %v1129, %v1129
  %v1134 = vmul.f32 %v1130, %v1130
  %v1135 = vmul.f32 %v1131, %v1131
  %v1136 = vsel %vm161, %v1132, 0.0
  %1137 = vadd.xlane.f32.xlu0 %v1136
  %v1138 = vpop.xlane.xlu0 %1137
  %v1139 = vsel %vm161, %v1133, 0.0
  %1140 = vadd.xlane.f32.xlu0 %v1139
  %v1141 = vpop.xlane.xlu0 %1140
  %v1142 = vsel %vm161, %v1134, 0.0
  %1143 = vadd.xlane.f32.xlu0 %v1142
  %v1144 = vpop.xlane.xlu0 %1143
  %v1145 = vsel %vm161, %v1135, 0.0
  %1146 = vadd.xlane.f32.xlu0 %v1145
  %v1147 = vpop.xlane.xlu0 %1146
  %v1148 = vmul.f32 %v1138, %v174
  %v1149 = vmul.f32 %v1141, %v174
  %v1150 = vmul.f32 %v1144, %v174
  %v1151 = vmul.f32 %v1147, %v174
  %v1152 = vadd.f32 %v1148, 1e-05
  %v1153 = vadd.f32 %v1149, 1e-05
  %v1154 = vadd.f32 %v1150, 1e-05
  %v1155 = vadd.f32 %v1151, 1e-05
  %v1156 = vrsqrt.pop %v1152
  %v1157 = vrsqrt.pop %v1153
  %v1158 = vrsqrt.pop %v1154
  %v1159 = vrsqrt.pop %v1155
  %v1160 = vmul.f32 %v1128, %v1156
  %v1161 = vmul.f32 %v1129, %v1157
  %v1162 = vmul.f32 %v1130, %v1158
  %v1163 = vmul.f32 %v1131, %v1159
  %v1164 = vlaneseq
  %v1165 = vshrl.u32 %v1164, 7
  %v1166 = vsub.s32 0, %v1165
  %v1167 = vrot.slane %v1096, %v1166
  %v1168 = vmul.f32 %v1160, %v1167
  %v1169 = vmul.f32 %v1161, %v1167
  %v1170 = vmul.f32 %v1162, %v1167
  %v1171 = vmul.f32 %v1163, %v1167
  %v1172 = vlaneseq
  %v1173 = vshrl.u32 %v1172, 7
  %v1174 = vsub.s32 0, %v1173
  %v1175 = vrot.slane %v1097, %v1174
  %v1176 = vadd.f32 %v1168, %v1175
  %v1177 = vadd.f32 %v1169, %v1175
  %v1178 = vadd.f32 %v1170, %v1175
  %v1179 = vadd.f32 %v1171, %v1175
  %v1180 = vlaneseq
  %v1181 = vshrl.u32 %v1180, 7
  %v1182 = vsub.s32 0, %v1181
  %v1183 = vrot.slane %v1102, %v1182
  %v1185 = vsel %vm161, %v1176, 0
  %v1188 = vsel %vm161, %v1177, 0
  %v1191 = vsel %vm161, %v1178, 0
  %v1194 = vsel %vm161, %v1179, 0
  %1196 = vmatprep.subr.mxu0 0.0
  %1197 = vmatpush1.msra.mxu0 %v1098
  %1198 = vmatprep.subr.mxu0 0.0
  %1199 = vmatpush1.msra.mxu0 %v1099
  %1200 = vmatprep.subr.mxu0 0.0
  %1201 = vmatpush1.msra.mxu0 %v1100
  %1202 = vmatprep.subr.mxu0 0.0
  %1203 = vmatpush1.msra.mxu0 %v1101
  %1204 = vmatprep.subr.mxu0 0.0
  %1205 = vmatpush1.msra.mxu0 0.0
  %1206 = vmatprep.subr.mxu0 0.0
  %1207 = vmatpush1.msra.mxu0 0.0
  %1208 = vmatprep.subr.mxu0 0.0
  %1209 = vmatpush1.msra.mxu0 0.0
  %1210 = vmatprep.subr.mxu0 0.0
  %1211 = vmatpush1.msra.mxu0 0.0
  %1212 = vmatprep.subr.mxu0 0.0
  %1213 = vmatpush1.msra.mxu0 0.0
  %1214 = vmatprep.subr.mxu0 0.0
  %1215 = vmatpush1.msra.mxu0 0.0
  %1216 = vmatprep.subr.mxu0 0.0
  %1217 = vmatpush1.msra.mxu0 0.0
  %1218 = vmatprep.subr.mxu0 0.0
  %1219 = vmatpush1.msra.mxu0 0.0
  %1220 = vmatprep.subr.mxu0 0.0
  %1221 = vmatpush1.msra.mxu0 0.0
  %1222 = vmatprep.subr.mxu0 0.0
  %1223 = vmatpush1.msra.mxu0 0.0
  %1224 = vmatprep.subr.mxu0 0.0
  %1225 = vmatpush1.msra.mxu0 0.0
  %1226 = vmatprep.subr.mxu0 0.0
  %1227 = vmatpush1.msra.mxu0 0.0
  %1228 = vmatprep.subr.mxu0 0.0
  %1229 = vmatpush1.msra.mxu0 0.0
  %1230 = vmatprep.subr.mxu0 0.0
  %1231 = vmatpush1.msra.mxu0 0.0
  %1232 = vmatprep.subr.mxu0 0.0
  %1233 = vmatpush1.msra.mxu0 0.0
  %1234 = vmatprep.subr.mxu0 0.0
  %1235 = vmatpush1.msra.mxu0 0.0
  %1236 = vmatprep.subr.mxu0 0.0
  %1237 = vmatpush1.msra.mxu0 0.0
  %1238 = vmatprep.subr.mxu0 0.0
  %1239 = vmatpush1.msra.mxu0 0.0
  %1240 = vmatprep.subr.mxu0 0.0
  %1241 = vmatpush1.msra.mxu0 0.0
  %1242 = vmatprep.subr.mxu0 0.0
  %1243 = vmatpush1.msra.mxu0 0.0
  %1244 = vmatprep.subr.mxu0 0.0
  %1245 = vmatpush1.msra.mxu0 0.0
  %1246 = vmatprep.subr.mxu0 0.0
  %1247 = vmatpush1.msra.mxu0 0.0
  %1248 = vmatprep.subr.mxu0 0.0
  %1249 = vmatpush1.msra.mxu0 0.0
  %1250 = vmatprep.subr.mxu0 0.0
  %1251 = vmatpush1.msra.mxu0 0.0
  %1252 = vmatprep.subr.mxu0 0.0
  %1253 = vmatpush1.msra.mxu0 0.0
  %1254 = vmatprep.subr.mxu0 0.0
  %1255 = vmatpush1.msra.mxu0 0.0
  %1256 = vmatprep.subr.mxu0 0.0
  %1257 = vmatpush1.msra.mxu0 0.0
  %1258 = vmatprep.subr.mxu0 0.0
  %1259 = vmatpush1.msra.mxu0 0.0
  %1260 = vmatprep.mubr.f32.mxu0 0.0
  %1261 = vmatmul.mubr.f32.gmra.mrb[0].mxu0 %v1185
  %v1262 = vpop.f32.mrb[0].mxu0
  %v1263 = vadd.f32 %v1183, %v1262
  %v1264 = vpop.f32.mrb[0].mxu0
  %1265 = vmatprep.mubr.f32.mxu0 0.0
  %1266 = vmatmul.mubr.f32.gmra.mrb[0].mxu0 %v1188
  %v1267 = vpop.f32.mrb[0].mxu0
  %v1268 = vadd.f32 %v1183, %v1267
  %v1269 = vpop.f32.mrb[0].mxu0
  %1270 = vmatprep.mubr.f32.mxu0 0.0
  %1271 = vmatmul.mubr.f32.gmra.mrb[0].mxu0 %v1191
  %v1272 = vpop.f32.mrb[0].mxu0
  %v1273 = vadd.f32 %v1183, %v1272
  %v1274 = vpop.f32.mrb[0].mxu0
  %1275 = vmatprep.mubr.f32.mxu0 0.0
  %1276 = vmatmul.mubr.f32.gmra.mrb[0].mxu0 %v1194
  %v1277 = vpop.f32.mrb[0].mxu0
  %v1278 = vadd.f32 %v1183, %v1277
  %v1279 = vpop.f32.mrb[0].mxu0
  %1280 = vdwg.mxu0
  %v1281 = vmul.f32 %v1263, %v1263
  %v1282 = vmul.f32 %v1268, %v1268
  %v1283 = vmul.f32 %v1273, %v1273
  %v1284 = vmul.f32 %v1278, %v1278
  %v1285 = vmul.f32 %v1263, %v1281
  %v1286 = vmul.f32 %v1268, %v1282
  %v1287 = vmul.f32 %v1273, %v1283
  %v1288 = vmul.f32 %v1278, %v1284
  %v1289 = vmul.f32 %v1285, 0.044715
  %v1290 = vmul.f32 %v1286, 0.044715
  %v1291 = vmul.f32 %v1287, 0.044715
  %v1292 = vmul.f32 %v1288, 0.044715
  %v1293 = vadd.f32 %v1263, %v1289
  %v1294 = vadd.f32 %v1268, %v1290
  %v1295 = vadd.f32 %v1273, %v1291
  %v1296 = vadd.f32 %v1278, %v1292
  %v1297 = vmul.f32 %v1293, 0.7978846
  %v1298 = vmul.f32 %v1294, 0.7978846
  %v1299 = vmul.f32 %v1295, 0.7978846
  %v1300 = vmul.f32 %v1296, 0.7978846
  %v1301 = vtanh.pop %v1297
  %v1302 = vtanh.pop %v1298
  %v1303 = vtanh.pop %v1299
  %v1304 = vtanh.pop %v1300
  %v1305 = vadd.f32 %v1301, 1.0
  %v1306 = vadd.f32 %v1302, 1.0
  %v1307 = vadd.f32 %v1303, 1.0
  %v1308 = vadd.f32 %v1304, 1.0
  %v1309 = vmul.f32 %v1305, 0.5
  %v1310 = vmul.f32 %v1306, 0.5
  %v1311 = vmul.f32 %v1307, 0.5
  %v1312 = vmul.f32 %v1308, 0.5
  %v1313 = vmul.f32 %v1263, %v1309
  %v1314 = vmul.f32 %v1268, %v1310
  %v1315 = vmul.f32 %v1273, %v1311
  %v1316 = vmul.f32 %v1278, %v1312
  %v1317 = vlaneseq
  %v1318 = vshrl.u32 %v1317, 7
  %v1319 = vsub.s32 0, %v1318
  %v1320 = vrot.slane %v1111, %v1319
  %v1322 = vsel %vm39, %v1313, 0
  %v1325 = vsel %vm39, %v1314, 0
  %v1328 = vsel %vm39, %v1315, 0
  %v1331 = vsel %vm39, %v1316, 0
  %1333 = vmatprep.subr.mxu0 0.0
  %1334 = vmatpush1.msra.mxu0 %v1103
  %1335 = vmatprep.subr.mxu0 0.0
  %1336 = vmatpush1.msra.mxu0 %v1104
  %1337 = vmatprep.subr.mxu0 0.0
  %1338 = vmatpush1.msra.mxu0 %v1105
  %1339 = vmatprep.subr.mxu0 0.0
  %1340 = vmatpush1.msra.mxu0 %v1106
  %1341 = vmatprep.subr.mxu0 0.0
  %1342 = vmatpush1.msra.mxu0 %v1107
  %1343 = vmatprep.subr.mxu0 0.0
  %1344 = vmatpush1.msra.mxu0 %v1108
  %1345 = vmatprep.subr.mxu0 0.0
  %1346 = vmatpush1.msra.mxu0 %v1109
  %1347 = vmatprep.subr.mxu0 0.0
  %1348 = vmatpush1.msra.mxu0 %v1110
  %1349 = vmatprep.subr.mxu0 0.0
  %1350 = vmatpush1.msra.mxu0 0.0
  %1351 = vmatprep.subr.mxu0 0.0
  %1352 = vmatpush1.msra.mxu0 0.0
  %1353 = vmatprep.subr.mxu0 0.0
  %1354 = vmatpush1.msra.mxu0 0.0
  %1355 = vmatprep.subr.mxu0 0.0
  %1356 = vmatpush1.msra.mxu0 0.0
  %1357 = vmatprep.subr.mxu0 0.0
  %1358 = vmatpush1.msra.mxu0 0.0
  %1359 = vmatprep.subr.mxu0 0.0
  %1360 = vmatpush1.msra.mxu0 0.0
  %1361 = vmatprep.subr.mxu0 0.0
  %1362 = vmatpush1.msra.mxu0 0.0
  %1363 = vmatprep.subr.mxu0 0.0
  %1364 = vmatpush1.msra.mxu0 0.0
  %1365 = vmatprep.subr.mxu0 0.0
  %1366 = vmatpush1.msra.mxu0 0.0
  %1367 = vmatprep.subr.mxu0 0.0
  %1368 = vmatpush1.msra.mxu0 0.0
  %1369 = vmatprep.subr.mxu0 0.0
  %1370 = vmatpush1.msra.mxu0 0.0
  %1371 = vmatprep.subr.mxu0 0.0
  %1372 = vmatpush1.msra.mxu0 0.0
  %1373 = vmatprep.subr.mxu0 0.0
  %1374 = vmatpush1.msra.mxu0 0.0
  %1375 = vmatprep.subr.mxu0 0.0
  %1376 = vmatpush1.msra.mxu0 0.0
  %1377 = vmatprep.subr.mxu0 0.0
  %1378 = vmatpush1.msra.mxu0 0.0
  %1379 = vmatprep.subr.mxu0 0.0
  %1380 = vmatpush1.msra.mxu0 0.0
  %1381 = vmatprep.subr.mxu0 0.0
  %1382 = vmatpush1.msra.mxu0 0.0
  %1383 = vmatprep.subr.mxu0 0.0
  %1384 = vmatpush1.msra.mxu0 0.0
  %1385 = vmatprep.subr.mxu0 0.0
  %1386 = vmatpush1.msra.mxu0 0.0
  %1387 = vmatprep.subr.mxu0 0.0
  %1388 = vmatpush1.msra.mxu0 0.0
  %1389 = vmatprep.subr.mxu0 0.0
  %1390 = vmatpush1.msra.mxu0 0.0
  %1391 = vmatprep.subr.mxu0 0.0
  %1392 = vmatpush1.msra.mxu0 0.0
  %1393 = vmatprep.subr.mxu0 0.0
  %1394 = vmatpush1.msra.mxu0 0.0
  %1395 = vmatprep.subr.mxu0 0.0
  %1396 = vmatpush1.msra.mxu0 0.0
  %1397 = vmatprep.mubr.f32.mxu0 0.0
  %1398 = vmatmul.mubr.f32.gmra.mrb[0].mxu0 %v1322
  %v1399 = vpop.f32.mrb[0].mxu0
  %v1400 = vadd.f32 %v1320, %v1399
  %v1401 = vpop.f32.mrb[0].mxu0
  %1402 = vmatprep.mubr.f32.mxu0 0.0
  %1403 = vmatmul.mubr.f32.gmra.mrb[0].mxu0 %v1325
  %v1404 = vpop.f32.mrb[0].mxu0
  %v1405 = vadd.f32 %v1320, %v1404
  %v1406 = vpop.f32.mrb[0].mxu0
  %1407 = vmatprep.mubr.f32.mxu0 0.0
  %1408 = vmatmul.mubr.f32.gmra.mrb[0].mxu0 %v1328
  %v1409 = vpop.f32.mrb[0].mxu0
  %v1410 = vadd.f32 %v1320, %v1409
  %v1411 = vpop.f32.mrb[0].mxu0
  %1412 = vmatprep.mubr.f32.mxu0 0.0
  %1413 = vmatmul.mubr.f32.gmra.mrb[0].mxu0 %v1331
  %v1414 = vpop.f32.mrb[0].mxu0
  %v1415 = vadd.f32 %v1320, %v1414
  %v1416 = vpop.f32.mrb[0].mxu0
  %1417 = vdwg.mxu0
  %v1418 = vadd.f32 %v1092, %v1400
  %v1419 = vadd.f32 %v1093, %v1405
  %v1420 = vadd.f32 %v1094, %v1410
  %v1421 = vadd.f32 %v1095, %v1415
  %v1422 = vld [vmem:[%s3 + $0xc0] sm:$0xff]
  %v1423 = vld [vmem:[%s3 + $0xc8] sm:$0xff]
  %v1424 = vld [vmem:[%s2 + $0x9] sm:$0x1]
  %v1425 = vld [vmem:[%s2 + $0xa] sm:$0x1]
  %v1426 = vsel %vm161, %v1422, 0.0
  %1427 = vadd.xlane.f32.xlu0 %v1426
  %v1428 = vpop.xlane.xlu0 %1427
  %v1429 = vsel %vm161, %v1423, 0.0
  %1430 = vadd.xlane.f32.xlu0 %v1429
  %v1431 = vpop.xlane.xlu0 %1430
  %v1432 = vmul.f32 %v1428, %v174
  %v1433 = vmul.f32 %v1431, %v174
  %v1434 = vsub.f32 %v1422, %v1432
  %v1435 = vsub.f32 %v1423, %v1433
  %v1436 = vmul.f32 %v1434, %v1434
  %v1437 = vmul.f32 %v1435, %v1435
  %v1438 = vsel %vm161, %v1436, 0.0
  %1439 = vadd.xlane.f32.xlu0 %v1438
  %v1440 = vpop.xlane.xlu0 %1439
  %v1441 = vsel %vm161, %v1437, 0.0
  %1442 = vadd.xlane.f32.xlu0 %v1441
  %v1443 = vpop.xlane.xlu0 %1442
  %v1444 = vmul.f32 %v1440, %v174
  %v1445 = vmul.f32 %v1443, %v174
  %v1446 = vadd.f32 %v1444, 1e-05
  %v1447 = vadd.f32 %v1445, 1e-05
  %v1448 = vrsqrt.pop %v1446
  %v1449 = vrsqrt.pop %v1447
  %v1450 = vmul.f32 %v1434, %v1448
  %v1451 = vmul.f32 %v1435, %v1449
  %v1452 = vlaneseq
  %v1453 = vshrl.u32 %v1452, 7
  %v1454 = vsub.s32 0, %v1453
  %v1455 = vrot.slane %v1424, %v1454
  %v1456 = vmul.f32 %v1450, %v1455
  %v1457 = vmul.f32 %v1451, %v1455
  %v1458 = vlaneseq
  %v1459 = vshrl.u32 %v1458, 7
  %v1460 = vsub.s32 0, %v1459
  %v1461 = vrot.slane %v1425, %v1460
  %v1462 = vadd.f32 %v1456, %v1461
  %v1463 = vadd.f32 %v1457, %v1461
  %v1464 = vld [vmem:[%s2 + $0xb] sm:$0x1]
  %v1465 = vld [vmem:[%s2 + $0xc] sm:$0x1]
  %v1466 = vsel %vm161, %v1418, 0.0
  %1467 = vadd.xlane.f32.xlu0 %v1466
  %v1468 = vpop.xlane.xlu0 %1467
  %v1469 = vsel %vm161, %v1419, 0.0
  %1470 = vadd.xlane.f32.xlu0 %v1469
  %v1471 = vpop.xlane.xlu0 %1470
  %v1472 = vsel %vm161, %v1420, 0.0
  %1473 = vadd.xlane.f32.xlu0 %v1472
  %v1474 = vpop.xlane.xlu0 %1473
  %v1475 = vsel %vm161, %v1421, 0.0
  %1476 = vadd.xlane.f32.xlu0 %v1475
  %v1477 = vpop.xlane.xlu0 %1476
  %v1478 = vmul.f32 %v1468, %v174
  %v1479 = vmul.f32 %v1471, %v174
  %v1480 = vmul.f32 %v1474, %v174
  %v1481 = vmul.f32 %v1477, %v174
  %v1482 = vsub.f32 %v1418, %v1478
  %v1483 = vsub.f32 %v1419, %v1479
  %v1484 = vsub.f32 %v1420, %v1480
  %v1485 = vsub.f32 %v1421, %v1481
  %v1486 = vmul.f32 %v1482, %v1482
  %v1487 = vmul.f32 %v1483, %v1483
  %v1488 = vmul.f32 %v1484, %v1484
  %v1489 = vmul.f32 %v1485, %v1485
  %v1490 = vsel %vm161, %v1486, 0.0
  %1491 = vadd.xlane.f32.xlu0 %v1490
  %v1492 = vpop.xlane.xlu0 %1491
  %v1493 = vsel %vm161, %v1487, 0.0
  %1494 = vadd.xlane.f32.xlu0 %v1493
  %v1495 = vpop.xlane.xlu0 %1494
  %v1496 = vsel %vm161, %v1488, 0.0
  %1497 = vadd.xlane.f32.xlu0 %v1496
  %v1498 = vpop.xlane.xlu0 %1497
  %v1499 = vsel %vm161, %v1489, 0.0
  %1500 = vadd.xlane.f32.xlu0 %v1499
  %v1501 = vpop.xlane.xlu0 %1500
  %v1502 = vmul.f32 %v1492, %v174
  %v1503 = vmul.f32 %v1495, %v174
  %v1504 = vmul.f32 %v1498, %v174
  %v1505 = vmul.f32 %v1501, %v174
  %v1506 = vadd.f32 %v1502, 1e-05
  %v1507 = vadd.f32 %v1503, 1e-05
  %v1508 = vadd.f32 %v1504, 1e-05
  %v1509 = vadd.f32 %v1505, 1e-05
  %v1510 = vrsqrt.pop %v1506
  %v1511 = vrsqrt.pop %v1507
  %v1512 = vrsqrt.pop %v1508
  %v1513 = vrsqrt.pop %v1509
  %v1514 = vmul.f32 %v1482, %v1510
  %v1515 = vmul.f32 %v1483, %v1511
  %v1516 = vmul.f32 %v1484, %v1512
  %v1517 = vmul.f32 %v1485, %v1513
  %v1518 = vlaneseq
  %v1519 = vshrl.u32 %v1518, 7
  %v1520 = vsub.s32 0, %v1519
  %v1521 = vrot.slane %v1464, %v1520
  %v1522 = vmul.f32 %v1514, %v1521
  %v1523 = vmul.f32 %v1515, %v1521
  %v1524 = vmul.f32 %v1516, %v1521
  %v1525 = vmul.f32 %v1517, %v1521
  %v1526 = vlaneseq
  %v1527 = vshrl.u32 %v1526, 7
  %v1528 = vsub.s32 0, %v1527
  %v1529 = vrot.slane %v1465, %v1528
  %v1530 = vadd.f32 %v1522, %v1529
  %v1531 = vadd.f32 %v1523, %v1529
  %v1532 = vadd.f32 %v1524, %v1529
  %v1533 = vadd.f32 %v1525, %v1529
  %v1534 = vld [vmem:[%s3 + $0xd0] sm:$0xff]
  %v1535 = vld [vmem:[%s3 + $0xd8] sm:$0xff]
  %v1536 = vld [vmem:[%s3 + $0xe0] sm:$0xff]
  %v1537 = vld [vmem:[%s3 + $0xe8] sm:$0xff]
  %v1538 = vld [vmem:[%s2 + $0xd] sm:$0x1]
  %v1539 = vlaneseq
  %v1540 = vshrl.u32 %v1539, 7
  %v1541 = vsub.s32 0, %v1540
  %v1542 = vrot.slane %v1538, %v1541
  %v1544 = vsel %vm161, %v1462, 0
  %v1547 = vsel %vm161, %v1463, 0
  %1549 = vmatprep.subr.mxu0 0.0
  %1550 = vmatpush1.msra.mxu0 %v1534
  %1551 = vmatprep.subr.mxu0 0.0
  %1552 = vmatpush1.msra.mxu0 %v1535
  %1553 = vmatprep.subr.mxu0 0.0
  %1554 = vmatpush1.msra.mxu0 %v1536
  %1555 = vmatprep.subr.mxu0 0.0
  %1556 = vmatpush1.msra.mxu0 %v1537
  %1557 = vmatprep.subr.mxu0 0.0
  %1558 = vmatpush1.msra.mxu0 0.0
  %1559 = vmatprep.subr.mxu0 0.0
  %1560 = vmatpush1.msra.mxu0 0.0
  %1561 = vmatprep.subr.mxu0 0.0
  %1562 = vmatpush1.msra.mxu0 0.0
  %1563 = vmatprep.subr.mxu0 0.0
  %1564 = vmatpush1.msra.mxu0 0.0
  %1565 = vmatprep.subr.mxu0 0.0
  %1566 = vmatpush1.msra.mxu0 0.0
  %1567 = vmatprep.subr.mxu0 0.0
  %1568 = vmatpush1.msra.mxu0 0.0
  %1569 = vmatprep.subr.mxu0 0.0
  %1570 = vmatpush1.msra.mxu0 0.0
  %1571 = vmatprep.subr.mxu0 0.0
  %1572 = vmatpush1.msra.mxu0 0.0
  %1573 = vmatprep.subr.mxu0 0.0
  %1574 = vmatpush1.msra.mxu0 0.0
  %1575 = vmatprep.subr.mxu0 0.0
  %1576 = vmatpush1.msra.mxu0 0.0
  %1577 = vmatprep.subr.mxu0 0.0
  %1578 = vmatpush1.msra.mxu0 0.0
  %1579 = vmatprep.subr.mxu0 0.0
  %1580 = vmatpush1.msra.mxu0 0.0
  %1581 = vmatprep.subr.mxu0 0.0
  %1582 = vmatpush1.msra.mxu0 0.0
  %1583 = vmatprep.subr.mxu0 0.0
  %1584 = vmatpush1.msra.mxu0 0.0
  %1585 = vmatprep.subr.mxu0 0.0
  %1586 = vmatpush1.msra.mxu0 0.0
  %1587 = vmatprep.subr.mxu0 0.0
  %1588 = vmatpush1.msra.mxu0 0.0
  %1589 = vmatprep.subr.mxu0 0.0
  %1590 = vmatpush1.msra.mxu0 0.0
  %1591 = vmatprep.subr.mxu0 0.0
  %1592 = vmatpush1.msra.mxu0 0.0
  %1593 = vmatprep.subr.mxu0 0.0
  %1594 = vmatpush1.msra.mxu0 0.0
  %1595 = vmatprep.subr.mxu0 0.0
  %1596 = vmatpush1.msra.mxu0 0.0
  %1597 = vmatprep.subr.mxu0 0.0
  %1598 = vmatpush1.msra.mxu0 0.0
  %1599 = vmatprep.subr.mxu0 0.0
  %1600 = vmatpush1.msra.mxu0 0.0
  %1601 = vmatprep.subr.mxu0 0.0
  %1602 = vmatpush1.msra.mxu0 0.0
  %1603 = vmatprep.subr.mxu0 0.0
  %1604 = vmatpush1.msra.mxu0 0.0
  %1605 = vmatprep.subr.mxu0 0.0
  %1606 = vmatpush1.msra.mxu0 0.0
  %1607 = vmatprep.subr.mxu0 0.0
  %1608 = vmatpush1.msra.mxu0 0.0
  %1609 = vmatprep.subr.mxu0 0.0
  %1610 = vmatpush1.msra.mxu0 0.0
  %1611 = vmatprep.subr.mxu0 0.0
  %1612 = vmatpush1.msra.mxu0 0.0
  %1613 = vmatprep.mubr.f32.mxu0 0.0
  %1614 = vmatmul.mubr.f32.gmra.mrb[0].mxu0 %v1544
  %v1615 = vpop.f32.mrb[0].mxu0
  %v1616 = vadd.f32 %v1542, %v1615
  %v1617 = vpop.f32.mrb[0].mxu0
  %1618 = vmatprep.mubr.f32.mxu0 0.0
  %1619 = vmatmul.mubr.f32.gmra.mrb[0].mxu0 %v1547
  %v1620 = vpop.f32.mrb[0].mxu0
  %v1621 = vadd.f32 %v1542, %v1620
  %v1622 = vpop.f32.mrb[0].mxu0
  %1623 = vdwg.mxu0
  %v1624 = vld [vmem:[%s4 + $0x80] sm:$0xff]
  %v1625 = vld [vmem:[%s4 + $0x88] sm:$0xff]
  %v1626 = vld [vmem:[%s4 + $0x90] sm:$0xff]
  %v1627 = vld [vmem:[%s4 + $0x98] sm:$0xff]
  %v1628 = vld [vmem:[%s2 + $0xe] sm:$0x1]
  %v1629 = vlaneseq
  %v1630 = vshrl.u32 %v1629, 7
  %v1631 = vsub.s32 0, %v1630
  %v1632 = vrot.slane %v1628, %v1631
  %v1634 = vsel %vm161, %v1530, 0
  %v1637 = vsel %vm161, %v1531, 0
  %v1640 = vsel %vm161, %v1532, 0
  %v1643 = vsel %vm161, %v1533, 0
  %1645 = vmatprep.subr.mxu0 0.0
  %1646 = vmatpush1.msra.mxu0 %v1624
  %1647 = vmatprep.subr.mxu0 0.0
  %1648 = vmatpush1.msra.mxu0 %v1625
  %1649 = vmatprep.subr.mxu0 0.0
  %1650 = vmatpush1.msra.mxu0 %v1626
  %1651 = vmatprep.subr.mxu0 0.0
  %1652 = vmatpush1.msra.mxu0 %v1627
  %1653 = vmatprep.subr.mxu0 0.0
  %1654 = vmatpush1.msra.mxu0 0.0
  %1655 = vmatprep.subr.mxu0 0.0
  %1656 = vmatpush1.msra.mxu0 0.0
  %1657 = vmatprep.subr.mxu0 0.0
  %1658 = vmatpush1.msra.mxu0 0.0
  %1659 = vmatprep.subr.mxu0 0.0
  %1660 = vmatpush1.msra.mxu0 0.0
  %1661 = vmatprep.subr.mxu0 0.0
  %1662 = vmatpush1.msra.mxu0 0.0
  %1663 = vmatprep.subr.mxu0 0.0
  %1664 = vmatpush1.msra.mxu0 0.0
  %1665 = vmatprep.subr.mxu0 0.0
  %1666 = vmatpush1.msra.mxu0 0.0
  %1667 = vmatprep.subr.mxu0 0.0
  %1668 = vmatpush1.msra.mxu0 0.0
  %1669 = vmatprep.subr.mxu0 0.0
  %1670 = vmatpush1.msra.mxu0 0.0
  %1671 = vmatprep.subr.mxu0 0.0
  %1672 = vmatpush1.msra.mxu0 0.0
  %1673 = vmatprep.subr.mxu0 0.0
  %1674 = vmatpush1.msra.mxu0 0.0
  %1675 = vmatprep.subr.mxu0 0.0
  %1676 = vmatpush1.msra.mxu0 0.0
  %1677 = vmatprep.subr.mxu0 0.0
  %1678 = vmatpush1.msra.mxu0 0.0
  %1679 = vmatprep.subr.mxu0 0.0
  %1680 = vmatpush1.msra.mxu0 0.0
  %1681 = vmatprep.subr.mxu0 0.0
  %1682 = vmatpush1.msra.mxu0 0.0
  %1683 = vmatprep.subr.mxu0 0.0
  %1684 = vmatpush1.msra.mxu0 0.0
  %1685 = vmatprep.subr.mxu0 0.0
  %1686 = vmatpush1.msra.mxu0 0.0
  %1687 = vmatprep.subr.mxu0 0.0
  %1688 = vmatpush1.msra.mxu0 0.0
  %1689 = vmatprep.subr.mxu0 0.0
  %1690 = vmatpush1.msra.mxu0 0.0
  %1691 = vmatprep.subr.mxu0 0.0
  %1692 = vmatpush1.msra.mxu0 0.0
  %1693 = vmatprep.subr.mxu0 0.0
  %1694 = vmatpush1.msra.mxu0 0.0
  %1695 = vmatprep.subr.mxu0 0.0
  %1696 = vmatpush1.msra.mxu0 0.0
  %1697 = vmatprep.subr.mxu0 0.0
  %1698 = vmatpush1.msra.mxu0 0.0
  %1699 = vmatprep.subr.mxu0 0.0
  %1700 = vmatpush1.msra.mxu0 0.0
  %1701 = vmatprep.subr.mxu0 0.0
  %1702 = vmatpush1.msra.mxu0 0.0
  %1703 = vmatprep.subr.mxu0 0.0
  %1704 = vmatpush1.msra.mxu0 0.0
  %1705 = vmatprep.subr.mxu0 0.0
  %1706 = vmatpush1.msra.mxu0 0.0
  %1707 = vmatprep.subr.mxu0 0.0
  %1708 = vmatpush1.msra.mxu0 0.0
  %1709 = vmatprep.mubr.f32.mxu0 0.0
  %1710 = vmatmul.mubr.f32.gmra.mrb[0].mxu0 %v1634
  %v1711 = vpop.f32.mrb[0].mxu0
  %v1712 = vadd.f32 %v1632, %v1711
  %v1713 = vpop.f32.mrb[0].mxu0
  %1714 = vmatprep.mubr.f32.mxu0 0.0
  %1715 = vmatmul.mubr.f32.gmra.mrb[0].mxu0 %v1637
  %v1716 = vpop.f32.mrb[0].mxu0
  %v1717 = vadd.f32 %v1632, %v1716
  %v1718 = vpop.f32.mrb[0].mxu0
  %1719 = vmatprep.mubr.f32.mxu0 0.0
  %1720 = vmatmul.mubr.f32.gmra.mrb[0].mxu0 %v1640
  %v1721 = vpop.f32.mrb[0].mxu0
  %v1722 = vadd.f32 %v1632, %v1721
  %v1723 = vpop.f32.mrb[0].mxu0
  %1724 = vmatprep.mubr.f32.mxu0 0.0
  %1725 = vmatmul.mubr.f32.gmra.mrb[0].mxu0 %v1643
  %v1726 = vpop.f32.mrb[0].mxu0
  %v1727 = vadd.f32 %v1632, %v1726
  %v1728 = vpop.f32.mrb[0].mxu0
  %1729 = vdwg.mxu0
  %v1730 = vld [vmem:[%s3 + $0x228] sm:$0xff]
  %v1731 = vld [vmem:[%s3 + $0x230] sm:$0xff]
  %v1732 = vld [vmem:[%s3 + $0xf0] sm:$0xff]
  %v1733 = vld [vmem:[%s3 + $0xf8] sm:$0xff]
  %v1734 = vld [vmem:[%s3 + $0x100] sm:$0xff]
  %v1735 = vld [vmem:[%s3 + $0x108] sm:$0xff]
  %v1736 = vld [vmem:[%s2 + $0xf] sm:$0x1]
  %v1737 = vlaneseq
  %v1738 = vshrl.u32 %v1737, 7
  %v1739 = vsub.s32 0, %v1738
  %v1740 = vrot.slane %v1736, %v1739
  %v1741 = vadd.f32 %v1740, 0.0
  %v1743 = vsel %vm349, %v1616, 0
  %v1746 = vsel %vm349, %v1621, 0
  %v1749 = vsel %vm349, %v1712, 0
  %v1752 = vsel %vm349, %v1717, 0
  %v1755 = vsel %vm349, %v1722, 0
  %v1758 = vsel %vm349, %v1727, 0
  %1760 = vmatprep.subr.mxu0 0.0
  %1761 = vmatpush1.xpose.msra.mxu0 %v1749
  %1762 = vmatprep.subr.mxu0 0.0
  %1763 = vmatpush1.xpose.msra.mxu0 %v1752
  %1764 = vmatprep.subr.mxu0 0.0
  %1765 = vmatpush1.xpose.msra.mxu0 %v1755
  %1766 = vmatprep.subr.mxu0 0.0
  %1767 = vmatpush1.xpose.msra.mxu0 %v1758
  %1768 = vmatprep.subr.mxu0 0.0
  %1769 = vmatpush1.xpose.msra.mxu0 0.0
  %1770 = vmatprep.subr.mxu0 0.0
  %1771 = vmatpush1.xpose.msra.mxu0 0.0
  %1772 = vmatprep.subr.mxu0 0.0
  %1773 = vmatpush1.xpose.msra.mxu0 0.0
  %1774 = vmatprep.subr.mxu0 0.0
  %1775 = vmatpush1.xpose.msra.mxu0 0.0
  %1776 = vmatprep.subr.mxu0 0.0
  %1777 = vmatpush1.xpose.msra.mxu0 0.0
  %1778 = vmatprep.subr.mxu0 0.0
  %1779 = vmatpush1.xpose.msra.mxu0 0.0
  %1780 = vmatprep.subr.mxu0 0.0
  %1781 = vmatpush1.xpose.msra.mxu0 0.0
  %1782 = vmatprep.subr.mxu0 0.0
  %1783 = vmatpush1.xpose.msra.mxu0 0.0
  %1784 = vmatprep.subr.mxu0 0.0
  %1785 = vmatpush1.xpose.msra.mxu0 0.0
  %1786 = vmatprep.subr.mxu0 0.0
  %1787 = vmatpush1.xpose.msra.mxu0 0.0
  %1788 = vmatprep.subr.mxu0 0.0
  %1789 = vmatpush1.xpose.msra.mxu0 0.0
  %1790 = vmatprep.subr.mxu0 0.0
  %1791 = vmatpush1.xpose.msra.mxu0 0.0
  %1792 = vmatprep.subr.mxu0 0.0
  %1793 = vmatpush1.xpose.msra.mxu0 0.0
  %1794 = vmatprep.subr.mxu0 0.0
  %1795 = vmatpush1.xpose.msra.mxu0 0.0
  %1796 = vmatprep.subr.mxu0 0.0
  %1797 = vmatpush1.xpose.msra.mxu0 0.0
  %1798 = vmatprep.subr.mxu0 0.0
  %1799 = vmatpush1.xpose.msra.mxu0 0.0
  %1800 = vmatprep.subr.mxu0 0.0
  %1801 = vmatpush1.xpose.msra.mxu0 0.0
  %1802 = vmatprep.subr.mxu0 0.0
  %1803 = vmatpush1.xpose.msra.mxu0 0.0
  %1804 = vmatprep.subr.mxu0 0.0
  %1805 = vmatpush1.xpose.msra.mxu0 0.0
  %1806 = vmatprep.subr.mxu0 0.0
  %1807 = vmatpush1.xpose.msra.mxu0 0.0
  %1808 = vmatprep.subr.mxu0 0.0
  %1809 = vmatpush1.xpose.msra.mxu0 0.0
  %1810 = vmatprep.subr.mxu0 0.0
  %1811 = vmatpush1.xpose.msra.mxu0 0.0
  %1812 = vmatprep.subr.mxu0 0.0
  %1813 = vmatpush1.xpose.msra.mxu0 0.0
  %1814 = vmatprep.subr.mxu0 0.0
  %1815 = vmatpush1.xpose.msra.mxu0 0.0
  %1816 = vmatprep.subr.mxu0 0.0
  %1817 = vmatpush1.xpose.msra.mxu0 0.0
  %1818 = vmatprep.subr.mxu0 0.0
  %1819 = vmatpush1.xpose.msra.mxu0 0.0
  %1820 = vmatprep.subr.mxu0 0.0
  %1821 = vmatpush1.xpose.msra.mxu0 0.0
  %1822 = vmatprep.subr.mxu0 0.0
  %1823 = vmatpush1.xpose.msra.mxu0 0.0
  %1824 = vmatprep.mubr.f32.mxu0 0.0
  %1825 = vmatmul.mubr.f32.gmra.mrb[0].mxu0 %v1743
  %v1826 = vpop.f32.mrb[0].mxu0
  %v1827 = vadd.f32 0.0, %v1826
  %v1828 = vpop.f32.mrb[0].mxu0
  %1829 = vmatprep.mubr.f32.mxu0 0.0
  %1830 = vmatmul.mubr.f32.gmra.mrb[0].mxu0 %v1746
  %v1831 = vpop.f32.mrb[0].mxu0
  %v1832 = vadd.f32 0.0, %v1831
  %v1833 = vpop.f32.mrb[0].mxu0
  %1834 = vdwg.mxu0
  %v1835 = vmul.f32 %v1827, 0.25
  %v1836 = vmul.f32 %v1832, 0.25
  %v1837 = vadd.f32 %v1835, %v1730
  %v1838 = vadd.f32 %v1836, %v1731
  %v1839 = vsel %vm161, %v1837, -inf
  %1840 = vmax.xlane.f32.xlu0 %v1839
  %v1841 = vpop.xlane.xlu0 %1840
  %v1842 = vsel %vm161, %v1838, -inf
  %1843 = vmax.xlane.f32.xlu0 %v1842
  %v1844 = vpop.xlane.xlu0 %1843
  %v1845 = vsub.f32 %v1837, %v1841
  %v1846 = vsub.f32 %v1838, %v1844
  %v1847 = vmul.f32 %v1845, 1.442695
  %v1848 = vpow.pop %v1847
  %v1849 = vmul.f32 %v1846, 1.442695
  %v1850 = vpow.pop %v1849
  %v1851 = vsel %vm161, %v1848, 0.0
  %1852 = vadd.xlane.f32.xlu0 %v1851
  %v1853 = vpop.xlane.xlu0 %1852
  %v1854 = vsel %vm161, %v1850, 0.0
  %1855 = vadd.xlane.f32.xlu0 %v1854
  %v1856 = vpop.xlane.xlu0 %1855
  %v1857 = vrcp.pop %v1853
  %v1858 = vrcp.pop %v1856
  %v1859 = vmul.f32 %v1848, %v1857
  %v1860 = vmul.f32 %v1850, %v1858
  %1861 = vrot.lane.b32.xlu0 %v1712, 96
  %v1862 = vpop.permute.xlu0 %1861
  %1863 = vrot.lane.b32.xlu0 %v1717, 96
  %v1864 = vpop.permute.xlu0 %1863
  %1865 = vrot.lane.b32.xlu0 %v1722, 96
  %v1866 = vpop.permute.xlu0 %1865
  %1867 = vrot.lane.b32.xlu0 %v1727, 96
  %v1868 = vpop.permute.xlu0 %1867
  %v1874 = vsel %vm161, %v1859, 0
  %v1877 = vsel %vm161, %v1860, 0
  %1879 = vmatprep.subr.mxu0 0.0
  %1880 = vmatpush1.msra.mxu0 %v1862
  %1881 = vmatprep.subr.mxu0 0.0
  %1882 = vmatpush1.msra.mxu0 %v1864
  %1883 = vmatprep.subr.mxu0 0.0
  %1884 = vmatpush1.msra.mxu0 %v1866
  %1885 = vmatprep.subr.mxu0 0.0
  %1886 = vmatpush1.msra.mxu0 %v1868
  %1887 = vmatprep.subr.mxu0 0.0
  %1888 = vmatpush1.msra.mxu0 0.0
  %1889 = vmatprep.subr.mxu0 0.0
  %1890 = vmatpush1.msra.mxu0 0.0
  %1891 = vmatprep.subr.mxu0 0.0
  %1892 = vmatpush1.msra.mxu0 0.0
  %1893 = vmatprep.subr.mxu0 0.0
  %1894 = vmatpush1.msra.mxu0 0.0
  %1895 = vmatprep.subr.mxu0 0.0
  %1896 = vmatpush1.msra.mxu0 0.0
  %1897 = vmatprep.subr.mxu0 0.0
  %1898 = vmatpush1.msra.mxu0 0.0
  %1899 = vmatprep.subr.mxu0 0.0
  %1900 = vmatpush1.msra.mxu0 0.0
  %1901 = vmatprep.subr.mxu0 0.0
  %1902 = vmatpush1.msra.mxu0 0.0
  %1903 = vmatprep.subr.mxu0 0.0
  %1904 = vmatpush1.msra.mxu0 0.0
  %1905 = vmatprep.subr.mxu0 0.0
  %1906 = vmatpush1.msra.mxu0 0.0
  %1907 = vmatprep.subr.mxu0 0.0
  %1908 = vmatpush1.msra.mxu0 0.0
  %1909 = vmatprep.subr.mxu0 0.0
  %1910 = vmatpush1.msra.mxu0 0.0
  %1911 = vmatprep.subr.mxu0 0.0
  %1912 = vmatpush1.msra.mxu0 0.0
  %1913 = vmatprep.subr.mxu0 0.0
  %1914 = vmatpush1.msra.mxu0 0.0
  %1915 = vmatprep.subr.mxu0 0.0
  %1916 = vmatpush1.msra.mxu0 0.0
  %1917 = vmatprep.subr.mxu0 0.0
  %1918 = vmatpush1.msra.mxu0 0.0
  %1919 = vmatprep.subr.mxu0 0.0
  %1920 = vmatpush1.msra.mxu0 0.0
  %1921 = vmatprep.subr.mxu0 0.0
  %1922 = vmatpush1.msra.mxu0 0.0
  %1923 = vmatprep.subr.mxu0 0.0
  %1924 = vmatpush1.msra.mxu0 0.0
  %1925 = vmatprep.subr.mxu0 0.0
  %1926 = vmatpush1.msra.mxu0 0.0
  %1927 = vmatprep.subr.mxu0 0.0
  %1928 = vmatpush1.msra.mxu0 0.0
  %1929 = vmatprep.subr.mxu0 0.0
  %1930 = vmatpush1.msra.mxu0 0.0
  %1931 = vmatprep.subr.mxu0 0.0
  %1932 = vmatpush1.msra.mxu0 0.0
  %1933 = vmatprep.subr.mxu0 0.0
  %1934 = vmatpush1.msra.mxu0 0.0
  %1935 = vmatprep.subr.mxu0 0.0
  %1936 = vmatpush1.msra.mxu0 0.0
  %1937 = vmatprep.subr.mxu0 0.0
  %1938 = vmatpush1.msra.mxu0 0.0
  %1939 = vmatprep.subr.mxu0 0.0
  %1940 = vmatpush1.msra.mxu0 0.0
  %1941 = vmatprep.subr.mxu0 0.0
  %1942 = vmatpush1.msra.mxu0 0.0
  %1943 = vmatprep.mubr.f32.mxu0 0.0
  %1944 = vmatmul.mubr.f32.gmra.mrb[0].mxu0 %v1874
  %v1945 = vpop.f32.mrb[0].mxu0
  %v1946 = vadd.f32 0.0, %v1945
  %v1947 = vpop.f32.mrb[0].mxu0
  %1948 = vmatprep.mubr.f32.mxu0 0.0
  %1949 = vmatmul.mubr.f32.gmra.mrb[0].mxu0 %v1877
  %v1950 = vpop.f32.mrb[0].mxu0
  %v1951 = vadd.f32 0.0, %v1950
  %v1952 = vpop.f32.mrb[0].mxu0
  %1953 = vdwg.mxu0
  %v1955 = vsel %vm349, %v1946, 0
  %v1958 = vsel %vm349, %v1951, 0
  %1960 = vmatprep.subr.mxu0 0.0
  %1961 = vmatpush1.msra.mxu0 %v1732
  %1962 = vmatprep.subr.mxu0 0.0
  %1963 = vmatpush1.msra.mxu0 %v1733
  %1964 = vmatprep.subr.mxu0 0.0
  %1965 = vmatpush1.msra.mxu0 0.0
  %1966 = vmatprep.subr.mxu0 0.0
  %1967 = vmatpush1.msra.mxu0 0.0
  %1968 = vmatprep.subr.mxu0 0.0
  %1969 = vmatpush1.msra.mxu0 0.0
  %1970 = vmatprep.subr.mxu0 0.0
  %1971 = vmatpush1.msra.mxu0 0.0
  %1972 = vmatprep.subr.mxu0 0.0
  %1973 = vmatpush1.msra.mxu0 0.0
  %1974 = vmatprep.subr.mxu0 0.0
  %1975 = vmatpush1.msra.mxu0 0.0
  %1976 = vmatprep.subr.mxu0 0.0
  %1977 = vmatpush1.msra.mxu0 0.0
  %1978 = vmatprep.subr.mxu0 0.0
  %1979 = vmatpush1.msra.mxu0 0.0
  %1980 = vmatprep.subr.mxu0 0.0
  %1981 = vmatpush1.msra.mxu0 0.0
  %1982 = vmatprep.subr.mxu0 0.0
  %1983 = vmatpush1.msra.mxu0 0.0
  %1984 = vmatprep.subr.mxu0 0.0
  %1985 = vmatpush1.msra.mxu0 0.0
  %1986 = vmatprep.subr.mxu0 0.0
  %1987 = vmatpush1.msra.mxu0 0.0
  %1988 = vmatprep.subr.mxu0 0.0
  %1989 = vmatpush1.msra.mxu0 0.0
  %1990 = vmatprep.subr.mxu0 0.0
  %1991 = vmatpush1.msra.mxu0 0.0
  %1992 = vmatprep.subr.mxu0 0.0
  %1993 = vmatpush1.msra.mxu0 0.0
  %1994 = vmatprep.subr.mxu0 0.0
  %1995 = vmatpush1.msra.mxu0 0.0
  %1996 = vmatprep.subr.mxu0 0.0
  %1997 = vmatpush1.msra.mxu0 0.0
  %1998 = vmatprep.subr.mxu0 0.0
  %1999 = vmatpush1.msra.mxu0 0.0
  %2000 = vmatprep.subr.mxu0 0.0
  %2001 = vmatpush1.msra.mxu0 0.0
  %2002 = vmatprep.subr.mxu0 0.0
  %2003 = vmatpush1.msra.mxu0 0.0
  %2004 = vmatprep.subr.mxu0 0.0
  %2005 = vmatpush1.msra.mxu0 0.0
  %2006 = vmatprep.subr.mxu0 0.0
  %2007 = vmatpush1.msra.mxu0 0.0
  %2008 = vmatprep.subr.mxu0 0.0
  %2009 = vmatpush1.msra.mxu0 0.0
  %2010 = vmatprep.subr.mxu0 0.0
  %2011 = vmatpush1.msra.mxu0 0.0
  %2012 = vmatprep.subr.mxu0 0.0
  %2013 = vmatpush1.msra.mxu0 0.0
  %2014 = vmatprep.subr.mxu0 0.0
  %2015 = vmatpush1.msra.mxu0 0.0
  %2016 = vmatprep.subr.mxu0 0.0
  %2017 = vmatpush1.msra.mxu0 0.0
  %2018 = vmatprep.subr.mxu0 0.0
  %2019 = vmatpush1.msra.mxu0 0.0
  %2020 = vmatprep.subr.mxu0 0.0
  %2021 = vmatpush1.msra.mxu0 0.0
  %2022 = vmatprep.subr.mxu0 0.0
  %2023 = vmatpush1.msra.mxu0 0.0
  %2024 = vmatprep.mubr.f32.mxu0 0.0
  %2025 = vmatmul.mubr.f32.gmra.mrb[0].mxu0 %v1955
  %v2026 = vpop.f32.mrb[0].mxu0
  %v2027 = vadd.f32 0.0, %v2026
  %v2028 = vpop.f32.mrb[0].mxu0
  %2029 = vmatprep.mubr.f32.mxu0 0.0
  %2030 = vmatmul.mubr.f32.gmra.mrb[0].mxu0 %v1958
  %v2031 = vpop.f32.mrb[0].mxu0
  %v2032 = vadd.f32 0.0, %v2031
  %v2033 = vpop.f32.mrb[0].mxu0
  %2034 = vdwg.mxu0
  %v2035 = vadd.f32 %v1741, %v2027
  %v2036 = vadd.f32 %v1741, %v2032
  %2037 = vrot.lane.b32.xlu0 %v1616, 112
  %v2038 = vpop.permute.xlu0 %2037
  %2039 = vrot.lane.b32.xlu0 %v1621, 112
  %v2040 = vpop.permute.xlu0 %2039
  %2041 = vrot.lane.b32.xlu0 %v1712, 112
  %v2042 = vpop.permute.xlu0 %2041
  %2043 = vrot.lane.b32.xlu0 %v1717, 112
  %v2044 = vpop.permute.xlu0 %2043
  %2045 = vrot.lane.b32.xlu0 %v1722, 112
  %v2046 = vpop.permute.xlu0 %2045
  %2047 = vrot.lane.b32.xlu0 %v1727, 112
  %v2048 = vpop.permute.xlu0 %2047
  %v2049 = vsel %vm349, %v2038, 0
  %v2051 = vsel %vm349, %v2040, 0
  %v2053 = vsel %vm349, %v2042, 0
  %v2055 = vsel %vm349, %v2044, 0
  %v2057 = vsel %vm349, %v2046, 0
  %v2059 = vsel %vm349, %v2048, 0
  %2061 = vmatprep.subr.mxu0 0.0
  %2062 = vmatpush1.xpose.msra.mxu0 %v2053
  %2063 = vmatprep.subr.mxu0 0.0
  %2064 = vmatpush1.xpose.msra.mxu0 %v2055
  %2065 = vmatprep.subr.mxu0 0.0
  %2066 = vmatpush1.xpose.msra.mxu0 %v2057
  %2067 = vmatprep.subr.mxu0 0.0
  %2068 = vmatpush1.xpose.msra.mxu0 %v2059
  %2069 = vmatprep.subr.mxu0 0.0
  %2070 = vmatpush1.xpose.msra.mxu0 0.0
  %2071 = vmatprep.subr.mxu0 0.0
  %2072 = vmatpush1.xpose.msra.mxu0 0.0
  %2073 = vmatprep.subr.mxu0 0.0
  %2074 = vmatpush1.xpose.msra.mxu0 0.0
  %2075 = vmatprep.subr.mxu0 0.0
  %2076 = vmatpush1.xpose.msra.mxu0 0.0
  %2077 = vmatprep.subr.mxu0 0.0
  %2078 = vmatpush1.xpose.msra.mxu0 0.0
  %2079 = vmatprep.subr.mxu0 0.0
  %2080 = vmatpush1.xpose.msra.mxu0 0.0
  %2081 = vmatprep.subr.mxu0 0.0
  %2082 = vmatpush1.xpose.msra.mxu0 0.0
  %2083 = vmatprep.subr.mxu0 0.0
  %2084 = vmatpush1.xpose.msra.mxu0 0.0
  %2085 = vmatprep.subr.mxu0 0.0
  %2086 = vmatpush1.xpose.msra.mxu0 0.0
  %2087 = vmatprep.subr.mxu0 0.0
  %2088 = vmatpush1.xpose.msra.mxu0 0.0
  %2089 = vmatprep.subr.mxu0 0.0
  %2090 = vmatpush1.xpose.msra.mxu0 0.0
  %2091 = vmatprep.subr.mxu0 0.0
  %2092 = vmatpush1.xpose.msra.mxu0 0.0
  %2093 = vmatprep.subr.mxu0 0.0
  %2094 = vmatpush1.xpose.msra.mxu0 0.0
  %2095 = vmatprep.subr.mxu0 0.0
  %2096 = vmatpush1.xpose.msra.mxu0 0.0
  %2097 = vmatprep.subr.mxu0 0.0
  %2098 = vmatpush1.xpose.msra.mxu0 0.0
  %2099 = vmatprep.subr.mxu0 0.0
  %2100 = vmatpush1.xpose.msra.mxu0 0.0
  %2101 = vmatprep.subr.mxu0 0.0
  %2102 = vmatpush1.xpose.msra.mxu0 0.0
  %2103 = vmatprep.subr.mxu0 0.0
  %2104 = vmatpush1.xpose.msra.mxu0 0.0
  %2105 = vmatprep.subr.mxu0 0.0
  %2106 = vmatpush1.xpose.msra.mxu0 0.0
  %2107 = vmatprep.subr.mxu0 0.0
  %2108 = vmatpush1.xpose.msra.mxu0 0.0
  %2109 = vmatprep.subr.mxu0 0.0
  %2110 = vmatpush1.xpose.msra.mxu0 0.0
  %2111 = vmatprep.subr.mxu0 0.0
  %2112 = vmatpush1.xpose.msra.mxu0 0.0
  %2113 = vmatprep.subr.mxu0 0.0
  %2114 = vmatpush1.xpose.msra.mxu0 0.0
  %2115 = vmatprep.subr.mxu0 0.0
  %2116 = vmatpush1.xpose.msra.mxu0 0.0
  %2117 = vmatprep.subr.mxu0 0.0
  %2118 = vmatpush1.xpose.msra.mxu0 0.0
  %2119 = vmatprep.subr.mxu0 0.0
  %2120 = vmatpush1.xpose.msra.mxu0 0.0
  %2121 = vmatprep.subr.mxu0 0.0
  %2122 = vmatpush1.xpose.msra.mxu0 0.0
  %2123 = vmatprep.subr.mxu0 0.0
  %2124 = vmatpush1.xpose.msra.mxu0 0.0
  %2125 = vmatprep.mubr.f32.mxu0 0.0
  %2126 = vmatmul.mubr.f32.gmra.mrb[0].mxu0 %v2049
  %v2127 = vpop.f32.mrb[0].mxu0
  %v2128 = vadd.f32 0.0, %v2127
  %v2129 = vpop.f32.mrb[0].mxu0
  %2130 = vmatprep.mubr.f32.mxu0 0.0
  %2131 = vmatmul.mubr.f32.gmra.mrb[0].mxu0 %v2051
  %v2132 = vpop.f32.mrb[0].mxu0
  %v2133 = vadd.f32 0.0, %v2132
  %v2134 = vpop.f32.mrb[0].mxu0
  %2135 = vdwg.mxu0
  %v2136 = vmul.f32 %v2128, 0.25
  %v2137 = vmul.f32 %v2133, 0.25
  %v2138 = vadd.f32 %v2136, %v1730
  %v2139 = vadd.f32 %v2137, %v1731
  %v2140 = vsel %vm161, %v2138, -inf
  %2141 = vmax.xlane.f32.xlu0 %v2140
  %v2142 = vpop.xlane.xlu0 %2141
  %v2143 = vsel %vm161, %v2139, -inf
  %2144 = vmax.xlane.f32.xlu0 %v2143
  %v2145 = vpop.xlane.xlu0 %2144
  %v2146 = vsub.f32 %v2138, %v2142
  %v2147 = vsub.f32 %v2139, %v2145
  %v2148 = vmul.f32 %v2146, 1.442695
  %v2149 = vpow.pop %v2148
  %v2150 = vmul.f32 %v2147, 1.442695
  %v2151 = vpow.pop %v2150
  %v2152 = vsel %vm161, %v2149, 0.0
  %2153 = vadd.xlane.f32.xlu0 %v2152
  %v2154 = vpop.xlane.xlu0 %2153
  %v2155 = vsel %vm161, %v2151, 0.0
  %2156 = vadd.xlane.f32.xlu0 %v2155
  %v2157 = vpop.xlane.xlu0 %2156
  %v2158 = vrcp.pop %v2154
  %v2159 = vrcp.pop %v2157
  %v2160 = vmul.f32 %v2149, %v2158
  %v2161 = vmul.f32 %v2151, %v2159
  %2162 = vrot.lane.b32.xlu0 %v1712, 80
  %v2163 = vpop.permute.xlu0 %2162
  %2164 = vrot.lane.b32.xlu0 %v1717, 80
  %v2165 = vpop.permute.xlu0 %2164
  %2166 = vrot.lane.b32.xlu0 %v1722, 80
  %v2167 = vpop.permute.xlu0 %2166
  %2168 = vrot.lane.b32.xlu0 %v1727, 80
  %v2169 = vpop.permute.xlu0 %2168
  %v2175 = vsel %vm161, %v2160, 0
  %v2178 = vsel %vm161, %v2161, 0
  %2180 = vmatprep.subr.mxu0 0.0
  %2181 = vmatpush1.msra.mxu0 %v2163
  %2182 = vmatprep.subr.mxu0 0.0
  %2183 = vmatpush1.msra.mxu0 %v2165
  %2184 = vmatprep.subr.mxu0 0.0
  %2185 = vmatpush1.msra.mxu0 %v2167
  %2186 = vmatprep.subr.mxu0 0.0
  %2187 = vmatpush1.msra.mxu0 %v2169
  %2188 = vmatprep.subr.mxu0 0.0
  %2189 = vmatpush1.msra.mxu0 0.0
  %2190 = vmatprep.subr.mxu0 0.0
  %2191 = vmatpush1.msra.mxu0 0.0
  %2192 = vmatprep.subr.mxu0 0.0
  %2193 = vmatpush1.msra.mxu0 0.0
  %2194 = vmatprep.subr.mxu0 0.0
  %2195 = vmatpush1.msra.mxu0 0.0
  %2196 = vmatprep.subr.mxu0 0.0
  %2197 = vmatpush1.msra.mxu0 0.0
  %2198 = vmatprep.subr.mxu0 0.0
  %2199 = vmatpush1.msra.mxu0 0.0
  %2200 = vmatprep.subr.mxu0 0.0
  %2201 = vmatpush1.msra.mxu0 0.0
  %2202 = vmatprep.subr.mxu0 0.0
  %2203 = vmatpush1.msra.mxu0 0.0
  %2204 = vmatprep.subr.mxu0 0.0
  %2205 = vmatpush1.msra.mxu0 0.0
  %2206 = vmatprep.subr.mxu0 0.0
  %2207 = vmatpush1.msra.mxu0 0.0
  %2208 = vmatprep.subr.mxu0 0.0
  %2209 = vmatpush1.msra.mxu0 0.0
  %2210 = vmatprep.subr.mxu0 0.0
  %2211 = vmatpush1.msra.mxu0 0.0
  %2212 = vmatprep.subr.mxu0 0.0
  %2213 = vmatpush1.msra.mxu0 0.0
  %2214 = vmatprep.subr.mxu0 0.0
  %2215 = vmatpush1.msra.mxu0 0.0
  %2216 = vmatprep.subr.mxu0 0.0
  %2217 = vmatpush1.msra.mxu0 0.0
  %2218 = vmatprep.subr.mxu0 0.0
  %2219 = vmatpush1.msra.mxu0 0.0
  %2220 = vmatprep.subr.mxu0 0.0
  %2221 = vmatpush1.msra.mxu0 0.0
  %2222 = vmatprep.subr.mxu0 0.0
  %2223 = vmatpush1.msra.mxu0 0.0
  %2224 = vmatprep.subr.mxu0 0.0
  %2225 = vmatpush1.msra.mxu0 0.0
  %2226 = vmatprep.subr.mxu0 0.0
  %2227 = vmatpush1.msra.mxu0 0.0
  %2228 = vmatprep.subr.mxu0 0.0
  %2229 = vmatpush1.msra.mxu0 0.0
  %2230 = vmatprep.subr.mxu0 0.0
  %2231 = vmatpush1.msra.mxu0 0.0
  %2232 = vmatprep.subr.mxu0 0.0
  %2233 = vmatpush1.msra.mxu0 0.0
  %2234 = vmatprep.subr.mxu0 0.0
  %2235 = vmatpush1.msra.mxu0 0.0
  %2236 = vmatprep.subr.mxu0 0.0
  %2237 = vmatpush1.msra.mxu0 0.0
  %2238 = vmatprep.subr.mxu0 0.0
  %2239 = vmatpush1.msra.mxu0 0.0
  %2240 = vmatprep.subr.mxu0 0.0
  %2241 = vmatpush1.msra.mxu0 0.0
  %2242 = vmatprep.subr.mxu0 0.0
  %2243 = vmatpush1.msra.mxu0 0.0
  %2244 = vmatprep.mubr.f32.mxu0 0.0
  %2245 = vmatmul.mubr.f32.gmra.mrb[0].mxu0 %v2175
  %v2246 = vpop.f32.mrb[0].mxu0
  %v2247 = vadd.f32 0.0, %v2246
  %v2248 = vpop.f32.mrb[0].mxu0
  %2249 = vmatprep.mubr.f32.mxu0 0.0
  %2250 = vmatmul.mubr.f32.gmra.mrb[0].mxu0 %v2178
  %v2251 = vpop.f32.mrb[0].mxu0
  %v2252 = vadd.f32 0.0, %v2251
  %v2253 = vpop.f32.mrb[0].mxu0
  %2254 = vdwg.mxu0
  %v2256 = vsel %vm349, %v2247, 0
  %v2259 = vsel %vm349, %v2252, 0
  %2261 = vmatprep.subr.mxu0 0.0
  %2262 = vmatpush1.msra.mxu0 %v1734
  %2263 = vmatprep.subr.mxu0 0.0
  %2264 = vmatpush1.msra.mxu0 %v1735
  %2265 = vmatprep.subr.mxu0 0.0
  %2266 = vmatpush1.msra.mxu0 0.0
  %2267 = vmatprep.subr.mxu0 0.0
  %2268 = vmatpush1.msra.mxu0 0.0
  %2269 = vmatprep.subr.mxu0 0.0
  %2270 = vmatpush1.msra.mxu0 0.0
  %2271 = vmatprep.subr.mxu0 0.0
  %2272 = vmatpush1.msra.mxu0 0.0
  %2273 = vmatprep.subr.mxu0 0.0
  %2274 = vmatpush1.msra.mxu0 0.0
  %2275 = vmatprep.subr.mxu0 0.0
  %2276 = vmatpush1.msra.mxu0 0.0
  %2277 = vmatprep.subr.mxu0 0.0
  %2278 = vmatpush1.msra.mxu0 0.0
  %2279 = vmatprep.subr.mxu0 0.0
  %2280 = vmatpush1.msra.mxu0 0.0
  %2281 = vmatprep.subr.mxu0 0.0
  %2282 = vmatpush1.msra.mxu0 0.0
  %2283 = vmatprep.subr.mxu0 0.0
  %2284 = vmatpush1.msra.mxu0 0.0
  %2285 = vmatprep.subr.mxu0 0.0
  %2286 = vmatpush1.msra.mxu0 0.0
  %2287 = vmatprep.subr.mxu0 0.0
  %2288 = vmatpush1.msra.mxu0 0.0
  %2289 = vmatprep.subr.mxu0 0.0
  %2290 = vmatpush1.msra.mxu0 0.0
  %2291 = vmatprep.subr.mxu0 0.0
  %2292 = vmatpush1.msra.mxu0 0.0
  %2293 = vmatprep.subr.mxu0 0.0
  %2294 = vmatpush1.msra.mxu0 0.0
  %2295 = vmatprep.subr.mxu0 0.0
  %2296 = vmatpush1.msra.mxu0 0.0
  %2297 = vmatprep.subr.mxu0 0.0
  %2298 = vmatpush1.msra.mxu0 0.0
  %2299 = vmatprep.subr.mxu0 0.0
  %2300 = vmatpush1.msra.mxu0 0.0
  %2301 = vmatprep.subr.mxu0 0.0
  %2302 = vmatpush1.msra.mxu0 0.0
  %2303 = vmatprep.subr.mxu0 0.0
  %2304 = vmatpush1.msra.mxu0 0.0
  %2305 = vmatprep.subr.mxu0 0.0
  %2306 = vmatpush1.msra.mxu0 0.0
  %2307 = vmatprep.subr.mxu0 0.0
  %2308 = vmatpush1.msra.mxu0 0.0
  %2309 = vmatprep.subr.mxu0 0.0
  %2310 = vmatpush1.msra.mxu0 0.0
  %2311 = vmatprep.subr.mxu0 0.0
  %2312 = vmatpush1.msra.mxu0 0.0
  %2313 = vmatprep.subr.mxu0 0.0
  %2314 = vmatpush1.msra.mxu0 0.0
  %2315 = vmatprep.subr.mxu0 0.0
  %2316 = vmatpush1.msra.mxu0 0.0
  %2317 = vmatprep.subr.mxu0 0.0
  %2318 = vmatpush1.msra.mxu0 0.0
  %2319 = vmatprep.subr.mxu0 0.0
  %2320 = vmatpush1.msra.mxu0 0.0
  %2321 = vmatprep.subr.mxu0 0.0
  %2322 = vmatpush1.msra.mxu0 0.0
  %2323 = vmatprep.subr.mxu0 0.0
  %2324 = vmatpush1.msra.mxu0 0.0
  %2325 = vmatprep.mubr.f32.mxu0 0.0
  %2326 = vmatmul.mubr.f32.gmra.mrb[0].mxu0 %v2256
  %v2327 = vpop.f32.mrb[0].mxu0
  %v2328 = vadd.f32 0.0, %v2327
  %v2329 = vpop.f32.mrb[0].mxu0
  %2330 = vmatprep.mubr.f32.mxu0 0.0
  %2331 = vmatmul.mubr.f32.gmra.mrb[0].mxu0 %v2259
  %v2332 = vpop.f32.mrb[0].mxu0
  %v2333 = vadd.f32 0.0, %v2332
  %v2334 = vpop.f32.mrb[0].mxu0
  %2335 = vdwg.mxu0
  %v2336 = vadd.f32 %v2035, %v2328
  %v2337 = vadd.f32 %v2036, %v2333
  %v2338 = vadd.f32 %v1422, %v2336
  %v2339 = vadd.f32 %v1423, %v2337
  %v2340 = vld [vmem:[%s1] sm:$0xff]
  %v2341 = vlaneseq
  %v2342 = vand.u32 %v2341, 127
  %2343 = vset.pattern.permute.xlu0 0
  %2344 = vperm.xlu0 %2343, %v2340
  %v2345 = vpop.permute.xlu0 %2344
  %vm2346 = vcmp.eq.s32.totalorder %v2342, %v2345
  %v2347 = vsel %vm2346, 1, 0
  %v2348 = vcvt.s32.f32 %v2347
  %v2349 = vld [vmem:[%s3 + $0x110] sm:$0xff]
  %v2350 = vld [vmem:[%s3 + $0x118] sm:$0xff]
  %v2351 = vld [vmem:[%s3 + $0x120] sm:$0xff]
  %v2352 = vld [vmem:[%s3 + $0x128] sm:$0xff]
  %v2353 = vld [vmem:[%s3 + $0x130] sm:$0xff]
  %v2354 = vld [vmem:[%s3 + $0x138] sm:$0xff]
  %v2355 = vld [vmem:[%s3 + $0x140] sm:$0xff]
  %v2356 = vld [vmem:[%s3 + $0x148] sm:$0xff]
  %v2357 = vld [vmem:[%s3 + $0x150] sm:$0xff]
  %v2358 = vld [vmem:[%s3 + $0x158] sm:$0xff]
  %v2359 = vld [vmem:[%s3 + $0x160] sm:$0xff]
  %v2360 = vld [vmem:[%s3 + $0x168] sm:$0xff]
  %v2361 = vld [vmem:[%s3 + $0x170] sm:$0xff]
  %v2362 = vld [vmem:[%s3 + $0x178] sm:$0xff]
  %v2363 = vld [vmem:[%s3 + $0x180] sm:$0xff]
  %v2364 = vld [vmem:[%s3 + $0x188] sm:$0xff]
  %2365 = vmatprep.subr.mxu0 0.0
  %2366 = vmatpush1.msra.mxu0 %v2349
  %2367 = vmatprep.subr.mxu0 0.0
  %2368 = vmatpush1.msra.mxu0 %v2350
  %2369 = vmatprep.subr.mxu0 0.0
  %2370 = vmatpush1.msra.mxu0 %v2351
  %2371 = vmatprep.subr.mxu0 0.0
  %2372 = vmatpush1.msra.mxu0 %v2352
  %2373 = vmatprep.subr.mxu0 0.0
  %2374 = vmatpush1.msra.mxu0 %v2353
  %2375 = vmatprep.subr.mxu0 0.0
  %2376 = vmatpush1.msra.mxu0 %v2354
  %2377 = vmatprep.subr.mxu0 0.0
  %2378 = vmatpush1.msra.mxu0 %v2355
  %2379 = vmatprep.subr.mxu0 0.0
  %2380 = vmatpush1.msra.mxu0 %v2356
  %2381 = vmatprep.subr.mxu0 0.0
  %2382 = vmatpush1.msra.mxu0 %v2357
  %2383 = vmatprep.subr.mxu0 0.0
  %2384 = vmatpush1.msra.mxu0 %v2358
  %2385 = vmatprep.subr.mxu0 0.0
  %2386 = vmatpush1.msra.mxu0 %v2359
  %2387 = vmatprep.subr.mxu0 0.0
  %2388 = vmatpush1.msra.mxu0 %v2360
  %2389 = vmatprep.subr.mxu0 0.0
  %2390 = vmatpush1.msra.mxu0 %v2361
  %2391 = vmatprep.subr.mxu0 0.0
  %2392 = vmatpush1.msra.mxu0 %v2362
  %2393 = vmatprep.subr.mxu0 0.0
  %2394 = vmatpush1.msra.mxu0 %v2363
  %2395 = vmatprep.subr.mxu0 0.0
  %2396 = vmatpush1.msra.mxu0 %v2364
  %2397 = vmatprep.subr.mxu0 0.0
  %2398 = vmatpush1.msra.mxu0 0.0
  %2399 = vmatprep.subr.mxu0 0.0
  %2400 = vmatpush1.msra.mxu0 0.0
  %2401 = vmatprep.subr.mxu0 0.0
  %2402 = vmatpush1.msra.mxu0 0.0
  %2403 = vmatprep.subr.mxu0 0.0
  %2404 = vmatpush1.msra.mxu0 0.0
  %2405 = vmatprep.subr.mxu0 0.0
  %2406 = vmatpush1.msra.mxu0 0.0
  %2407 = vmatprep.subr.mxu0 0.0
  %2408 = vmatpush1.msra.mxu0 0.0
  %2409 = vmatprep.subr.mxu0 0.0
  %2410 = vmatpush1.msra.mxu0 0.0
  %2411 = vmatprep.subr.mxu0 0.0
  %2412 = vmatpush1.msra.mxu0 0.0
  %2413 = vmatprep.subr.mxu0 0.0
  %2414 = vmatpush1.msra.mxu0 0.0
  %2415 = vmatprep.subr.mxu0 0.0
  %2416 = vmatpush1.msra.mxu0 0.0
  %2417 = vmatprep.subr.mxu0 0.0
  %2418 = vmatpush1.msra.mxu0 0.0
  %2419 = vmatprep.subr.mxu0 0.0
  %2420 = vmatpush1.msra.mxu0 0.0
  %2421 = vmatprep.subr.mxu0 0.0
  %2422 = vmatpush1.msra.mxu0 0.0
  %2423 = vmatprep.subr.mxu0 0.0
  %2424 = vmatpush1.msra.mxu0 0.0
  %2425 = vmatprep.subr.mxu0 0.0
  %2426 = vmatpush1.msra.mxu0 0.0
  %2427 = vmatprep.subr.mxu0 0.0
  %2428 = vmatpush1.msra.mxu0 0.0
  %2429 = vmatprep.mubr.f32.mxu0 0.0
  %2430 = vmatmul.mubr.f32.gmra.mrb[0].mxu0 %v2348
  %v2431 = vpop.f32.mrb[0].mxu0
  %v2432 = vadd.f32 0.0, %v2431
  %v2433 = vpop.f32.mrb[0].mxu0
  %2434 = vdwg.mxu0
  %2435 = vst.msk [vmem:[#allocation2] sm:$0xff] %vm161, %v2432
  %2436 = vst.msk [vmem:[#allocation2 + $0x8] sm:$0xff] %vm161, %v2338
  %2437 = vst.msk [vmem:[#allocation2 + $0x10] sm:$0xff] %vm161, %v2339
  %v2438 = vld [vmem:[#allocation2] sm:$0xff]
  %v2439 = vld [vmem:[#allocation2 + $0x8] sm:$0xff]
  %v2440 = vld [vmem:[#allocation2 + $0x10] sm:$0xff]
  %v2441 = vld [vmem:[%s3 + $0x190] sm:$0xff]
  %v2442 = vld [vmem:[%s3 + $0x198] sm:$0xff]
  %v2443 = vld [vmem:[%s3 + $0x1a0] sm:$0xff]
  %v2444 = vadd.f32 %v2438, %v2441
  %v2445 = vadd.f32 %v2439, %v2442
  %v2446 = vadd.f32 %v2440, %v2443
  %v2447 = vld [vmem:[%s2 + $0x10] sm:$0x1]
  %v2448 = vld [vmem:[%s2 + $0x11] sm:$0x1]
  %v2449 = vld [vmem:[%s4 + $0x20] sm:$0xff]
  %v2450 = vld [vmem:[%s4 + $0x28] sm:$0xff]
  %v2451 = vld [vmem:[%s4 + $0x30] sm:$0xff]
  %v2452 = vld [vmem:[%s4 + $0x38] sm:$0xff]
  %v2453 = vld [vmem:[%s2 + $0x12] sm:$0x1]
  %v2454 = vld [vmem:[%s3 + $0x1a8] sm:$0xff]
  %v2455 = vld [vmem:[%s3 + $0x1b0] sm:$0xff]
  %v2456 = vld [vmem:[%s3 + $0x1b8] sm:$0xff]
  %v2457 = vld [vmem:[%s3 + $0x1c0] sm:$0xff]
  %v2458 = vld [vmem:[%s2 + $0x13] sm:$0x1]
  %v2459 = vsel %vm161, %v2444, 0.0
  %2460 = vadd.xlane.f32.xlu0 %v2459
  %v2461 = vpop.xlane.xlu0 %2460
  %v2462 = vsel %vm161, %v2445, 0.0
  %2463 = vadd.xlane.f32.xlu0 %v2462
  %v2464 = vpop.xlane.xlu0 %2463
  %v2465 = vsel %vm161, %v2446, 0.0
  %2466 = vadd.xlane.f32.xlu0 %v2465
  %v2467 = vpop.xlane.xlu0 %2466
  %v2468 = vmul.f32 %v2461, %v174
  %v2469 = vmul.f32 %v2464, %v174
  %v2470 = vmul.f32 %v2467, %v174
  %v2471 = vsub.f32 %v2444, %v2468
  %v2472 = vsub.f32 %v2445, %v2469
  %v2473 = vsub.f32 %v2446, %v2470
  %v2474 = vmul.f32 %v2471, %v2471
  %v2475 = vmul.f32 %v2472, %v2472
  %v2476 = vmul.f32 %v2473, %v2473
  %v2477 = vsel %vm161, %v2474, 0.0
  %2478 = vadd.xlane.f32.xlu0 %v2477
  %v2479 = vpop.xlane.xlu0 %2478
  %v2480 = vsel %vm161, %v2475, 0.0
  %2481 = vadd.xlane.f32.xlu0 %v2480
  %v2482 = vpop.xlane.xlu0 %2481
  %v2483 = vsel %vm161, %v2476, 0.0
  %2484 = vadd.xlane.f32.xlu0 %v2483
  %v2485 = vpop.xlane.xlu0 %2484
  %v2486 = vmul.f32 %v2479, %v174
  %v2487 = vmul.f32 %v2482, %v174
  %v2488 = vmul.f32 %v2485, %v174
  %v2489 = vadd.f32 %v2486, 1e-05
  %v2490 = vadd.f32 %v2487, 1e-05
  %v2491 = vadd.f32 %v2488, 1e-05
  %v2492 = vrsqrt.pop %v2489
  %v2493 = vrsqrt.pop %v2490
  %v2494 = vrsqrt.pop %v2491
  %v2495 = vmul.f32 %v2471, %v2492
  %v2496 = vmul.f32 %v2472, %v2493
  %v2497 = vmul.f32 %v2473, %v2494
  %v2498 = vlaneseq
  %v2499 = vshrl.u32 %v2498, 7
  %v2500 = vsub.s32 0, %v2499
  %v2501 = vrot.slane %v2447, %v2500
  %v2502 = vmul.f32 %v2495, %v2501
  %v2503 = vmul.f32 %v2496, %v2501
  %v2504 = vmul.f32 %v2497, %v2501
  %v2505 = vlaneseq
  %v2506 = vshrl.u32 %v2505, 7
  %v2507 = vsub.s32 0, %v2506
  %v2508 = vrot.slane %v2448, %v2507
  %v2509 = vadd.f32 %v2502, %v2508
  %v2510 = vadd.f32 %v2503, %v2508
  %v2511 = vadd.f32 %v2504, %v2508
  %v2512 = vlaneseq
  %v2513 = vshrl.u32 %v2512, 7
  %v2514 = vsub.s32 0, %v2513
  %v2515 = vrot.slane %v2453, %v2514
  %v2517 = vsel %vm161, %v2509, 0
  %v2520 = vsel %vm161, %v2510, 0
  %v2523 = vsel %vm161, %v2511, 0
  %2525 = vmatprep.subr.mxu0 0.0
  %2526 = vmatpush1.msra.mxu0 %v2449
  %2527 = vmatprep.subr.mxu0 0.0
  %2528 = vmatpush1.msra.mxu0 %v2450
  %2529 = vmatprep.subr.mxu0 0.0
  %2530 = vmatpush1.msra.mxu0 %v2451
  %2531 = vmatprep.subr.mxu0 0.0
  %2532 = vmatpush1.msra.mxu0 %v2452
  %2533 = vmatprep.subr.mxu0 0.0
  %2534 = vmatpush1.msra.mxu0 0.0
  %2535 = vmatprep.subr.mxu0 0.0
  %2536 = vmatpush1.msra.mxu0 0.0
  %2537 = vmatprep.subr.mxu0 0.0
  %2538 = vmatpush1.msra.mxu0 0.0
  %2539 = vmatprep.subr.mxu0 0.0
  %2540 = vmatpush1.msra.mxu0 0.0
  %2541 = vmatprep.subr.mxu0 0.0
  %2542 = vmatpush1.msra.mxu0 0.0
  %2543 = vmatprep.subr.mxu0 0.0
  %2544 = vmatpush1.msra.mxu0 0.0
  %2545 = vmatprep.subr.mxu0 0.0
  %2546 = vmatpush1.msra.mxu0 0.0
  %2547 = vmatprep.subr.mxu0 0.0
  %2548 = vmatpush1.msra.mxu0 0.0
  %2549 = vmatprep.subr.mxu0 0.0
  %2550 = vmatpush1.msra.mxu0 0.0
  %2551 = vmatprep.subr.mxu0 0.0
  %2552 = vmatpush1.msra.mxu0 0.0
  %2553 = vmatprep.subr.mxu0 0.0
  %2554 = vmatpush1.msra.mxu0 0.0
  %2555 = vmatprep.subr.mxu0 0.0
  %2556 = vmatpush1.msra.mxu0 0.0
  %2557 = vmatprep.subr.mxu0 0.0
  %2558 = vmatpush1.msra.mxu0 0.0
  %2559 = vmatprep.subr.mxu0 0.0
  %2560 = vmatpush1.msra.mxu0 0.0
  %2561 = vmatprep.subr.mxu0 0.0
  %2562 = vmatpush1.msra.mxu0 0.0
  %2563 = vmatprep.subr.mxu0 0.0
  %2564 = vmatpush1.msra.mxu0 0.0
  %2565 = vmatprep.subr.mxu0 0.0
  %2566 = vmatpush1.msra.mxu0 0.0
  %2567 = vmatprep.subr.mxu0 0.0
  %2568 = vmatpush1.msra.mxu0 0.0
  %2569 = vmatprep.subr.mxu0 0.0
  %2570 = vmatpush1.msra.mxu0 0.0
  %2571 = vmatprep.subr.mxu0 0.0
  %2572 = vmatpush1.msra.mxu0 0.0
  %2573 = vmatprep.subr.mxu0 0.0
  %2574 = vmatpush1.msra.mxu0 0.0
  %2575 = vmatprep.subr.mxu0 0.0
  %2576 = vmatpush1.msra.mxu0 0.0
  %2577 = vmatprep.subr.mxu0 0.0
  %2578 = vmatpush1.msra.mxu0 0.0
  %2579 = vmatprep.subr.mxu0 0.0
  %2580 = vmatpush1.msra.mxu0 0.0
  %2581 = vmatprep.subr.mxu0 0.0
  %2582 = vmatpush1.msra.mxu0 0.0
  %2583 = vmatprep.subr.mxu0 0.0
  %2584 = vmatpush1.msra.mxu0 0.0
  %2585 = vmatprep.subr.mxu0 0.0
  %2586 = vmatpush1.msra.mxu0 0.0
  %2587 = vmatprep.subr.mxu0 0.0
  %2588 = vmatpush1.msra.mxu0 0.0
  %2589 = vmatprep.mubr.f32.mxu0 0.0
  %2590 = vmatmul.mubr.f32.gmra.mrb[0].mxu0 %v2517
  %v2591 = vpop.f32.mrb[0].mxu0
  %v2592 = vadd.f32 %v2515, %v2591
  %v2593 = vpop.f32.mrb[0].mxu0
  %2594 = vmatprep.mubr.f32.mxu0 0.0
  %2595 = vmatmul.mubr.f32.gmra.mrb[0].mxu0 %v2520
  %v2596 = vpop.f32.mrb[0].mxu0
  %v2597 = vadd.f32 %v2515, %v2596
  %v2598 = vpop.f32.mrb[0].mxu0
  %2599 = vmatprep.mubr.f32.mxu0 0.0
  %2600 = vmatmul.mubr.f32.gmra.mrb[0].mxu0 %v2523
  %v2601 = vpop.f32.mrb[0].mxu0
  %v2602 = vadd.f32 %v2515, %v2601
  %v2603 = vpop.f32.mrb[0].mxu0
  %2604 = vdwg.mxu0
  %v2605 = vlaneseq
  %v2606 = vshrl.u32 %v2605, 7
  %v2607 = vsub.s32 0, %v2606
  %v2608 = vrot.slane %v2458, %v2607
  %v2609 = vadd.f32 %v2608, 0.0
  %2613 = vrot.lane.b32.xlu0 %v2592, 96
  %v2614 = vpop.permute.xlu0 %2613
  %2615 = vrot.lane.b32.xlu0 %v2597, 96
  %v2616 = vpop.permute.xlu0 %2615
  %2617 = vrot.lane.b32.xlu0 %v2602, 96
  %v2618 = vpop.permute.xlu0 %2617
  %v2619 = vsel %vm349, %v2592, 0
  %v2621 = vsel %vm349, %v2597, 0
  %v2623 = vsel %vm349, %v2602, 0
  %v2625 = vsel %vm349, %v2614, 0
  %v2627 = vsel %vm349, %v2616, 0
  %v2629 = vsel %vm349, %v2618, 0
  %2631 = vmatprep.subr.mxu0 0.0
  %2632 = vmatpush1.xpose.msra.mxu0 %v2625
  %2633 = vmatprep.subr.mxu0 0.0
  %2634 = vmatpush1.xpose.msra.mxu0 %v2627
  %2635 = vmatprep.subr.mxu0 0.0
  %2636 = vmatpush1.xpose.msra.mxu0 %v2629
  %2637 = vmatprep.subr.mxu0 0.0
  %2638 = vmatpush1.xpose.msra.mxu0 0.0
  %2639 = vmatprep.subr.mxu0 0.0
  %2640 = vmatpush1.xpose.msra.mxu0 0.0
  %2641 = vmatprep.subr.mxu0 0.0
  %2642 = vmatpush1.xpose.msra.mxu0 0.0
  %2643 = vmatprep.subr.mxu0 0.0
  %2644 = vmatpush1.xpose.msra.mxu0 0.0
  %2645 = vmatprep.subr.mxu0 0.0
  %2646 = vmatpush1.xpose.msra.mxu0 0.0
  %2647 = vmatprep.subr.mxu0 0.0
  %2648 = vmatpush1.xpose.msra.mxu0 0.0
  %2649 = vmatprep.subr.mxu0 0.0
  %2650 = vmatpush1.xpose.msra.mxu0 0.0
  %2651 = vmatprep.subr.mxu0 0.0
  %2652 = vmatpush1.xpose.msra.mxu0 0.0
  %2653 = vmatprep.subr.mxu0 0.0
  %2654 = vmatpush1.xpose.msra.mxu0 0.0
  %2655 = vmatprep.subr.mxu0 0.0
  %2656 = vmatpush1.xpose.msra.mxu0 0.0
  %2657 = vmatprep.subr.mxu0 0.0
  %2658 = vmatpush1.xpose.msra.mxu0 0.0
  %2659 = vmatprep.subr.mxu0 0.0
  %2660 = vmatpush1.xpose.msra.mxu0 0.0
  %2661 = vmatprep.subr.mxu0 0.0
  %2662 = vmatpush1.xpose.msra.mxu0 0.0
  %2663 = vmatprep.subr.mxu0 0.0
  %2664 = vmatpush1.xpose.msra.mxu0 0.0
  %2665 = vmatprep.subr.mxu0 0.0
  %2666 = vmatpush1.xpose.msra.mxu0 0.0
  %2667 = vmatprep.subr.mxu0 0.0
  %2668 = vmatpush1.xpose.msra.mxu0 0.0
  %2669 = vmatprep.subr.mxu0 0.0
  %2670 = vmatpush1.xpose.msra.mxu0 0.0
  %2671 = vmatprep.subr.mxu0 0.0
  %2672 = vmatpush1.xpose.msra.mxu0 0.0
  %2673 = vmatprep.subr.mxu0 0.0
  %2674 = vmatpush1.xpose.msra.mxu0 0.0
  %2675 = vmatprep.subr.mxu0 0.0
  %2676 = vmatpush1.xpose.msra.mxu0 0.0
  %2677 = vmatprep.subr.mxu0 0.0
  %2678 = vmatpush1.xpose.msra.mxu0 0.0
  %2679 = vmatprep.subr.mxu0 0.0
  %2680 = vmatpush1.xpose.msra.mxu0 0.0
  %2681 = vmatprep.subr.mxu0 0.0
  %2682 = vmatpush1.xpose.msra.mxu0 0.0
  %2683 = vmatprep.subr.mxu0 0.0
  %2684 = vmatpush1.xpose.msra.mxu0 0.0
  %2685 = vmatprep.subr.mxu0 0.0
  %2686 = vmatpush1.xpose.msra.mxu0 0.0
  %2687 = vmatprep.subr.mxu0 0.0
  %2688 = vmatpush1.xpose.msra.mxu0 0.0
  %2689 = vmatprep.subr.mxu0 0.0
  %2690 = vmatpush1.xpose.msra.mxu0 0.0
  %2691 = vmatprep.subr.mxu0 0.0
  %2692 = vmatpush1.xpose.msra.mxu0 0.0
  %2693 = vmatprep.subr.mxu0 0.0
  %2694 = vmatpush1.xpose.msra.mxu0 0.0
  %2695 = vmatprep.mubr.f32.mxu0 0.0
  %2696 = vmatmul.mubr.f32.gmra.mrb[0].mxu0 %v2619
  %v2697 = vpop.f32.mrb[0].mxu0
  %v2698 = vadd.f32 0.0, %v2697
  %v2699 = vpop.f32.mrb[0].mxu0
  %2700 = vmatprep.mubr.f32.mxu0 0.0
  %2701 = vmatmul.mubr.f32.gmra.mrb[0].mxu0 %v2621
  %v2702 = vpop.f32.mrb[0].mxu0
  %v2703 = vadd.f32 0.0, %v2702
  %v2704 = vpop.f32.mrb[0].mxu0
  %2705 = vmatprep.mubr.f32.mxu0 0.0
  %2706 = vmatmul.mubr.f32.gmra.mrb[0].mxu0 %v2623
  %v2707 = vpop.f32.mrb[0].mxu0
  %v2708 = vadd.f32 0.0, %v2707
  %v2709 = vpop.f32.mrb[0].mxu0
  %2710 = vdwg.mxu0
  %v2711 = vmul.f32 %v2698, 0.25
  %v2712 = vmul.f32 %v2703, 0.25
  %v2713 = vmul.f32 %v2708, 0.25
  %vm2714 = vcmask 195584
  %v2715 = vsel %vm2714, %v2711, -inf
  %2716 = vmax.xlane.f32.xlu0 %v2715
  %v2717 = vpop.xlane.xlu0 %2716
  %v2718 = vsel %vm2714, %v2712, -inf
  %2719 = vmax.xlane.f32.xlu0 %v2718
  %v2720 = vpop.xlane.xlu0 %2719
  %v2721 = vsel %vm2714, %v2713, -inf
  %2722 = vmax.xlane.f32.xlu0 %v2721
  %v2723 = vpop.xlane.xlu0 %2722
  %v2724 = vsub.f32 %v2711, %v2717
  %v2725 = vsub.f32 %v2712, %v2720
  %v2726 = vsub.f32 %v2713, %v2723
  %v2727 = vmul.f32 %v2724, 1.442695
  %v2728 = vpow.pop %v2727
  %v2729 = vmul.f32 %v2725, 1.442695
  %v2730 = vpow.pop %v2729
  %v2731 = vmul.f32 %v2726, 1.442695
  %v2732 = vpow.pop %v2731
  %v2733 = vsel %vm2714, %v2728, 0.0
  %2734 = vadd.xlane.f32.xlu0 %v2733
  %v2735 = vpop.xlane.xlu0 %2734
  %v2736 = vsel %vm2714, %v2730, 0.0
  %2737 = vadd.xlane.f32.xlu0 %v2736
  %v2738 = vpop.xlane.xlu0 %2737
  %v2739 = vsel %vm2714, %v2732, 0.0
  %2740 = vadd.xlane.f32.xlu0 %v2739
  %v2741 = vpop.xlane.xlu0 %2740
  %v2742 = vrcp.pop %v2735
  %v2743 = vrcp.pop %v2738
  %v2744 = vrcp.pop %v2741
  %v2745 = vmul.f32 %v2728, %v2742
  %v2746 = vmul.f32 %v2730, %v2743
  %v2747 = vmul.f32 %v2732, %v2744
  %2748 = vrot.lane.b32.xlu0 %v2592, 64
  %v2749 = vpop.permute.xlu0 %2748
  %2750 = vrot.lane.b32.xlu0 %v2597, 64
  %v2751 = vpop.permute.xlu0 %2750
  %2752 = vrot.lane.b32.xlu0 %v2602, 64
  %v2753 = vpop.permute.xlu0 %2752
  %v2758 = vsel %vm2714, %v2745, 0
  %v2761 = vsel %vm2714, %v2746, 0
  %v2764 = vsel %vm2714, %v2747, 0
  %2766 = vmatprep.subr.mxu0 0.0
  %2767 = vmatpush1.msra.mxu0 %v2749
  %2768 = vmatprep.subr.mxu0 0.0
  %2769 = vmatpush1.msra.mxu0 %v2751
  %2770 = vmatprep.subr.mxu0 0.0
  %2771 = vmatpush1.msra.mxu0 %v2753
  %2772 = vmatprep.subr.mxu0 0.0
  %2773 = vmatpush1.msra.mxu0 0.0
  %2774 = vmatprep.subr.mxu0 0.0
  %2775 = vmatpush1.msra.mxu0 0.0
  %2776 = vmatprep.subr.mxu0 0.0
  %2777 = vmatpush1.msra.mxu0 0.0
  %2778 = vmatprep.subr.mxu0 0.0
  %2779 = vmatpush1.msra.mxu0 0.0
  %2780 = vmatprep.subr.mxu0 0.0
  %2781 = vmatpush1.msra.mxu0 0.0
  %2782 = vmatprep.subr.mxu0 0.0
  %2783 = vmatpush1.msra.mxu0 0.0
  %2784 = vmatprep.subr.mxu0 0.0
  %2785 = vmatpush1.msra.mxu0 0.0
  %2786 = vmatprep.subr.mxu0 0.0
  %2787 = vmatpush1.msra.mxu0 0.0
  %2788 = vmatprep.subr.mxu0 0.0
  %2789 = vmatpush1.msra.mxu0 0.0
  %2790 = vmatprep.subr.mxu0 0.0
  %2791 = vmatpush1.msra.mxu0 0.0
  %2792 = vmatprep.subr.mxu0 0.0
  %2793 = vmatpush1.msra.mxu0 0.0
  %2794 = vmatprep.subr.mxu0 0.0
  %2795 = vmatpush1.msra.mxu0 0.0
  %2796 = vmatprep.subr.mxu0 0.0
  %2797 = vmatpush1.msra.mxu0 0.0
  %2798 = vmatprep.subr.mxu0 0.0
  %2799 = vmatpush1.msra.mxu0 0.0
  %2800 = vmatprep.subr.mxu0 0.0
  %2801 = vmatpush1.msra.mxu0 0.0
  %2802 = vmatprep.subr.mxu0 0.0
  %2803 = vmatpush1.msra.mxu0 0.0
  %2804 = vmatprep.subr.mxu0 0.0
  %2805 = vmatpush1.msra.mxu0 0.0
  %2806 = vmatprep.subr.mxu0 0.0
  %2807 = vmatpush1.msra.mxu0 0.0
  %2808 = vmatprep.subr.mxu0 0.0
  %2809 = vmatpush1.msra.mxu0 0.0
  %2810 = vmatprep.subr.mxu0 0.0
  %2811 = vmatpush1.msra.mxu0 0.0
  %2812 = vmatprep.subr.mxu0 0.0
  %2813 = vmatpush1.msra.mxu0 0.0
  %2814 = vmatprep.subr.mxu0 0.0
  %2815 = vmatpush1.msra.mxu0 0.0
  %2816 = vmatprep.subr.mxu0 0.0
  %2817 = vmatpush1.msra.mxu0 0.0
  %2818 = vmatprep.subr.mxu0 0.0
  %2819 = vmatpush1.msra.mxu0 0.0
  %2820 = vmatprep.subr.mxu0 0.0
  %2821 = vmatpush1.msra.mxu0 0.0
  %2822 = vmatprep.subr.mxu0 0.0
  %2823 = vmatpush1.msra.mxu0 0.0
  %2824 = vmatprep.subr.mxu0 0.0
  %2825 = vmatpush1.msra.mxu0 0.0
  %2826 = vmatprep.subr.mxu0 0.0
  %2827 = vmatpush1.msra.mxu0 0.0
  %2828 = vmatprep.subr.mxu0 0.0
  %2829 = vmatpush1.msra.mxu0 0.0
  %2830 = vmatprep.mubr.f32.mxu0 0.0
  %2831 = vmatmul.mubr.f32.gmra.mrb[0].mxu0 %v2758
  %v2832 = vpop.f32.mrb[0].mxu0
  %v2833 = vadd.f32 0.0, %v2832
  %v2834 = vpop.f32.mrb[0].mxu0
  %2835 = vmatprep.mubr.f32.mxu0 0.0
  %2836 = vmatmul.mubr.f32.gmra.mrb[0].mxu0 %v2761
  %v2837 = vpop.f32.mrb[0].mxu0
  %v2838 = vadd.f32 0.0, %v2837
  %v2839 = vpop.f32.mrb[0].mxu0
  %2840 = vmatprep.mubr.f32.mxu0 0.0
  %2841 = vmatmul.mubr.f32.gmra.mrb[0].mxu0 %v2764
  %v2842 = vpop.f32.mrb[0].mxu0
  %v2843 = vadd.f32 0.0, %v2842
  %v2844 = vpop.f32.mrb[0].mxu0
  %2845 = vdwg.mxu0
  %v2847 = vsel %vm349, %v2833, 0
  %v2850 = vsel %vm349, %v2838, 0
  %v2853 = vsel %vm349, %v2843, 0
  %2855 = vmatprep.subr.mxu0 0.0
  %2856 = vmatpush1.msra.mxu0 %v2454
  %2857 = vmatprep.subr.mxu0 0.0
  %2858 = vmatpush1.msra.mxu0 %v2455
  %2859 = vmatprep.subr.mxu0 0.0
  %2860 = vmatpush1.msra.mxu0 0.0
  %2861 = vmatprep.subr.mxu0 0.0
  %2862 = vmatpush1.msra.mxu0 0.0
  %2863 = vmatprep.subr.mxu0 0.0
  %2864 = vmatpush1.msra.mxu0 0.0
  %2865 = vmatprep.subr.mxu0 0.0
  %2866 = vmatpush1.msra.mxu0 0.0
  %2867 = vmatprep.subr.mxu0 0.0
  %2868 = vmatpush1.msra.mxu0 0.0
  %2869 = vmatprep.subr.mxu0 0.0
  %2870 = vmatpush1.msra.mxu0 0.0
  %2871 = vmatprep.subr.mxu0 0.0
  %2872 = vmatpush1.msra.mxu0 0.0
  %2873 = vmatprep.subr.mxu0 0.0
  %2874 = vmatpush1.msra.mxu0 0.0
  %2875 = vmatprep.subr.mxu0 0.0
  %2876 = vmatpush1.msra.mxu0 0.0
  %2877 = vmatprep.subr.mxu0 0.0
  %2878 = vmatpush1.msra.mxu0 0.0
  %2879 = vmatprep.subr.mxu0 0.0
  %2880 = vmatpush1.msra.mxu0 0.0
  %2881 = vmatprep.subr.mxu0 0.0
  %2882 = vmatpush1.msra.mxu0 0.0
  %2883 = vmatprep.subr.mxu0 0.0
  %2884 = vmatpush1.msra.mxu0 0.0
  %2885 = vmatprep.subr.mxu0 0.0
  %2886 = vmatpush1.msra.mxu0 0.0
  %2887 = vmatprep.subr.mxu0 0.0
  %2888 = vmatpush1.msra.mxu0 0.0
  %2889 = vmatprep.subr.mxu0 0.0
  %2890 = vmatpush1.msra.mxu0 0.0
  %2891 = vmatprep.subr.mxu0 0.0
  %2892 = vmatpush1.msra.mxu0 0.0
  %2893 = vmatprep.subr.mxu0 0.0
  %2894 = vmatpush1.msra.mxu0 0.0
  %2895 = vmatprep.subr.mxu0 0.0
  %2896 = vmatpush1.msra.mxu0 0.0
  %2897 = vmatprep.subr.mxu0 0.0
  %2898 = vmatpush1.msra.mxu0 0.0
  %2899 = vmatprep.subr.mxu0 0.0
  %2900 = vmatpush1.msra.mxu0 0.0
  %2901 = vmatprep.subr.mxu0 0.0
  %2902 = vmatpush1.msra.mxu0 0.0
  %2903 = vmatprep.subr.mxu0 0.0
  %2904 = vmatpush1.msra.mxu0 0.0
  %2905 = vmatprep.subr.mxu0 0.0
  %2906 = vmatpush1.msra.mxu0 0.0
  %2907 = vmatprep.subr.mxu0 0.0
  %2908 = vmatpush1.msra.mxu0 0.0
  %2909 = vmatprep.subr.mxu0 0.0
  %2910 = vmatpush1.msra.mxu0 0.0
  %2911 = vmatprep.subr.mxu0 0.0
  %2912 = vmatpush1.msra.mxu0 0.0
  %2913 = vmatprep.subr.mxu0 0.0
  %2914 = vmatpush1.msra.mxu0 0.0
  %2915 = vmatprep.subr.mxu0 0.0
  %2916 = vmatpush1.msra.mxu0 0.0
  %2917 = vmatprep.subr.mxu0 0.0
  %2918 = vmatpush1.msra.mxu0 0.0
  %2919 = vmatprep.mubr.f32.mxu0 0.0
  %2920 = vmatmul.mubr.f32.gmra.mrb[0].mxu0 %v2847
  %v2921 = vpop.f32.mrb[0].mxu0
  %v2922 = vadd.f32 0.0, %v2921
  %v2923 = vpop.f32.mrb[0].mxu0
  %2924 = vmatprep.mubr.f32.mxu0 0.0
  %2925 = vmatmul.mubr.f32.gmra.mrb[0].mxu0 %v2850
  %v2926 = vpop.f32.mrb[0].mxu0
  %v2927 = vadd.f32 0.0, %v2926
  %v2928 = vpop.f32.mrb[0].mxu0
  %2929 = vmatprep.mubr.f32.mxu0 0.0
  %2930 = vmatmul.mubr.f32.gmra.mrb[0].mxu0 %v2853
  %v2931 = vpop.f32.mrb[0].mxu0
  %v2932 = vadd.f32 0.0, %v2931
  %v2933 = vpop.f32.mrb[0].mxu0
  %2934 = vdwg.mxu0
  %v2935 = vadd.f32 %v2609, %v2922
  %v2936 = vadd.f32 %v2609, %v2927
  %v2937 = vadd.f32 %v2609, %v2932
  %2938 = vrot.lane.b32.xlu0 %v2592, 112
  %v2939 = vpop.permute.xlu0 %2938
  %2940 = vrot.lane.b32.xlu0 %v2597, 112
  %v2941 = vpop.permute.xlu0 %2940
  %2942 = vrot.lane.b32.xlu0 %v2602, 112
  %v2943 = vpop.permute.xlu0 %2942
  %2944 = vrot.lane.b32.xlu0 %v2592, 80
  %v2945 = vpop.permute.xlu0 %2944
  %2946 = vrot.lane.b32.xlu0 %v2597, 80
  %v2947 = vpop.permute.xlu0 %2946
  %2948 = vrot.lane.b32.xlu0 %v2602, 80
  %v2949 = vpop.permute.xlu0 %2948
  %v2950 = vsel %vm349, %v2939, 0
  %v2952 = vsel %vm349, %v2941, 0
  %v2954 = vsel %vm349, %v2943, 0
  %v2956 = vsel %vm349, %v2945, 0
  %v2958 = vsel %vm349, %v2947, 0
  %v2960 = vsel %vm349, %v2949, 0
  %2962 = vmatprep.subr.mxu0 0.0
  %2963 = vmatpush1.xpose.msra.mxu0 %v2956
  %2964 = vmatprep.subr.mxu0 0.0
  %2965 = vmatpush1.xpose.msra.mxu0 %v2958
  %2966 = vmatprep.subr.mxu0 0.0
  %2967 = vmatpush1.xpose.msra.mxu0 %v2960
  %2968 = vmatprep.subr.mxu0 0.0
  %2969 = vmatpush1.xpose.msra.mxu0 0.0
  %2970 = vmatprep.subr.mxu0 0.0
  %2971 = vmatpush1.xpose.msra.mxu0 0.0
  %2972 = vmatprep.subr.mxu0 0.0
  %2973 = vmatpush1.xpose.msra.mxu0 0.0
  %2974 = vmatprep.subr.mxu0 0.0
  %2975 = vmatpush1.xpose.msra.mxu0 0.0
  %2976 = vmatprep.subr.mxu0 0.0
  %2977 = vmatpush1.xpose.msra.mxu0 0.0
  %2978 = vmatprep.subr.mxu0 0.0
  %2979 = vmatpush1.xpose.msra.mxu0 0.0
  %2980 = vmatprep.subr.mxu0 0.0
  %2981 = vmatpush1.xpose.msra.mxu0 0.0
  %2982 = vmatprep.subr.mxu0 0.0
  %2983 = vmatpush1.xpose.msra.mxu0 0.0
  %2984 = vmatprep.subr.mxu0 0.0
  %2985 = vmatpush1.xpose.msra.mxu0 0.0
  %2986 = vmatprep.subr.mxu0 0.0
  %2987 = vmatpush1.xpose.msra.mxu0 0.0
  %2988 = vmatprep.subr.mxu0 0.0
  %2989 = vmatpush1.xpose.msra.mxu0 0.0
  %2990 = vmatprep.subr.mxu0 0.0
  %2991 = vmatpush1.xpose.msra.mxu0 0.0
  %2992 = vmatprep.subr.mxu0 0.0
  %2993 = vmatpush1.xpose.msra.mxu0 0.0
  %2994 = vmatprep.subr.mxu0 0.0
  %2995 = vmatpush1.xpose.msra.mxu0 0.0
  %2996 = vmatprep.subr.mxu0 0.0
  %2997 = vmatpush1.xpose.msra.mxu0 0.0
  %2998 = vmatprep.subr.mxu0 0.0
  %2999 = vmatpush1.xpose.msra.mxu0 0.0
  %3000 = vmatprep.subr.mxu0 0.0
  %3001 = vmatpush1.xpose.msra.mxu0 0.0
  %3002 = vmatprep.subr.mxu0 0.0
  %3003 = vmatpush1.xpose.msra.mxu0 0.0
  %3004 = vmatprep.subr.mxu0 0.0
  %3005 = vmatpush1.xpose.msra.mxu0 0.0
  %3006 = vmatprep.subr.mxu0 0.0
  %3007 = vmatpush1.xpose.msra.mxu0 0.0
  %3008 = vmatprep.subr.mxu0 0.0
  %3009 = vmatpush1.xpose.msra.mxu0 0.0
  %3010 = vmatprep.subr.mxu0 0.0
  %3011 = vmatpush1.xpose.msra.mxu0 0.0
  %3012 = vmatprep.subr.mxu0 0.0
  %3013 = vmatpush1.xpose.msra.mxu0 0.0
  %3014 = vmatprep.subr.mxu0 0.0
  %3015 = vmatpush1.xpose.msra.mxu0 0.0
  %3016 = vmatprep.subr.mxu0 0.0
  %3017 = vmatpush1.xpose.msra.mxu0 0.0
  %3018 = vmatprep.subr.mxu0 0.0
  %3019 = vmatpush1.xpose.msra.mxu0 0.0
  %3020 = vmatprep.subr.mxu0 0.0
  %3021 = vmatpush1.xpose.msra.mxu0 0.0
  %3022 = vmatprep.subr.mxu0 0.0
  %3023 = vmatpush1.xpose.msra.mxu0 0.0
  %3024 = vmatprep.subr.mxu0 0.0
  %3025 = vmatpush1.xpose.msra.mxu0 0.0
  %3026 = vmatprep.mubr.f32.mxu0 0.0
  %3027 = vmatmul.mubr.f32.gmra.mrb[0].mxu0 %v2950
  %v3028 = vpop.f32.mrb[0].mxu0
  %v3029 = vadd.f32 0.0, %v3028
  %v3030 = vpop.f32.mrb[0].mxu0
  %3031 = vmatprep.mubr.f32.mxu0 0.0
  %3032 = vmatmul.mubr.f32.gmra.mrb[0].mxu0 %v2952
  %v3033 = vpop.f32.mrb[0].mxu0
  %v3034 = vadd.f32 0.0, %v3033
  %v3035 = vpop.f32.mrb[0].mxu0
  %3036 = vmatprep.mubr.f32.mxu0 0.0
  %3037 = vmatmul.mubr.f32.gmra.mrb[0].mxu0 %v2954
  %v3038 = vpop.f32.mrb[0].mxu0
  %v3039 = vadd.f32 0.0, %v3038
  %v3040 = vpop.f32.mrb[0].mxu0
  %3041 = vdwg.mxu0
  %v3042 = vmul.f32 %v3029, 0.25
  %v3043 = vmul.f32 %v3034, 0.25
  %v3044 = vmul.f32 %v3039, 0.25
  %v3045 = vsel %vm2714, %v3042, -inf
  %3046 = vmax.xlane.f32.xlu0 %v3045
  %v3047 = vpop.xlane.xlu0 %3046
  %v3048 = vsel %vm2714, %v3043, -inf
  %3049 = vmax.xlane.f32.xlu0 %v3048
  %v3050 = vpop.xlane.xlu0 %3049
  %v3051 = vsel %vm2714, %v3044, -inf
  %3052 = vmax.xlane.f32.xlu0 %v3051
  %v3053 = vpop.xlane.xlu0 %3052
  %v3054 = vsub.f32 %v3042, %v3047
  %v3055 = vsub.f32 %v3043, %v3050
  %v3056 = vsub.f32 %v3044, %v3053
  %v3057 = vmul.f32 %v3054, 1.442695
  %v3058 = vpow.pop %v3057
  %v3059 = vmul.f32 %v3055, 1.442695
  %v3060 = vpow.pop %v3059
  %v3061 = vmul.f32 %v3056, 1.442695
  %v3062 = vpow.pop %v3061
  %v3063 = vsel %vm2714, %v3058, 0.0
  %3064 = vadd.xlane.f32.xlu0 %v3063
  %v3065 = vpop.xlane.xlu0 %3064
  %v3066 = vsel %vm2714, %v3060, 0.0
  %3067 = vadd.xlane.f32.xlu0 %v3066
  %v3068 = vpop.xlane.xlu0 %3067
  %v3069 = vsel %vm2714, %v3062, 0.0
  %3070 = vadd.xlane.f32.xlu0 %v3069
  %v3071 = vpop.xlane.xlu0 %3070
  %v3072 = vrcp.pop %v3065
  %v3073 = vrcp.pop %v3068
  %v3074 = vrcp.pop %v3071
  %v3075 = vmul.f32 %v3058, %v3072
  %v3076 = vmul.f32 %v3060, %v3073
  %v3077 = vmul.f32 %v3062, %v3074
  %3078 = vrot.lane.b32.xlu0 %v2592, 48
  %v3079 = vpop.permute.xlu0 %3078
  %3080 = vrot.lane.b32.xlu0 %v2597, 48
  %v3081 = vpop.permute.xlu0 %3080
  %3082 = vrot.lane.b32.xlu0 %v2602, 48
  %v3083 = vpop.permute.xlu0 %3082
  %v3088 = vsel %vm2714, %v3075, 0
  %v3091 = vsel %vm2714, %v3076, 0
  %v3094 = vsel %vm2714, %v3077, 0
  %3096 = vmatprep.subr.mxu0 0.0
  %3097 = vmatpush1.msra.mxu0 %v3079
  %3098 = vmatprep.subr.mxu0 0.0
  %3099 = vmatpush1.msra.mxu0 %v3081
  %3100 = vmatprep.subr.mxu0 0.0
  %3101 = vmatpush1.msra.mxu0 %v3083
  %3102 = vmatprep.subr.mxu0 0.0
  %3103 = vmatpush1.msra.mxu0 0.0
  %3104 = vmatprep.subr.mxu0 0.0
  %3105 = vmatpush1.msra.mxu0 0.0
  %3106 = vmatprep.subr.mxu0 0.0
  %3107 = vmatpush1.msra.mxu0 0.0
  %3108 = vmatprep.subr.mxu0 0.0
  %3109 = vmatpush1.msra.mxu0 0.0
  %3110 = vmatprep.subr.mxu0 0.0
  %3111 = vmatpush1.msra.mxu0 0.0
  %3112 = vmatprep.subr.mxu0 0.0
  %3113 = vmatpush1.msra.mxu0 0.0
  %3114 = vmatprep.subr.mxu0 0.0
  %3115 = vmatpush1.msra.mxu0 0.0
  %3116 = vmatprep.subr.mxu0 0.0
  %3117 = vmatpush1.msra.mxu0 0.0
  %3118 = vmatprep.subr.mxu0 0.0
  %3119 = vmatpush1.msra.mxu0 0.0
  %3120 = vmatprep.subr.mxu0 0.0
  %3121 = vmatpush1.msra.mxu0 0.0
  %3122 = vmatprep.subr.mxu0 0.0
  %3123 = vmatpush1.msra.mxu0 0.0
  %3124 = vmatprep.subr.mxu0 0.0
  %3125 = vmatpush1.msra.mxu0 0.0
  %3126 = vmatprep.subr.mxu0 0.0
  %3127 = vmatpush1.msra.mxu0 0.0
  %3128 = vmatprep.subr.mxu0 0.0
  %3129 = vmatpush1.msra.mxu0 0.0
  %3130 = vmatprep.subr.mxu0 0.0
  %3131 = vmatpush1.msra.mxu0 0.0
  %3132 = vmatprep.subr.mxu0 0.0
  %3133 = vmatpush1.msra.mxu0 0.0
  %3134 = vmatprep.subr.mxu0 0.0
  %3135 = vmatpush1.msra.mxu0 0.0
  %3136 = vmatprep.subr.mxu0 0.0
  %3137 = vmatpush1.msra.mxu0 0.0
  %3138 = vmatprep.subr.mxu0 0.0
  %3139 = vmatpush1.msra.mxu0 0.0
  %3140 = vmatprep.subr.mxu0 0.0
  %3141 = vmatpush1.msra.mxu0 0.0
  %3142 = vmatprep.subr.mxu0 0.0
  %3143 = vmatpush1.msra.mxu0 0.0
  %3144 = vmatprep.subr.mxu0 0.0
  %3145 = vmatpush1.msra.mxu0 0.0
  %3146 = vmatprep.subr.mxu0 0.0
  %3147 = vmatpush1.msra.mxu0 0.0
  %3148 = vmatprep.subr.mxu0 0.0
  %3149 = vmatpush1.msra.mxu0 0.0
  %3150 = vmatprep.subr.mxu0 0.0
  %3151 = vmatpush1.msra.mxu0 0.0
  %3152 = vmatprep.subr.mxu0 0.0
  %3153 = vmatpush1.msra.mxu0 0.0
  %3154 = vmatprep.subr.mxu0 0.0
  %3155 = vmatpush1.msra.mxu0 0.0
  %3156 = vmatprep.subr.mxu0 0.0
  %3157 = vmatpush1.msra.mxu0 0.0
  %3158 = vmatprep.subr.mxu0 0.0
  %3159 = vmatpush1.msra.mxu0 0.0
  %3160 = vmatprep.mubr.f32.mxu0 0.0
  %3161 = vmatmul.mubr.f32.gmra.mrb[0].mxu0 %v3088
  %v3162 = vpop.f32.mrb[0].mxu0
  %v3163 = vadd.f32 0.0, %v3162
  %v3164 = vpop.f32.mrb[0].mxu0
  %3165 = vmatprep.mubr.f32.mxu0 0.0
  %3166 = vmatmul.mubr.f32.gmra.mrb[0].mxu0 %v3091
  %v3167 = vpop.f32.mrb[0].mxu0
  %v3168 = vadd.f32 0.0, %v3167
  %v3169 = vpop.f32.mrb[0].mxu0
  %3170 = vmatprep.mubr.f32.mxu0 0.0
  %3171 = vmatmul.mubr.f32.gmra.mrb[0].mxu0 %v3094
  %v3172 = vpop.f32.mrb[0].mxu0
  %v3173 = vadd.f32 0.0, %v3172
  %v3174 = vpop.f32.mrb[0].mxu0
  %3175 = vdwg.mxu0
  %v3177 = vsel %vm349, %v3163, 0
  %v3180 = vsel %vm349, %v3168, 0
  %v3183 = vsel %vm349, %v3173, 0
  %3185 = vmatprep.subr.mxu0 0.0
  %3186 = vmatpush1.msra.mxu0 %v2456
  %3187 = vmatprep.subr.mxu0 0.0
  %3188 = vmatpush1.msra.mxu0 %v2457
  %3189 = vmatprep.subr.mxu0 0.0
  %3190 = vmatpush1.msra.mxu0 0.0
  %3191 = vmatprep.subr.mxu0 0.0
  %3192 = vmatpush1.msra.mxu0 0.0
  %3193 = vmatprep.subr.mxu0 0.0
  %3194 = vmatpush1.msra.mxu0 0.0
  %3195 = vmatprep.subr.mxu0 0.0
  %3196 = vmatpush1.msra.mxu0 0.0
  %3197 = vmatprep.subr.mxu0 0.0
  %3198 = vmatpush1.msra.mxu0 0.0
  %3199 = vmatprep.subr.mxu0 0.0
  %3200 = vmatpush1.msra.mxu0 0.0
  %3201 = vmatprep.subr.mxu0 0.0
  %3202 = vmatpush1.msra.mxu0 0.0
  %3203 = vmatprep.subr.mxu0 0.0
  %3204 = vmatpush1.msra.mxu0 0.0
  %3205 = vmatprep.subr.mxu0 0.0
  %3206 = vmatpush1.msra.mxu0 0.0
  %3207 = vmatprep.subr.mxu0 0.0
  %3208 = vmatpush1.msra.mxu0 0.0
  %3209 = vmatprep.subr.mxu0 0.0
  %3210 = vmatpush1.msra.mxu0 0.0
  %3211 = vmatprep.subr.mxu0 0.0
  %3212 = vmatpush1.msra.mxu0 0.0
  %3213 = vmatprep.subr.mxu0 0.0
  %3214 = vmatpush1.msra.mxu0 0.0
  %3215 = vmatprep.subr.mxu0 0.0
  %3216 = vmatpush1.msra.mxu0 0.0
  %3217 = vmatprep.subr.mxu0 0.0
  %3218 = vmatpush1.msra.mxu0 0.0
  %3219 = vmatprep.subr.mxu0 0.0
  %3220 = vmatpush1.msra.mxu0 0.0
  %3221 = vmatprep.subr.mxu0 0.0
  %3222 = vmatpush1.msra.mxu0 0.0
  %3223 = vmatprep.subr.mxu0 0.0
  %3224 = vmatpush1.msra.mxu0 0.0
  %3225 = vmatprep.subr.mxu0 0.0
  %3226 = vmatpush1.msra.mxu0 0.0
  %3227 = vmatprep.subr.mxu0 0.0
  %3228 = vmatpush1.msra.mxu0 0.0
  %3229 = vmatprep.subr.mxu0 0.0
  %3230 = vmatpush1.msra.mxu0 0.0
  %3231 = vmatprep.subr.mxu0 0.0
  %3232 = vmatpush1.msra.mxu0 0.0
  %3233 = vmatprep.subr.mxu0 0.0
  %3234 = vmatpush1.msra.mxu0 0.0
  %3235 = vmatprep.subr.mxu0 0.0
  %3236 = vmatpush1.msra.mxu0 0.0
  %3237 = vmatprep.subr.mxu0 0.0
  %3238 = vmatpush1.msra.mxu0 0.0
  %3239 = vmatprep.subr.mxu0 0.0
  %3240 = vmatpush1.msra.mxu0 0.0
  %3241 = vmatprep.subr.mxu0 0.0
  %3242 = vmatpush1.msra.mxu0 0.0
  %3243 = vmatprep.subr.mxu0 0.0
  %3244 = vmatpush1.msra.mxu0 0.0
  %3245 = vmatprep.subr.mxu0 0.0
  %3246 = vmatpush1.msra.mxu0 0.0
  %3247 = vmatprep.subr.mxu0 0.0
  %3248 = vmatpush1.msra.mxu0 0.0
  %3249 = vmatprep.mubr.f32.mxu0 0.0
  %3250 = vmatmul.mubr.f32.gmra.mrb[0].mxu0 %v3177
  %v3251 = vpop.f32.mrb[0].mxu0
  %v3252 = vadd.f32 0.0, %v3251
  %v3253 = vpop.f32.mrb[0].mxu0
  %3254 = vmatprep.mubr.f32.mxu0 0.0
  %3255 = vmatmul.mubr.f32.gmra.mrb[0].mxu0 %v3180
  %v3256 = vpop.f32.mrb[0].mxu0
  %v3257 = vadd.f32 0.0, %v3256
  %v3258 = vpop.f32.mrb[0].mxu0
  %3259 = vmatprep.mubr.f32.mxu0 0.0
  %3260 = vmatmul.mubr.f32.gmra.mrb[0].mxu0 %v3183
  %v3261 = vpop.f32.mrb[0].mxu0
  %v3262 = vadd.f32 0.0, %v3261
  %v3263 = vpop.f32.mrb[0].mxu0
  %3264 = vdwg.mxu0
  %v3265 = vadd.f32 %v2935, %v3252
  %v3266 = vadd.f32 %v2936, %v3257
  %v3267 = vadd.f32 %v2937, %v3262
  %v3268 = vadd.f32 %v2444, %v3265
  %v3269 = vadd.f32 %v2445, %v3266
  %v3270 = vadd.f32 %v2446, %v3267
  %v3271 = vld [vmem:[%s2 + $0x14] sm:$0x1]
  %v3272 = vld [vmem:[%s2 + $0x15] sm:$0x1]
  %v3273 = vld [vmem:[%s4 + $0x60] sm:$0xff]
  %v3274 = vld [vmem:[%s4 + $0x68] sm:$0xff]
  %v3275 = vld [vmem:[%s4 + $0x70] sm:$0xff]
  %v3276 = vld [vmem:[%s4 + $0x78] sm:$0xff]
  %v3277 = vld [vmem:[%s2 + $0x16] sm:$0x1]
  %v3278 = vld [vmem:[%s3 + $0x1c8] sm:$0xff]
  %v3279 = vld [vmem:[%s3 + $0x1d0] sm:$0xff]
  %v3280 = vld [vmem:[%s3 + $0x1d8] sm:$0xff]
  %v3281 = vld [vmem:[%s3 + $0x1e0] sm:$0xff]
  %v3282 = vld [vmem:[%s3 + $0x1e8] sm:$0xff]
  %v3283 = vld [vmem:[%s3 + $0x1f0] sm:$0xff]
  %v3284 = vld [vmem:[%s3 + $0x1f8] sm:$0xff]
  %v3285 = vld [vmem:[%s3 + $0x200] sm:$0xff]
  %v3286 = vld [vmem:[%s2 + $0x17] sm:$0x1]
  %v3287 = vsel %vm161, %v3268, 0.0
  %3288 = vadd.xlane.f32.xlu0 %v3287
  %v3289 = vpop.xlane.xlu0 %3288
  %v3290 = vsel %vm161, %v3269, 0.0
  %3291 = vadd.xlane.f32.xlu0 %v3290
  %v3292 = vpop.xlane.xlu0 %3291
  %v3293 = vsel %vm161, %v3270, 0.0
  %3294 = vadd.xlane.f32.xlu0 %v3293
  %v3295 = vpop.xlane.xlu0 %3294
  %v3296 = vmul.f32 %v3289, %v174
  %v3297 = vmul.f32 %v3292, %v174
  %v3298 = vmul.f32 %v3295, %v174
  %v3299 = vsub.f32 %v3268, %v3296
  %v3300 = vsub.f32 %v3269, %v3297
  %v3301 = vsub.f32 %v3270, %v3298
  %v3302 = vmul.f32 %v3299, %v3299
  %v3303 = vmul.f32 %v3300, %v3300
  %v3304 = vmul.f32 %v3301, %v3301
  %v3305 = vsel %vm161, %v3302, 0.0
  %3306 = vadd.xlane.f32.xlu0 %v3305
  %v3307 = vpop.xlane.xlu0 %3306
  %v3308 = vsel %vm161, %v3303, 0.0
  %3309 = vadd.xlane.f32.xlu0 %v3308
  %v3310 = vpop.xlane.xlu0 %3309
  %v3311 = vsel %vm161, %v3304, 0.0
  %3312 = vadd.xlane.f32.xlu0 %v3311
  %v3313 = vpop.xlane.xlu0 %3312
  %v3314 = vmul.f32 %v3307, %v174
  %v3315 = vmul.f32 %v3310, %v174
  %v3316 = vmul.f32 %v3313, %v174
  %v3317 = vadd.f32 %v3314, 1e-05
  %v3318 = vadd.f32 %v3315, 1e-05
  %v3319 = vadd.f32 %v3316, 1e-05
  %v3320 = vrsqrt.pop %v3317
  %v3321 = vrsqrt.pop %v3318
  %v3322 = vrsqrt.pop %v3319
  %v3323 = vmul.f32 %v3299, %v3320
  %v3324 = vmul.f32 %v3300, %v3321
  %v3325 = vmul.f32 %v3301, %v3322
  %v3326 = vlaneseq
  %v3327 = vshrl.u32 %v3326, 7
  %v3328 = vsub.s32 0, %v3327
  %v3329 = vrot.slane %v3271, %v3328
  %v3330 = vmul.f32 %v3323, %v3329
  %v3331 = vmul.f32 %v3324, %v3329
  %v3332 = vmul.f32 %v3325, %v3329
  %v3333 = vlaneseq
  %v3334 = vshrl.u32 %v3333, 7
  %v3335 = vsub.s32 0, %v3334
  %v3336 = vrot.slane %v3272, %v3335
  %v3337 = vadd.f32 %v3330, %v3336
  %v3338 = vadd.f32 %v3331, %v3336
  %v3339 = vadd.f32 %v3332, %v3336
  %v3340 = vlaneseq
  %v3341 = vshrl.u32 %v3340, 7
  %v3342 = vsub.s32 0, %v3341
  %v3343 = vrot.slane %v3277, %v3342
  %v3345 = vsel %vm161, %v3337, 0
  %v3348 = vsel %vm161, %v3338, 0
  %v3351 = vsel %vm161, %v3339, 0
  %3353 = vmatprep.subr.mxu0 0.0
  %3354 = vmatpush1.msra.mxu0 %v3273
  %3355 = vmatprep.subr.mxu0 0.0
  %3356 = vmatpush1.msra.mxu0 %v3274
  %3357 = vmatprep.subr.mxu0 0.0
  %3358 = vmatpush1.msra.mxu0 %v3275
  %3359 = vmatprep.subr.mxu0 0.0
  %3360 = vmatpush1.msra.mxu0 %v3276
  %3361 = vmatprep.subr.mxu0 0.0
  %3362 = vmatpush1.msra.mxu0 0.0
  %3363 = vmatprep.subr.mxu0 0.0
  %3364 = vmatpush1.msra.mxu0 0.0
  %3365 = vmatprep.subr.mxu0 0.0
  %3366 = vmatpush1.msra.mxu0 0.0
  %3367 = vmatprep.subr.mxu0 0.0
  %3368 = vmatpush1.msra.mxu0 0.0
  %3369 = vmatprep.subr.mxu0 0.0
  %3370 = vmatpush1.msra.mxu0 0.0
  %3371 = vmatprep.subr.mxu0 0.0
  %3372 = vmatpush1.msra.mxu0 0.0
  %3373 = vmatprep.subr.mxu0 0.0
  %3374 = vmatpush1.msra.mxu0 0.0
  %3375 = vmatprep.subr.mxu0 0.0
  %3376 = vmatpush1.msra.mxu0 0.0
  %3377 = vmatprep.subr.mxu0 0.0
  %3378 = vmatpush1.msra.mxu0 0.0
  %3379 = vmatprep.subr.mxu0 0.0
  %3380 = vmatpush1.msra.mxu0 0.0
  %3381 = vmatprep.subr.mxu0 0.0
  %3382 = vmatpush1.msra.mxu0 0.0
  %3383 = vmatprep.subr.mxu0 0.0
  %3384 = vmatpush1.msra.mxu0 0.0
  %3385 = vmatprep.subr.mxu0 0.0
  %3386 = vmatpush1.msra.mxu0 0.0
  %3387 = vmatprep.subr.mxu0 0.0
  %3388 = vmatpush1.msra.mxu0 0.0
  %3389 = vmatprep.subr.mxu0 0.0
  %3390 = vmatpush1.msra.mxu0 0.0
  %3391 = vmatprep.subr.mxu0 0.0
  %3392 = vmatpush1.msra.mxu0 0.0
  %3393 = vmatprep.subr.mxu0 0.0
  %3394 = vmatpush1.msra.mxu0 0.0
  %3395 = vmatprep.subr.mxu0 0.0
  %3396 = vmatpush1.msra.mxu0 0.0
  %3397 = vmatprep.subr.mxu0 0.0
  %3398 = vmatpush1.msra.mxu0 0.0
  %3399 = vmatprep.subr.mxu0 0.0
  %3400 = vmatpush1.msra.mxu0 0.0
  %3401 = vmatprep.subr.mxu0 0.0
  %3402 = vmatpush1.msra.mxu0 0.0
  %3403 = vmatprep.subr.mxu0 0.0
  %3404 = vmatpush1.msra.mxu0 0.0
  %3405 = vmatprep.subr.mxu0 0.0
  %3406 = vmatpush1.msra.mxu0 0.0
  %3407 = vmatprep.subr.mxu0 0.0
  %3408 = vmatpush1.msra.mxu0 0.0
  %3409 = vmatprep.subr.mxu0 0.0
  %3410 = vmatpush1.msra.mxu0 0.0
  %3411 = vmatprep.subr.mxu0 0.0
  %3412 = vmatpush1.msra.mxu0 0.0
  %3413 = vmatprep.subr.mxu0 0.0
  %3414 = vmatpush1.msra.mxu0 0.0
  %3415 = vmatprep.subr.mxu0 0.0
  %3416 = vmatpush1.msra.mxu0 0.0
  %3417 = vmatprep.mubr.f32.mxu0 0.0
  %3418 = vmatmul.mubr.f32.gmra.mrb[0].mxu0 %v3345
  %v3419 = vpop.f32.mrb[0].mxu0
  %v3420 = vadd.f32 %v3343, %v3419
  %v3421 = vpop.f32.mrb[0].mxu0
  %3422 = vmatprep.mubr.f32.mxu0 0.0
  %3423 = vmatmul.mubr.f32.gmra.mrb[0].mxu0 %v3348
  %v3424 = vpop.f32.mrb[0].mxu0
  %v3425 = vadd.f32 %v3343, %v3424
  %v3426 = vpop.f32.mrb[0].mxu0
  %3427 = vmatprep.mubr.f32.mxu0 0.0
  %3428 = vmatmul.mubr.f32.gmra.mrb[0].mxu0 %v3351
  %v3429 = vpop.f32.mrb[0].mxu0
  %v3430 = vadd.f32 %v3343, %v3429
  %v3431 = vpop.f32.mrb[0].mxu0
  %3432 = vdwg.mxu0
  %v3433 = vmul.f32 %v3420, %v3420
  %v3434 = vmul.f32 %v3425, %v3425
  %v3435 = vmul.f32 %v3430, %v3430
  %v3436 = vmul.f32 %v3420, %v3433
  %v3437 = vmul.f32 %v3425, %v3434
  %v3438 = vmul.f32 %v3430, %v3435
  %v3439 = vmul.f32 %v3436, 0.044715
  %v3440 = vmul.f32 %v3437, 0.044715
  %v3441 = vmul.f32 %v3438, 0.044715
  %v3442 = vadd.f32 %v3420, %v3439
  %v3443 = vadd.f32 %v3425, %v3440
  %v3444 = vadd.f32 %v3430, %v3441
  %v3445 = vmul.f32 %v3442, 0.7978846
  %v3446 = vmul.f32 %v3443, 0.7978846
  %v3447 = vmul.f32 %v3444, 0.7978846
  %v3448 = vtanh.pop %v3445
  %v3449 = vtanh.pop %v3446
  %v3450 = vtanh.pop %v3447
  %v3451 = vadd.f32 %v3448, 1.0
  %v3452 = vadd.f32 %v3449, 1.0
  %v3453 = vadd.f32 %v3450, 1.0
  %v3454 = vmul.f32 %v3451, 0.5
  %v3455 = vmul.f32 %v3452, 0.5
  %v3456 = vmul.f32 %v3453, 0.5
  %v3457 = vmul.f32 %v3420, %v3454
  %v3458 = vmul.f32 %v3425, %v3455
  %v3459 = vmul.f32 %v3430, %v3456
  %v3460 = vlaneseq
  %v3461 = vshrl.u32 %v3460, 7
  %v3462 = vsub.s32 0, %v3461
  %v3463 = vrot.slane %v3286, %v3462
  %v3465 = vsel %vm39, %v3457, 0
  %v3468 = vsel %vm39, %v3458, 0
  %v3471 = vsel %vm39, %v3459, 0
  %3473 = vmatprep.subr.mxu0 0.0
  %3474 = vmatpush1.msra.mxu0 %v3278
  %3475 = vmatprep.subr.mxu0 0.0
  %3476 = vmatpush1.msra.mxu0 %v3279
  %3477 = vmatprep.subr.mxu0 0.0
  %3478 = vmatpush1.msra.mxu0 %v3280
  %3479 = vmatprep.subr.mxu0 0.0
  %3480 = vmatpush1.msra.mxu0 %v3281
  %3481 = vmatprep.subr.mxu0 0.0
  %3482 = vmatpush1.msra.mxu0 %v3282
  %3483 = vmatprep.subr.mxu0 0.0
  %3484 = vmatpush1.msra.mxu0 %v3283
  %3485 = vmatprep.subr.mxu0 0.0
  %3486 = vmatpush1.msra.mxu0 %v3284
  %3487 = vmatprep.subr.mxu0 0.0
  %3488 = vmatpush1.msra.mxu0 %v3285
  %3489 = vmatprep.subr.mxu0 0.0
  %3490 = vmatpush1.msra.mxu0 0.0
  %3491 = vmatprep.subr.mxu0 0.0
  %3492 = vmatpush1.msra.mxu0 0.0
  %3493 = vmatprep.subr.mxu0 0.0
  %3494 = vmatpush1.msra.mxu0 0.0
  %3495 = vmatprep.subr.mxu0 0.0
  %3496 = vmatpush1.msra.mxu0 0.0
  %3497 = vmatprep.subr.mxu0 0.0
  %3498 = vmatpush1.msra.mxu0 0.0
  %3499 = vmatprep.subr.mxu0 0.0
  %3500 = vmatpush1.msra.mxu0 0.0
  %3501 = vmatprep.subr.mxu0 0.0
  %3502 = vmatpush1.msra.mxu0 0.0
  %3503 = vmatprep.subr.mxu0 0.0
  %3504 = vmatpush1.msra.mxu0 0.0
  %3505 = vmatprep.subr.mxu0 0.0
  %3506 = vmatpush1.msra.mxu0 0.0
  %3507 = vmatprep.subr.mxu0 0.0
  %3508 = vmatpush1.msra.mxu0 0.0
  %3509 = vmatprep.subr.mxu0 0.0
  %3510 = vmatpush1.msra.mxu0 0.0
  %3511 = vmatprep.subr.mxu0 0.0
  %3512 = vmatpush1.msra.mxu0 0.0
  %3513 = vmatprep.subr.mxu0 0.0
  %3514 = vmatpush1.msra.mxu0 0.0
  %3515 = vmatprep.subr.mxu0 0.0
  %3516 = vmatpush1.msra.mxu0 0.0
  %3517 = vmatprep.subr.mxu0 0.0
  %3518 = vmatpush1.msra.mxu0 0.0
  %3519 = vmatprep.subr.mxu0 0.0
  %3520 = vmatpush1.msra.mxu0 0.0
  %3521 = vmatprep.subr.mxu0 0.0
  %3522 = vmatpush1.msra.mxu0 0.0
  %3523 = vmatprep.subr.mxu0 0.0
  %3524 = vmatpush1.msra.mxu0 0.0
  %3525 = vmatprep.subr.mxu0 0.0
  %3526 = vmatpush1.msra.mxu0 0.0
  %3527 = vmatprep.subr.mxu0 0.0
  %3528 = vmatpush1.msra.mxu0 0.0
  %3529 = vmatprep.subr.mxu0 0.0
  %3530 = vmatpush1.msra.mxu0 0.0
  %3531 = vmatprep.subr.mxu0 0.0
  %3532 = vmatpush1.msra.mxu0 0.0
  %3533 = vmatprep.subr.mxu0 0.0
  %3534 = vmatpush1.msra.mxu0 0.0
  %3535 = vmatprep.subr.mxu0 0.0
  %3536 = vmatpush1.msra.mxu0 0.0
  %3537 = vmatprep.mubr.f32.mxu0 0.0
  %3538 = vmatmul.mubr.f32.gmra.mrb[0].mxu0 %v3465
  %v3539 = vpop.f32.mrb[0].mxu0
  %v3540 = vadd.f32 %v3463, %v3539
  %v3541 = vpop.f32.mrb[0].mxu0
  %3542 = vmatprep.mubr.f32.mxu0 0.0
  %3543 = vmatmul.mubr.f32.gmra.mrb[0].mxu0 %v3468
  %v3544 = vpop.f32.mrb[0].mxu0
  %v3545 = vadd.f32 %v3463, %v3544
  %v3546 = vpop.f32.mrb[0].mxu0
  %3547 = vmatprep.mubr.f32.mxu0 0.0
  %3548 = vmatmul.mubr.f32.gmra.mrb[0].mxu0 %v3471
  %v3549 = vpop.f32.mrb[0].mxu0
  %v3550 = vadd.f32 %v3463, %v3549
  %v3551 = vpop.f32.mrb[0].mxu0
  %3552 = vdwg.mxu0
  %v3553 = vadd.f32 %v3268, %v3540
  %v3554 = vadd.f32 %v3269, %v3545
  %v3555 = vadd.f32 %v3270, %v3550
  %v3556 = vld [vmem:[%s2 + $0x18] sm:$0x1]
  %v3557 = vld [vmem:[%s2 + $0x19] sm:$0x1]
  %v3558 = vsel %vm161, %v3553, 0.0
  %3559 = vadd.xlane.f32.xlu0 %v3558
  %v3560 = vpop.xlane.xlu0 %3559
  %v3561 = vsel %vm161, %v3554, 0.0
  %3562 = vadd.xlane.f32.xlu0 %v3561
  %v3563 = vpop.xlane.xlu0 %3562
  %v3564 = vsel %vm161, %v3555, 0.0
  %3565 = vadd.xlane.f32.xlu0 %v3564
  %v3566 = vpop.xlane.xlu0 %3565
  %v3567 = vmul.f32 %v3560, %v174
  %v3568 = vmul.f32 %v3563, %v174
  %v3569 = vmul.f32 %v3566, %v174
  %v3570 = vsub.f32 %v3553, %v3567
  %v3571 = vsub.f32 %v3554, %v3568
  %v3572 = vsub.f32 %v3555, %v3569
  %v3573 = vmul.f32 %v3570, %v3570
  %v3574 = vmul.f32 %v3571, %v3571
  %v3575 = vmul.f32 %v3572, %v3572
  %v3576 = vsel %vm161, %v3573, 0.0
  %3577 = vadd.xlane.f32.xlu0 %v3576
  %v3578 = vpop.xlane.xlu0 %3577
  %v3579 = vsel %vm161, %v3574, 0.0
  %3580 = vadd.xlane.f32.xlu0 %v3579
  %v3581 = vpop.xlane.xlu0 %3580
  %v3582 = vsel %vm161, %v3575, 0.0
  %3583 = vadd.xlane.f32.xlu0 %v3582
  %v3584 = vpop.xlane.xlu0 %3583
  %v3585 = vmul.f32 %v3578, %v174
  %v3586 = vmul.f32 %v3581, %v174
  %v3587 = vmul.f32 %v3584, %v174
  %v3588 = vadd.f32 %v3585, 1e-05
  %v3589 = vadd.f32 %v3586, 1e-05
  %v3590 = vadd.f32 %v3587, 1e-05
  %v3591 = vrsqrt.pop %v3588
  %v3592 = vrsqrt.pop %v3589
  %v3593 = vrsqrt.pop %v3590
  %v3594 = vmul.f32 %v3570, %v3591
  %v3595 = vmul.f32 %v3571, %v3592
  %v3596 = vmul.f32 %v3572, %v3593
  %v3597 = vlaneseq
  %v3598 = vshrl.u32 %v3597, 7
  %v3599 = vsub.s32 0, %v3598
  %v3600 = vrot.slane %v3556, %v3599
  %v3601 = vmul.f32 %v3594, %v3600
  %v3602 = vmul.f32 %v3595, %v3600
  %v3603 = vmul.f32 %v3596, %v3600
  %v3604 = vlaneseq
  %v3605 = vshrl.u32 %v3604, 7
  %v3606 = vsub.s32 0, %v3605
  %v3607 = vrot.slane %v3557, %v3606
  %v3608 = vadd.f32 %v3601, %v3607
  %v3609 = vadd.f32 %v3602, %v3607
  %v3610 = vadd.f32 %v3603, %v3607
  %v3611 = vld [vmem:[%s4 + $0xa0] sm:$0xff]
  %v3612 = vld [vmem:[%s4 + $0xa8] sm:$0xff]
  %v3613 = vld [vmem:[%s4 + $0xb0] sm:$0xff]
  %v3614 = vld [vmem:[%s4 + $0xb8] sm:$0xff]
  %v3615 = vld [vmem:[%s2 + $0x1a] sm:$0x1]
  %v3616 = vlaneseq
  %v3617 = vshrl.u32 %v3616, 7
  %v3618 = vsub.s32 0, %v3617
  %v3619 = vrot.slane %v3615, %v3618
  %v3621 = vsel %vm161, %v3608, 0
  %v3624 = vsel %vm161, %v3609, 0
  %v3627 = vsel %vm161, %v3610, 0
  %3629 = vmatprep.subr.mxu0 0.0
  %3630 = vmatpush1.msra.mxu0 %v3611
  %3631 = vmatprep.subr.mxu0 0.0
  %3632 = vmatpush1.msra.mxu0 %v3612
  %3633 = vmatprep.subr.mxu0 0.0
  %3634 = vmatpush1.msra.mxu0 %v3613
  %3635 = vmatprep.subr.mxu0 0.0
  %3636 = vmatpush1.msra.mxu0 %v3614
  %3637 = vmatprep.subr.mxu0 0.0
  %3638 = vmatpush1.msra.mxu0 0.0
  %3639 = vmatprep.subr.mxu0 0.0
  %3640 = vmatpush1.msra.mxu0 0.0
  %3641 = vmatprep.subr.mxu0 0.0
  %3642 = vmatpush1.msra.mxu0 0.0
  %3643 = vmatprep.subr.mxu0 0.0
  %3644 = vmatpush1.msra.mxu0 0.0
  %3645 = vmatprep.subr.mxu0 0.0
  %3646 = vmatpush1.msra.mxu0 0.0
  %3647 = vmatprep.subr.mxu0 0.0
  %3648 = vmatpush1.msra.mxu0 0.0
  %3649 = vmatprep.subr.mxu0 0.0
  %3650 = vmatpush1.msra.mxu0 0.0
  %3651 = vmatprep.subr.mxu0 0.0
  %3652 = vmatpush1.msra.mxu0 0.0
  %3653 = vmatprep.subr.mxu0 0.0
  %3654 = vmatpush1.msra.mxu0 0.0
  %3655 = vmatprep.subr.mxu0 0.0
  %3656 = vmatpush1.msra.mxu0 0.0
  %3657 = vmatprep.subr.mxu0 0.0
  %3658 = vmatpush1.msra.mxu0 0.0
  %3659 = vmatprep.subr.mxu0 0.0
  %3660 = vmatpush1.msra.mxu0 0.0
  %3661 = vmatprep.subr.mxu0 0.0
  %3662 = vmatpush1.msra.mxu0 0.0
  %3663 = vmatprep.subr.mxu0 0.0
  %3664 = vmatpush1.msra.mxu0 0.0
  %3665 = vmatprep.subr.mxu0 0.0
  %3666 = vmatpush1.msra.mxu0 0.0
  %3667 = vmatprep.subr.mxu0 0.0
  %3668 = vmatpush1.msra.mxu0 0.0
  %3669 = vmatprep.subr.mxu0 0.0
  %3670 = vmatpush1.msra.mxu0 0.0
  %3671 = vmatprep.subr.mxu0 0.0
  %3672 = vmatpush1.msra.mxu0 0.0
  %3673 = vmatprep.subr.mxu0 0.0
  %3674 = vmatpush1.msra.mxu0 0.0
  %3675 = vmatprep.subr.mxu0 0.0
  %3676 = vmatpush1.msra.mxu0 0.0
  %3677 = vmatprep.subr.mxu0 0.0
  %3678 = vmatpush1.msra.mxu0 0.0
  %3679 = vmatprep.subr.mxu0 0.0
  %3680 = vmatpush1.msra.mxu0 0.0
  %3681 = vmatprep.subr.mxu0 0.0
  %3682 = vmatpush1.msra.mxu0 0.0
  %3683 = vmatprep.subr.mxu0 0.0
  %3684 = vmatpush1.msra.mxu0 0.0
  %3685 = vmatprep.subr.mxu0 0.0
  %3686 = vmatpush1.msra.mxu0 0.0
  %3687 = vmatprep.subr.mxu0 0.0
  %3688 = vmatpush1.msra.mxu0 0.0
  %3689 = vmatprep.subr.mxu0 0.0
  %3690 = vmatpush1.msra.mxu0 0.0
  %3691 = vmatprep.subr.mxu0 0.0
  %3692 = vmatpush1.msra.mxu0 0.0
  %3693 = vmatprep.mubr.f32.mxu0 0.0
  %3694 = vmatmul.mubr.f32.gmra.mrb[0].mxu0 %v3621
  %v3695 = vpop.f32.mrb[0].mxu0
  %v3696 = vadd.f32 %v3619, %v3695
  %v3697 = vpop.f32.mrb[0].mxu0
  %3698 = vmatprep.mubr.f32.mxu0 0.0
  %3699 = vmatmul.mubr.f32.gmra.mrb[0].mxu0 %v3624
  %v3700 = vpop.f32.mrb[0].mxu0
  %v3701 = vadd.f32 %v3619, %v3700
  %v3702 = vpop.f32.mrb[0].mxu0
  %3703 = vmatprep.mubr.f32.mxu0 0.0
  %3704 = vmatmul.mubr.f32.gmra.mrb[0].mxu0 %v3627
  %v3705 = vpop.f32.mrb[0].mxu0
  %v3706 = vadd.f32 %v3619, %v3705
  %v3707 = vpop.f32.mrb[0].mxu0
  %3708 = vdwg.mxu0
  %3709 = vst [vmem:[%s5] sm:$0xff] %v3696
  %3710 = vst [vmem:[%s5 + $0x8] sm:$0xff] %v3701
  %3711 = vst [vmem:[%s5 + $0x10] sm:$0xff] %v3706
  %v3712 = vld [vmem:[%s2 + $0x1b] sm:$0x3]
  %v3714 = vsel %vm2714, %v3712, 0
  %3716 = vmatprep.subr.mxu0 0.0
  %3717 = vmatpush1.msra.mxu0 %v3696
  %3718 = vmatprep.subr.mxu0 0.0
  %3719 = vmatpush1.msra.mxu0 %v3701
  %3720 = vmatprep.subr.mxu0 0.0
  %3721 = vmatpush1.msra.mxu0 %v3706
  %3722 = vmatprep.subr.mxu0 0.0
  %3723 = vmatpush1.msra.mxu0 0.0
  %3724 = vmatprep.subr.mxu0 0.0
  %3725 = vmatpush1.msra.mxu0 0.0
  %3726 = vmatprep.subr.mxu0 0.0
  %3727 = vmatpush1.msra.mxu0 0.0
  %3728 = vmatprep.subr.mxu0 0.0
  %3729 = vmatpush1.msra.mxu0 0.0
  %3730 = vmatprep.subr.mxu0 0.0
  %3731 = vmatpush1.msra.mxu0 0.0
  %3732 = vmatprep.subr.mxu0 0.0
  %3733 = vmatpush1.msra.mxu0 0.0
  %3734 = vmatprep.subr.mxu0 0.0
  %3735 = vmatpush1.msra.mxu0 0.0
  %3736 = vmatprep.subr.mxu0 0.0
  %3737 = vmatpush1.msra.mxu0 0.0
  %3738 = vmatprep.subr.mxu0 0.0
  %3739 = vmatpush1.msra.mxu0 0.0
  %3740 = vmatprep.subr.mxu0 0.0
  %3741 = vmatpush1.msra.mxu0 0.0
  %3742 = vmatprep.subr.mxu0 0.0
  %3743 = vmatpush1.msra.mxu0 0.0
  %3744 = vmatprep.subr.mxu0 0.0
  %3745 = vmatpush1.msra.mxu0 0.0
  %3746 = vmatprep.subr.mxu0 0.0
  %3747 = vmatpush1.msra.mxu0 0.0
  %3748 = vmatprep.subr.mxu0 0.0
  %3749 = vmatpush1.msra.mxu0 0.0
  %3750 = vmatprep.subr.mxu0 0.0
  %3751 = vmatpush1.msra.mxu0 0.0
  %3752 = vmatprep.subr.mxu0 0.0
  %3753 = vmatpush1.msra.mxu0 0.0
  %3754 = vmatprep.subr.mxu0 0.0
  %3755 = vmatpush1.msra.mxu0 0.0
  %3756 = vmatprep.subr.mxu0 0.0
  %3757 = vmatpush1.msra.mxu0 0.0
  %3758 = vmatprep.subr.mxu0 0.0
  %3759 = vmatpush1.msra.mxu0 0.0
  %3760 = vmatprep.subr.mxu0 0.0
  %3761 = vmatpush1.msra.mxu0 0.0
  %3762 = vmatprep.subr.mxu0 0.0
  %3763 = vmatpush1.msra.mxu0 0.0
  %3764 = vmatprep.subr.mxu0 0.0
  %3765 = vmatpush1.msra.mxu0 0.0
  %3766 = vmatprep.subr.mxu0 0.0
  %3767 = vmatpush1.msra.mxu0 0.0
  %3768 = vmatprep.subr.mxu0 0.0
  %3769 = vmatpush1.msra.mxu0 0.0
  %3770 = vmatprep.subr.mxu0 0.0
  %3771 = vmatpush1.msra.mxu0 0.0
  %3772 = vmatprep.subr.mxu0 0.0
  %3773 = vmatpush1.msra.mxu0 0.0
  %3774 = vmatprep.subr.mxu0 0.0
  %3775 = vmatpush1.msra.mxu0 0.0
  %3776 = vmatprep.subr.mxu0 0.0
  %3777 = vmatpush1.msra.mxu0 0.0
  %3778 = vmatprep.subr.mxu0 0.0
  %3779 = vmatpush1.msra.mxu0 0.0
  %3780 = vmatprep.mubr.f32.mxu0 0.0
  %3781 = vmatmul.mubr.f32.gmra.mrb[0].mxu0 %v3714
  %v3782 = vpop.f32.mrb[0].mxu0
  %v3783 = vadd.f32 0.0, %v3782
  %v3784 = vpop.f32.mrb[0].mxu0
  %3785 = vdwg.mxu0
  %vm3786 = vcmask 1041408
  %v3787 = vsel %vm3786, %v3783, -inf
  %3788 = vmax.xlane.f32.xlu0 %v3787
  %v3789 = vpop.xlane.xlu0 %3788
  %v3790 = vsub.f32 %v3783, %v3789
  %v3791 = vmul.f32 %v3790, 1.442695
  %v3792 = vpow.pop %v3791
  %v3793 = vsel %vm3786, %v3792, 0.0
  %3794 = vadd.xlane.f32.xlu0 %v3793
  %v3795 = vpop.xlane.xlu0 %3794
  %v3796 = vrcp.pop %v3795
  %v3797 = vmul.f32 %v3792, %v3796
  %3798 = vst [vmem:[%s6] sm:$0x3] %v3797
  // Predicated region
  $region22: #{tfvsn_forward.1} parent=0 // pred_check
    _
  $region23: #{tfvsn_forward.1} parent=0 // pred_check_branch
    %3800 = sbr.rel (0) target = $region25
  $region24: #{tfvsn_forward.1} parent=0 // pred_region
    _
  $region25: #{tfvsn_forward.1} parent=0 // pred_fallthru
    _
  // Predicated region
  $region26: #{tfvsn_forward.1} parent=0 // pred_check
    _
  $region27: #{tfvsn_forward.1} parent=0 // pred_check_branch
    %3802 = sbr.rel (0) target = $region29
  $region28: #{tfvsn_forward.1} parent=0 // pred_region
    _
  $region29: #{tfvsn_forward.1} parent=0 // pred_fallthru
    _
  // Predicated region
  $region30: #{tfvsn_forward.1} parent=0 // pred_check
    _
  $region31: #{tfvsn_forward.1} parent=0 // pred_check_branch
    %3804 = sbr.rel (0) target = $region33
  $region32: #{tfvsn_forward.1} parent=0 // pred_region
    _
  $region33: #{tfvsn_forward.1} parent=0 // pred_fallthru
    _
  // Predicated region
  $region34: #{tfvsn_forward.1} parent=0 // pred_check
    _
  $region35: #{tfvsn_forward.1} parent=0 // pred_check_branch
    %3806 = sbr.rel (0) target = $region37
  $region36: #{tfvsn_forward.1} parent=0 // pred_region
    _
  $region37: #{tfvsn_forward.1} parent=0 // pred_fallthru
    _

</llo_original>
